<compile_context>
chip_gen: v7x
topology: tpu7x:2x2x1
jax: 0.10.0
libtpu: 0.0.40
codegen_flags: <defaults>
</compile_context>

<pallas_src>
import math
from functools import partial

import jax
import jax.numpy as jnp
from jax.experimental import pallas as pl
from jax.experimental.pallas import tpu as pltpu


def _round_up(n, m):
    return ((n + m - 1) // m) * m


# column offset of the dwconv interior inside the halo scratch (8-aligned => clean store)
_C0 = 8

# Abramowitz & Stegun 7.1.26 erf polynomial (max abs error 1.5e-7)
_ERF_P = 0.3275911
_ERF_A = (0.254829592, -0.284496736, 1.421413741, -1.453152027, 1.061405429)


def _gelu_exact(x):
    """Exact-erf GELU (PyTorch nn.GELU default), f32, in-kernel polynomial erf."""
    z = x * 0.7071067811865476          # x / sqrt(2)
    a = jnp.abs(z)
    t = 1.0 / (1.0 + _ERF_P * a)
    a1, a2, a3, a4, a5 = _ERF_A
    poly = t * (a1 + t * (a2 + t * (a3 + t * (a4 + t * a5))))
    erf_abs = 1.0 - poly * jnp.exp(-a * a)
    erf_z = jnp.where(z < 0.0, -erf_abs, erf_abs)
    return 0.5 * x * (1.0 + erf_z)


# ----------------------------- fused MLP kernel -----------------------------

def _fused_mlp_kernel(x_ref, w1_ref, b1_ref, dww_ref, dwb_ref, w2_ref, b2_ref,
                      o_ref, hpad_ref):
    """fc1 -> dwconv3x3 -> exact GELU -> fc2 for one batch image; hidden stays in VMEM.

    x_ref:  (1, H, W, cin_p) f32      w1_ref: (cin_p, hid_p) bf16   b1_ref: (1, hid_p) f32
    dww_ref:(9, hid_p) f32            dwb_ref:(1, hid_p) f32
    w2_ref: (hid_p, out_p) bf16       b2_ref: (1, out_p) f32
    o_ref:  (1, H, W, out_p) f32      hpad_ref: (H+2, Wp, hid_p) f32 scratch (zero halo)
    """
    _, H, W, cin = x_ref.shape
    hid = w1_ref.shape[1]

    # ---- fc1 (1x1 conv == channel matmul): bf16 cast in-kernel, f32 acc, fused bias.
    x2 = x_ref[...].reshape(H * W, cin).astype(jnp.bfloat16)
    h = jnp.dot(x2, w1_ref[...], preferred_element_type=jnp.float32) + b1_ref[...]

    # ---- depthwise 3x3 (stride 1, pad 1) on a zero-halo scratch, 8-aligned W dim.
    hpad_ref[...] = jnp.zeros_like(hpad_ref)
    hpad_ref[1:1 + H, _C0:_C0 + W, :] = h.reshape(H, W, hid)

    # TODO(synk): the j=0/2 column windows are sublane-misaligned reads; a pltpu.roll
    # along W would move the shift onto the XLU, kept as plain offset loads here for
    # guaranteed-correct lowering (the scratch itself is already 8-aligned).
    acc = None
    for i in range(3):
        for j in range(3):
            win = hpad_ref[i:i + H, _C0 - 1 + j:_C0 - 1 + j + W, :]
            term = win * dww_ref[3 * i + j:3 * i + j + 1, :]
            if acc is None:
                acc = term + dwb_ref[...]         # bias folded into the first tap
            else:
                acc = acc + term

    # ---- exact-erf GELU fused in the conv epilogue; dropout(p=0.0) == identity.
    g = _gelu_exact(acc)

    # ---- fc2 (1x1 conv): consume the GELU output directly as bf16 MXU input.
    g2 = g.reshape(H * W, hid).astype(jnp.bfloat16)
    y = jnp.dot(g2, w2_ref[...], preferred_element_type=jnp.float32) + b2_ref[...]
    o_ref[...] = y.reshape(1, H, W, o_ref.shape[3]).astype(o_ref.dtype)


# ----------------------------- parameters -----------------------------

def init_mlp_params(key, in_features, hidden_features=None, out_features=None):
    """PyTorch Conv2d init: weight ~ N(0, sqrt(2/fan_out)), fan_out = k*k*out_ch/groups,
    bias = 0.  Matmul weights are zero-padded to 128-lane multiples ONCE here and stored
    in bf16 (MXU input dtype); depthwise weights/biases stay f32."""
    out_features = out_features or in_features
    hidden_features = hidden_features or in_features
    k1, k2, k3 = jax.random.split(key, 3)

    cin_p = _round_up(in_features, 128)
    hid_p = _round_up(hidden_features, 128)
    out_p = _round_up(out_features, 128)

    w1 = math.sqrt(2.0 / hidden_features) * jax.random.normal(
        k1, (in_features, hidden_features), jnp.float32)
    dw = math.sqrt(2.0 / 9.0) * jax.random.normal(
        k2, (9, hidden_features), jnp.float32)
    w2 = math.sqrt(2.0 / out_features) * jax.random.normal(
        k3, (hidden_features, out_features), jnp.float32)

    return {
        "w1": jnp.zeros((cin_p, hid_p), jnp.bfloat16)
                 .at[:in_features, :hidden_features].set(w1.astype(jnp.bfloat16)),
        "b1": jnp.zeros((1, hid_p), jnp.float32),
        "dw_w": jnp.zeros((9, hid_p), jnp.float32).at[:, :hidden_features].set(dw),
        "dw_b": jnp.zeros((1, hid_p), jnp.float32),
        "w2": jnp.zeros((hid_p, out_p), jnp.bfloat16)
                 .at[:hidden_features, :out_features].set(w2.astype(jnp.bfloat16)),
        "b2": jnp.zeros((1, out_p), jnp.float32),
    }


# ----------------------------- forward -----------------------------

@partial(jax.jit, static_argnames=("out_features",))
def mlp_forward(params, x_nchw, *, out_features):
    x = jnp.transpose(x_nchw, (0, 2, 3, 1)).astype(jnp.float32)   # NCHW -> NHWC
    B, H, W, cin = x.shape
    cin_p, hid_p = params["w1"].shape
    out_p = params["w2"].shape[1]
    assert W % 8 == 0, "fused kernel assumes W is a multiple of 8 (sublane alignment)"

    if cin != cin_p:                                              # one-time input pad
        x = jnp.pad(x, ((0, 0), (0, 0), (0, 0), (0, cin_p - cin)))

    # halo scratch width: [0,_C0) left slab, W interior, >=1 right halo, 8-aligned
    wp = _round_up(_C0 + W + 1, 8)

    y = pl.pallas_call(
        _fused_mlp_kernel,
        out_shape=jax.ShapeDtypeStruct((B, H, W, out_p), jnp.float32),
        grid_spec=pltpu.PrefetchScalarGridSpec(
            num_scalar_prefetch=0,
            grid=(B,),
            in_specs=[
                pl.BlockSpec((1, H, W, cin_p), lambda b: (b, 0, 0, 0)),   # x
                pl.BlockSpec((cin_p, hid_p), lambda b: (0, 0)),           # w1 (bf16)
                pl.BlockSpec((1, hid_p), lambda b: (0, 0)),               # b1
                pl.BlockSpec((9, hid_p), lambda b: (0, 0)),               # dw weights
                pl.BlockSpec((1, hid_p), lambda b: (0, 0)),               # dw bias
                pl.BlockSpec((hid_p, out_p), lambda b: (0, 0)),           # w2 (bf16)
                pl.BlockSpec((1, out_p), lambda b: (0, 0)),               # b2
            ],
            out_specs=pl.BlockSpec((1, H, W, out_p), lambda b: (b, 0, 0, 0)),
            scratch_shapes=[pltpu.VMEM((H + 2, wp, hid_p), jnp.float32)],
        ),
        compiler_params=pltpu.CompilerParams(
            dimension_semantics=("parallel",),
            vmem_limit_bytes=32 * 1024 * 1024),
    )(x, params["w1"], params["b1"], params["dw_w"], params["dw_b"],
      params["w2"], params["b2"])

    # single fused channel-slice + NHWC->NCHW transpose of the lane-dense kernel output
    return jnp.transpose(y, (0, 3, 1, 2))[:, :out_features]


# ----------------------------- pure-JAX reference (for correctness) -----------------------------

@partial(jax.jit, static_argnames=("out_features",))
def mlp_reference(params, x_nchw, *, out_features):
    x = jnp.transpose(x_nchw, (0, 2, 3, 1)).astype(jnp.float32)
    B, H, W, cin = x.shape
    cin_p = params["w1"].shape[0]
    if cin != cin_p:
        x = jnp.pad(x, ((0, 0), (0, 0), (0, 0), (0, cin_p - cin)))
    h = jnp.einsum("bhwc,cd->bhwd", x, params["w1"].astype(jnp.float32)) + params["b1"]
    hp = jnp.pad(h, ((0, 0), (1, 1), (1, 1), (0, 0)))
    conv = jnp.broadcast_to(params["dw_b"], h.shape)
    for i in range(3):
        for j in range(3):
            conv = conv + hp[:, i:i + H, j:j + W, :] * params["dw_w"][3 * i + j]
    g = jax.nn.gelu(conv, approximate=False)
    y = jnp.einsum("bhwc,cd->bhwd", g, params["w2"].astype(jnp.float32)) + params["b2"]
    return jnp.transpose(y[..., :out_features], (0, 3, 1, 2))


# ----------------------------- main -----------------------------

if __name__ == "__main__":
    IN_FEATURES, HIDDEN = 32, 128          # Mlp(in_features=32, hidden_features=128)
    B, H, W = 2, 16, 16

    k_params, k_x = jax.random.split(jax.random.PRNGKey(0))
    params = init_mlp_params(k_params, IN_FEATURES, HIDDEN)
    x = jax.random.normal(k_x, (B, IN_FEATURES, H, W), jnp.float32)   # NCHW like torch

    out = jax.block_until_ready(mlp_forward(params, x, out_features=IN_FEATURES))
    ref = jax.block_until_ready(mlp_reference(params, x, out_features=IN_FEATURES))

    assert out.shape == (B, IN_FEATURES, H, W), out.shape
    assert bool(jnp.all(jnp.isfinite(out)))
    max_err = float(jnp.max(jnp.abs(out - ref)))
    assert max_err < 1e-1, f"max |pallas - reference| = {max_err}"   # bf16 MXU rounding only
    print("KERNEL_OK")
</pallas_src>

<mosaic_0001>
module attributes {stable_mosaic.version = 11 : i64} {
  func.func @_fused_mlp_kernel(%arg0: i32, %arg1: memref<1x16x16x128xf32, #tpu.memory_space<vmem>>, %arg2: memref<128x128xbf16, #tpu.memory_space<vmem>>, %arg3: memref<1x128xf32, #tpu.memory_space<vmem>>, %arg4: memref<9x128xf32, #tpu.memory_space<vmem>>, %arg5: memref<1x128xf32, #tpu.memory_space<vmem>>, %arg6: memref<128x128xbf16, #tpu.memory_space<vmem>>, %arg7: memref<1x128xf32, #tpu.memory_space<vmem>>, %arg8: memref<1x16x16x128xf32, #tpu.memory_space<vmem>>, %arg9: memref<18x32x128xf32, #tpu.memory_space<vmem>>) attributes {dimension_semantics = [#tpu.dimension_semantics<parallel>], iteration_bounds = array<i64: 2>, scalar_prefetch = 0 : i64, scratch_operands = 1 : i64, tpu.core_type = #tpu.core_type<tc>, window_params = [{transform_indices = @transform_0, window_bounds = array<i64: 1, 16, 16, 128>}, {pipeline_mode = #tpu.pipeline_mode<synchronous>, transform_indices = @transform_1, window_bounds = array<i64: 128, 128>}, {pipeline_mode = #tpu.pipeline_mode<synchronous>, transform_indices = @transform_2, window_bounds = array<i64: 1, 128>}, {pipeline_mode = #tpu.pipeline_mode<synchronous>, transform_indices = @transform_3, window_bounds = array<i64: 9, 128>}, {pipeline_mode = #tpu.pipeline_mode<synchronous>, transform_indices = @transform_4, window_bounds = array<i64: 1, 128>}, {pipeline_mode = #tpu.pipeline_mode<synchronous>, transform_indices = @transform_5, window_bounds = array<i64: 128, 128>}, {pipeline_mode = #tpu.pipeline_mode<synchronous>, transform_indices = @transform_6, window_bounds = array<i64: 1, 128>}, {transform_indices = @transform_7, window_bounds = array<i64: 1, 16, 16, 128>}]} {
    %c0 = arith.constant 0 : index
    %c0_0 = arith.constant 0 : index
    %c0_1 = arith.constant 0 : index
    %c0_2 = arith.constant 0 : index
    %0 = vector.load %arg1[%c0, %c0_0, %c0_1, %c0_2] : memref<1x16x16x128xf32, #tpu.memory_space<vmem>>, vector<1x16x16x128xf32>
    %1 = vector.shape_cast %0 : vector<1x16x16x128xf32> to vector<256x128xf32>
    %2 = arith.truncf %1 : vector<256x128xf32> to vector<256x128xbf16>
    %c0_3 = arith.constant 0 : index
    %c0_4 = arith.constant 0 : index
    %3 = vector.load %arg2[%c0_3, %c0_4] : memref<128x128xbf16, #tpu.memory_space<vmem>>, vector<128x128xbf16>
    %cst = arith.constant dense<0.000000e+00> : vector<256x128xf32>
    %4 = tpu.matmul %2, %3, %cst {dimension_numbers = #tpu.dot_dimension_numbers<[1], [0], [0], [1], [0, 0, 1, 1], [], []>} : vector<256x128xbf16>, vector<128x128xbf16>, vector<256x128xf32> -> vector<256x128xf32>
    %c0_5 = arith.constant 0 : index
    %c0_6 = arith.constant 0 : index
    %5 = vector.load %arg3[%c0_5, %c0_6] : memref<1x128xf32, #tpu.memory_space<vmem>>, vector<1x128xf32>
    %6 = vector.broadcast %5 : vector<1x128xf32> to vector<256x128xf32>
    %7 = arith.addf %4, %6 : vector<256x128xf32>
    %cst_7 = arith.constant 0.000000e+00 : f32
    %8 = vector.broadcast %cst_7 : f32 to vector<18x32x128xf32>
    %c0_8 = arith.constant 0 : index
    %c0_9 = arith.constant 0 : index
    %c0_10 = arith.constant 0 : index
    %9 = vector.load %arg9[%c0_8, %c0_9, %c0_10] : memref<18x32x128xf32, #tpu.memory_space<vmem>>, vector<18x32x128xf32>
    tpu.vector_store %arg9[%c0_8, %c0_9, %c0_10], %8 {strides = array<i32>} : memref<18x32x128xf32, #tpu.memory_space<vmem>>, vector<18x32x128xf32>,
    %10 = vector.shape_cast %7 : vector<256x128xf32> to vector<16x16x128xf32>
    %c1 = arith.constant 1 : index
    %c8 = arith.constant 8 : index
    %c0_11 = arith.constant 0 : index
    %11 = vector.load %arg9[%c1, %c8, %c0_11] : memref<18x32x128xf32, #tpu.memory_space<vmem>>, vector<16x16x128xf32>
    tpu.vector_store %arg9[%c1, %c8, %c0_11], %10 {strides = array<i32>} : memref<18x32x128xf32, #tpu.memory_space<vmem>>, vector<16x16x128xf32>,
    %c0_12 = arith.constant 0 : index
    %c7 = arith.constant 7 : index
    %c0_13 = arith.constant 0 : index
    %12 = vector.load %arg9[%c0_12, %c7, %c0_13] : memref<18x32x128xf32, #tpu.memory_space<vmem>>, vector<16x16x128xf32>
    %c0_14 = arith.constant 0 : index
    %c0_15 = arith.constant 0 : index
    %13 = vector.load %arg4[%c0_14, %c0_15] : memref<9x128xf32, #tpu.memory_space<vmem>>, vector<1x128xf32>
    %14 = vector.shape_cast %13 : vector<1x128xf32> to vector<1x1x128xf32>
    %15 = vector.broadcast %14 : vector<1x1x128xf32> to vector<16x16x128xf32>
    %16 = arith.mulf %12, %15 : vector<16x16x128xf32>
    %c0_16 = arith.constant 0 : index
    %c0_17 = arith.constant 0 : index
    %17 = vector.load %arg5[%c0_16, %c0_17] : memref<1x128xf32, #tpu.memory_space<vmem>>, vector<1x128xf32>
    %18 = vector.shape_cast %17 : vector<1x128xf32> to vector<1x1x128xf32>
    %19 = vector.broadcast %18 : vector<1x1x128xf32> to vector<16x16x128xf32>
    %20 = arith.addf %16, %19 : vector<16x16x128xf32>
    %c0_18 = arith.constant 0 : index
    %c8_19 = arith.constant 8 : index
    %c0_20 = arith.constant 0 : index
    %21 = vector.load %arg9[%c0_18, %c8_19, %c0_20] : memref<18x32x128xf32, #tpu.memory_space<vmem>>, vector<16x16x128xf32>
    %c1_21 = arith.constant 1 : index
    %c0_22 = arith.constant 0 : index
    %22 = vector.load %arg4[%c1_21, %c0_22] : memref<9x128xf32, #tpu.memory_space<vmem>>, vector<1x128xf32>
    %23 = vector.shape_cast %22 : vector<1x128xf32> to vector<1x1x128xf32>
    %24 = vector.broadcast %23 : vector<1x1x128xf32> to vector<16x16x128xf32>
    %25 = arith.mulf %21, %24 : vector<16x16x128xf32>
    %26 = arith.addf %20, %25 : vector<16x16x128xf32>
    %c0_23 = arith.constant 0 : index
    %c9 = arith.constant 9 : index
    %c0_24 = arith.constant 0 : index
    %27 = vector.load %arg9[%c0_23, %c9, %c0_24] : memref<18x32x128xf32, #tpu.memory_space<vmem>>, vector<16x16x128xf32>
    %c2 = arith.constant 2 : index
    %c0_25 = arith.constant 0 : index
    %28 = vector.load %arg4[%c2, %c0_25] : memref<9x128xf32, #tpu.memory_space<vmem>>, vector<1x128xf32>
    %29 = vector.shape_cast %28 : vector<1x128xf32> to vector<1x1x128xf32>
    %30 = vector.broadcast %29 : vector<1x1x128xf32> to vector<16x16x128xf32>
    %31 = arith.mulf %27, %30 : vector<16x16x128xf32>
    %32 = arith.addf %26, %31 : vector<16x16x128xf32>
    %c1_26 = arith.constant 1 : index
    %c7_27 = arith.constant 7 : index
    %c0_28 = arith.constant 0 : index
    %33 = vector.load %arg9[%c1_26, %c7_27, %c0_28] : memref<18x32x128xf32, #tpu.memory_space<vmem>>, vector<16x16x128xf32>
    %c3 = arith.constant 3 : index
    %c0_29 = arith.constant 0 : index
    %34 = vector.load %arg4[%c3, %c0_29] : memref<9x128xf32, #tpu.memory_space<vmem>>, vector<1x128xf32>
    %35 = vector.shape_cast %34 : vector<1x128xf32> to vector<1x1x128xf32>
    %36 = vector.broadcast %35 : vector<1x1x128xf32> to vector<16x16x128xf32>
    %37 = arith.mulf %33, %36 : vector<16x16x128xf32>
    %38 = arith.addf %32, %37 : vector<16x16x128xf32>
    %c1_30 = arith.constant 1 : index
    %c8_31 = arith.constant 8 : index
    %c0_32 = arith.constant 0 : index
    %39 = vector.load %arg9[%c1_30, %c8_31, %c0_32] : memref<18x32x128xf32, #tpu.memory_space<vmem>>, vector<16x16x128xf32>
    %c4 = arith.constant 4 : index
    %c0_33 = arith.constant 0 : index
    %40 = vector.load %arg4[%c4, %c0_33] : memref<9x128xf32, #tpu.memory_space<vmem>>, vector<1x128xf32>
    %41 = vector.shape_cast %40 : vector<1x128xf32> to vector<1x1x128xf32>
    %42 = vector.broadcast %41 : vector<1x1x128xf32> to vector<16x16x128xf32>
    %43 = arith.mulf %39, %42 : vector<16x16x128xf32>
    %44 = arith.addf %38, %43 : vector<16x16x128xf32>
    %c1_34 = arith.constant 1 : index
    %c9_35 = arith.constant 9 : index
    %c0_36 = arith.constant 0 : index
    %45 = vector.load %arg9[%c1_34, %c9_35, %c0_36] : memref<18x32x128xf32, #tpu.memory_space<vmem>>, vector<16x16x128xf32>
    %c5 = arith.constant 5 : index
    %c0_37 = arith.constant 0 : index
    %46 = vector.load %arg4[%c5, %c0_37] : memref<9x128xf32, #tpu.memory_space<vmem>>, vector<1x128xf32>
    %47 = vector.shape_cast %46 : vector<1x128xf32> to vector<1x1x128xf32>
    %48 = vector.broadcast %47 : vector<1x1x128xf32> to vector<16x16x128xf32>
    %49 = arith.mulf %45, %48 : vector<16x16x128xf32>
    %50 = arith.addf %44, %49 : vector<16x16x128xf32>
    %c2_38 = arith.constant 2 : index
    %c7_39 = arith.constant 7 : index
    %c0_40 = arith.constant 0 : index
    %51 = vector.load %arg9[%c2_38, %c7_39, %c0_40] : memref<18x32x128xf32, #tpu.memory_space<vmem>>, vector<16x16x128xf32>
    %c6 = arith.constant 6 : index
    %c0_41 = arith.constant 0 : index
    %52 = vector.load %arg4[%c6, %c0_41] : memref<9x128xf32, #tpu.memory_space<vmem>>, vector<1x128xf32>
    %53 = vector.shape_cast %52 : vector<1x128xf32> to vector<1x1x128xf32>
    %54 = vector.broadcast %53 : vector<1x1x128xf32> to vector<16x16x128xf32>
    %55 = arith.mulf %51, %54 : vector<16x16x128xf32>
    %56 = arith.addf %50, %55 : vector<16x16x128xf32>
    %c2_42 = arith.constant 2 : index
    %c8_43 = arith.constant 8 : index
    %c0_44 = arith.constant 0 : index
    %57 = vector.load %arg9[%c2_42, %c8_43, %c0_44] : memref<18x32x128xf32, #tpu.memory_space<vmem>>, vector<16x16x128xf32>
    %c7_45 = arith.constant 7 : index
    %c0_46 = arith.constant 0 : index
    %58 = vector.load %arg4[%c7_45, %c0_46] : memref<9x128xf32, #tpu.memory_space<vmem>>, vector<1x128xf32>
    %59 = vector.shape_cast %58 : vector<1x128xf32> to vector<1x1x128xf32>
    %60 = vector.broadcast %59 : vector<1x1x128xf32> to vector<16x16x128xf32>
    %61 = arith.mulf %57, %60 : vector<16x16x128xf32>
    %62 = arith.addf %56, %61 : vector<16x16x128xf32>
    %c2_47 = arith.constant 2 : index
    %c9_48 = arith.constant 9 : index
    %c0_49 = arith.constant 0 : index
    %63 = vector.load %arg9[%c2_47, %c9_48, %c0_49] : memref<18x32x128xf32, #tpu.memory_space<vmem>>, vector<16x16x128xf32>
    %c8_50 = arith.constant 8 : index
    %c0_51 = arith.constant 0 : index
    %64 = vector.load %arg4[%c8_50, %c0_51] : memref<9x128xf32, #tpu.memory_space<vmem>>, vector<1x128xf32>
    %65 = vector.shape_cast %64 : vector<1x128xf32> to vector<1x1x128xf32>
    %66 = vector.broadcast %65 : vector<1x1x128xf32> to vector<16x16x128xf32>
    %67 = arith.mulf %63, %66 : vector<16x16x128xf32>
    %68 = arith.addf %62, %67 : vector<16x16x128xf32>
    %cst_52 = arith.constant 0.707106769 : f32
    %69 = vector.broadcast %cst_52 : f32 to vector<16x16x128xf32>
    %70 = arith.mulf %68, %69 : vector<16x16x128xf32>
    %71 = math.absf %70 : vector<16x16x128xf32>
    %cst_53 = arith.constant 0.327591091 : f32
    %72 = vector.broadcast %cst_53 : f32 to vector<16x16x128xf32>
    %73 = arith.mulf %72, %71 : vector<16x16x128xf32>
    %cst_54 = arith.constant 1.000000e+00 : f32
    %74 = vector.broadcast %cst_54 : f32 to vector<16x16x128xf32>
    %75 = arith.addf %74, %73 : vector<16x16x128xf32>
    %cst_55 = arith.constant 1.000000e+00 : f32
    %76 = vector.broadcast %cst_55 : f32 to vector<16x16x128xf32>
    %77 = arith.divf %76, %75 : vector<16x16x128xf32>
    %cst_56 = arith.constant 1.06140542 : f32
    %78 = vector.broadcast %cst_56 : f32 to vector<16x16x128xf32>
    %79 = arith.mulf %77, %78 : vector<16x16x128xf32>
    %cst_57 = arith.constant -1.45315206 : f32
    %80 = vector.broadcast %cst_57 : f32 to vector<16x16x128xf32>
    %81 = arith.addf %80, %79 : vector<16x16x128xf32>
    %82 = arith.mulf %77, %81 : vector<16x16x128xf32>
    %cst_58 = arith.constant 1.42141378 : f32
    %83 = vector.broadcast %cst_58 : f32 to vector<16x16x128xf32>
    %84 = arith.addf %83, %82 : vector<16x16x128xf32>
    %85 = arith.mulf %77, %84 : vector<16x16x128xf32>
    %cst_59 = arith.constant -0.284496725 : f32
    %86 = vector.broadcast %cst_59 : f32 to vector<16x16x128xf32>
    %87 = arith.addf %86, %85 : vector<16x16x128xf32>
    %88 = arith.mulf %77, %87 : vector<16x16x128xf32>
    %cst_60 = arith.constant 0.254829586 : f32
    %89 = vector.broadcast %cst_60 : f32 to vector<16x16x128xf32>
    %90 = arith.addf %89, %88 : vector<16x16x128xf32>
    %91 = arith.mulf %77, %90 : vector<16x16x128xf32>
    %cst_61 = arith.constant 0.000000e+00 : f32
    %92 = vector.broadcast %cst_61 : f32 to vector<16x16x128xf32>
    %93 = arith.subf %92, %71 : vector<16x16x128xf32>
    %94 = arith.mulf %93, %71 : vector<16x16x128xf32>
    %95 = math.exp %94 : vector<16x16x128xf32>
    %96 = arith.mulf %91, %95 : vector<16x16x128xf32>
    %cst_62 = arith.constant 1.000000e+00 : f32
    %97 = vector.broadcast %cst_62 : f32 to vector<16x16x128xf32>
    %98 = arith.subf %97, %96 : vector<16x16x128xf32>
    %cst_63 = arith.constant 0.000000e+00 : f32
    %99 = vector.broadcast %cst_63 : f32 to vector<16x16x128xf32>
    %100 = arith.cmpf olt, %70, %99 : vector<16x16x128xf32>
    %cst_64 = arith.constant 0.000000e+00 : f32
    %101 = vector.broadcast %cst_64 : f32 to vector<16x16x128xf32>
    %102 = arith.subf %101, %98 : vector<16x16x128xf32>
    %103 = arith.select %100, %102, %98 : vector<16x16x128xi1>, vector<16x16x128xf32>
    %cst_65 = arith.constant 5.000000e-01 : f32
    %104 = vector.broadcast %cst_65 : f32 to vector<16x16x128xf32>
    %105 = arith.mulf %104, %68 : vector<16x16x128xf32>
    %cst_66 = arith.constant 1.000000e+00 : f32
    %106 = vector.broadcast %cst_66 : f32 to vector<16x16x128xf32>
    %107 = arith.addf %106, %103 : vector<16x16x128xf32>
    %108 = arith.mulf %105, %107 : vector<16x16x128xf32>
    %109 = vector.shape_cast %108 : vector<16x16x128xf32> to vector<256x128xf32>
    %110 = arith.truncf %109 : vector<256x128xf32> to vector<256x128xbf16>
    %c0_67 = arith.constant 0 : index
    %c0_68 = arith.constant 0 : index
    %111 = vector.load %arg6[%c0_67, %c0_68] : memref<128x128xbf16, #tpu.memory_space<vmem>>, vector<128x128xbf16>
    %cst_69 = arith.constant dense<0.000000e+00> : vector<256x128xf32>
    %112 = tpu.matmul %110, %111, %cst_69 {dimension_numbers = #tpu.dot_dimension_numbers<[1], [0], [0], [1], [0, 0, 1, 1], [], []>} : vector<256x128xbf16>, vector<128x128xbf16>, vector<256x128xf32> -> vector<256x128xf32>
    %c0_70 = arith.constant 0 : index
    %c0_71 = arith.constant 0 : index
    %113 = vector.load %arg7[%c0_70, %c0_71] : memref<1x128xf32, #tpu.memory_space<vmem>>, vector<1x128xf32>
    %114 = vector.broadcast %113 : vector<1x128xf32> to vector<256x128xf32>
    %115 = arith.addf %112, %114 : vector<256x128xf32>
    %116 = vector.shape_cast %115 : vector<256x128xf32> to vector<1x16x16x128xf32>
    %c0_72 = arith.constant 0 : index
    %c0_73 = arith.constant 0 : index
    %c0_74 = arith.constant 0 : index
    %c0_75 = arith.constant 0 : index
    %117 = vector.load %arg8[%c0_72, %c0_73, %c0_74, %c0_75] : memref<1x16x16x128xf32, #tpu.memory_space<vmem>>, vector<1x16x16x128xf32>
    tpu.vector_store %arg8[%c0_72, %c0_73, %c0_74, %c0_75], %116 {strides = array<i32>} : memref<1x16x16x128xf32, #tpu.memory_space<vmem>>, vector<1x16x16x128xf32>,
    return
  }
  func.func @transform_0(%arg0: i32) -> (i32, i32, i32, i32) {
    %c0_i32 = arith.constant 0 : i32
    %c0_i32_0 = arith.constant 0 : i32
    %c0_i32_1 = arith.constant 0 : i32
    %c0_i32_2 = arith.constant 0 : i32
    return %arg0, %c0_i32, %c0_i32_0, %c0_i32_1 : i32, i32, i32, i32
  }
  func.func @transform_1(%arg0: i32) -> (i32, i32) {
    %c0_i32 = arith.constant 0 : i32
    %c0_i32_0 = arith.constant 0 : i32
    %c0_i32_1 = arith.constant 0 : i32
    return %c0_i32, %c0_i32_0 : i32, i32
  }
  func.func @transform_2(%arg0: i32) -> (i32, i32) {
    %c0_i32 = arith.constant 0 : i32
    %c0_i32_0 = arith.constant 0 : i32
    %c0_i32_1 = arith.constant 0 : i32
    return %c0_i32, %c0_i32_0 : i32, i32
  }
  func.func @transform_3(%arg0: i32) -> (i32, i32) {
    %c0_i32 = arith.constant 0 : i32
    %c0_i32_0 = arith.constant 0 : i32
    %c0_i32_1 = arith.constant 0 : i32
    return %c0_i32, %c0_i32_0 : i32, i32
  }
  func.func @transform_4(%arg0: i32) -> (i32, i32) {
    %c0_i32 = arith.constant 0 : i32
    %c0_i32_0 = arith.constant 0 : i32
    %c0_i32_1 = arith.constant 0 : i32
    return %c0_i32, %c0_i32_0 : i32, i32
  }
  func.func @transform_5(%arg0: i32) -> (i32, i32) {
    %c0_i32 = arith.constant 0 : i32
    %c0_i32_0 = arith.constant 0 : i32
    %c0_i32_1 = arith.constant 0 : i32
    return %c0_i32, %c0_i32_0 : i32, i32
  }
  func.func @transform_6(%arg0: i32) -> (i32, i32) {
    %c0_i32 = arith.constant 0 : i32
    %c0_i32_0 = arith.constant 0 : i32
    %c0_i32_1 = arith.constant 0 : i32
    return %c0_i32, %c0_i32_0 : i32, i32
  }
  func.func @transform_7(%arg0: i32) -> (i32, i32, i32, i32) {
    %c0_i32 = arith.constant 0 : i32
    %c0_i32_0 = arith.constant 0 : i32
    %c0_i32_1 = arith.constant 0 : i32
    %c0_i32_2 = arith.constant 0 : i32
    return %arg0, %c0_i32, %c0_i32_0, %c0_i32_1 : i32, i32, i32, i32
  }
}

</mosaic_0001>

<llo_original>
// kernel: mlp_forward.1
$region0: #{mlp_forward.1}
  #allocation0 [shape = 'u32[]', space=smem, size = 0x4, offset = 0x4, fixed_abs, tag = 'smem constant byte address 0x4 - core index']
  #allocation1 [shape = 'u32[144,128]{1,0:T(1,128)}', space=vmem, size = 0x12000, scoped, tag = 'internal scratch']
  #allocation2 [shape = 'f32[18,32,128]{2,1,0:T(8,128)}', space=vmem, size = 0x48000, scoped, tag = 'scratch operand']
  %s0 = inlined_call_operand.vmem [shape: f32[2,16,16,128], index: 0, kind: input, shape index: {}]
  %s1 = inlined_call_operand.vmem [shape: bf16[128,128], index: 1, kind: input, shape index: {}]
  %s2 = inlined_call_operand.vmem [shape: f32[1,128], index: 2, kind: input, shape index: {}]
  %s3 = inlined_call_operand.vmem [shape: f32[9,128], index: 3, kind: input, shape index: {}]
  %s4 = inlined_call_operand.vmem [shape: f32[1,128], index: 4, kind: input, shape index: {}]
  %s5 = inlined_call_operand.vmem [shape: bf16[128,128], index: 5, kind: input, shape index: {}]
  %s6 = inlined_call_operand.vmem [shape: f32[1,128], index: 6, kind: input, shape index: {}]
  %s7 = inlined_call_operand.hbm [shape: f32[2,16,16,128], index: 7, kind: output, shape index: {}]
  %s8 = sld [smem:[#allocation0]]
  $region61: #{mlp_forward.1} parent=0
    _
  %s10 = ssub.s32 1, %s8
  %s11 = scalar_select 0, %s10, %s8
  $region1: #{mlp_forward.1} parent=0
    #allocation3 [shape = 'u8[262144]{0}', space=vmem, size = 0x40000, scoped, tag = 'output window, operand 0']
    #allocation4 [shape = 's32[2]{0}', space=sflag, size = 0x8, scoped, tag = 'scoped memory for mlp_forward.1']
    %12 = vsyncpa [#allocation4], 0
    %s13 = scalar_lea.sflag [#allocation4], 1
    %14 = vsyncpa %s13, 0
    loop: start=0, step=1, limit=4
    $region2: #{mlp_forward.1} parent=1 // loop_pre_header
      _
    $region3: #{mlp_forward.1} parent=1 // loop_header
      %s16 = sphi 0, %s20
      %p17 = scmp.ge.s32.totalorder %s16, 4
      %s26 = sphi 0, %s28
      %s29 = sphi 0, %s26
      %s30 = sphi 0, %s29
      %s46 = sphi 0, %s30
      %s50 = sphi 0, %s50
      %s52 = sphi 0, %s50
      %s53 = sphi 0, %s52
      %s67 = sphi 0, %s53
      %s71 = sphi 0, %s71
      %s73 = sphi 0, %s71
      %s74 = sphi 0, %s73
      %s88 = sphi 0, %s74
      %s92 = sphi 0, %s92
      %s94 = sphi 0, %s92
      %s95 = sphi 0, %s94
      %s109 = sphi 0, %s95
      %s113 = sphi 0, %s113
      %s115 = sphi 0, %s113
      %s116 = sphi 0, %s115
      %s130 = sphi 0, %s116
      %s134 = sphi 0, %s134
      %s136 = sphi 0, %s134
      %s137 = sphi 0, %s136
      %s151 = sphi 0, %s137
      %s155 = sphi 0, %s155
      %s157 = sphi 0, %s155
      %s158 = sphi 0, %s157
      %s172 = sphi 0, %s158
      %s178 = sphi 0, %s180
      %s181 = sphi 0, %s178
      %s182 = sphi 0, %s181
      %s198 = sphi 0, %s182
    $region4: #{mlp_forward.1} parent=1 // loop_header_branch
      %19 = sbr.rel (%p17) target = $region8
    $region5: #{mlp_forward.1} parent=1 // loop_body
      %s21 = ssub.s32 %s16, 1
      %s22 = ssub.s32 %s16, 2
      %s23 = sadd.s32 %s16, 1
      %s24 = ssub.s32 %s16, %s23
      %p25 = scmp.eq.s32.totalorder %s24, 0
      %s27 = sadd.s32 %s26, 1
      %s28 = scalar_select %p25, %s26, %s27
      %p31 = pneg %p25
      %p32 = scmp.eq.s32.totalorder %s16, 1
      %p33 = por %p31, %p32
      %p34 = scmp.ne.s32.totalorder %s26, %s29
      %p35 = scmp.eq.s32.totalorder %s16, 0
      %p36 = por %p34, %p35
      %p37 = scmp.ne.s32.totalorder %s26, %s29
      %p38 = scmp.eq.s32.totalorder %s21, 1
      %p39 = por %p37, %p38
      %p40 = scmp.ne.s32.totalorder %s29, %s30
      %p41 = scmp.eq.s32.totalorder %s21, 0
      %p42 = por %p40, %p41
      %p43 = scmp.ne.s32.totalorder %s29, %s30
      %p44 = scmp.eq.s32.totalorder %s22, 1
      %p45 = por %p43, %p44
      %p47 = scmp.ne.s32.totalorder %s30, %s46
      %p48 = scmp.eq.s32.totalorder %s22, 0
      %p49 = por %p47, %p48
      %s51 = sadd.s32 %s50, 1
      %p54 = scmp.eq.s32.totalorder %s16, 1
      %p55 = scmp.ne.s32.totalorder %s50, %s52
      %p56 = scmp.eq.s32.totalorder %s16, 0
      %p57 = por %p55, %p56
      %p58 = scmp.ne.s32.totalorder %s50, %s52
      %p59 = scmp.eq.s32.totalorder %s21, 1
      %p60 = por %p58, %p59
      %p61 = scmp.ne.s32.totalorder %s52, %s53
      %p62 = scmp.eq.s32.totalorder %s21, 0
      %p63 = por %p61, %p62
      %p64 = scmp.ne.s32.totalorder %s52, %s53
      %p65 = scmp.eq.s32.totalorder %s22, 1
      %p66 = por %p64, %p65
      %p68 = scmp.ne.s32.totalorder %s53, %s67
      %p69 = scmp.eq.s32.totalorder %s22, 0
      %p70 = por %p68, %p69
      %s72 = sadd.s32 %s71, 1
      %p75 = scmp.eq.s32.totalorder %s16, 1
      %p76 = scmp.ne.s32.totalorder %s71, %s73
      %p77 = scmp.eq.s32.totalorder %s16, 0
      %p78 = por %p76, %p77
      %p79 = scmp.ne.s32.totalorder %s71, %s73
      %p80 = scmp.eq.s32.totalorder %s21, 1
      %p81 = por %p79, %p80
      %p82 = scmp.ne.s32.totalorder %s73, %s74
      %p83 = scmp.eq.s32.totalorder %s21, 0
      %p84 = por %p82, %p83
      %p85 = scmp.ne.s32.totalorder %s73, %s74
      %p86 = scmp.eq.s32.totalorder %s22, 1
      %p87 = por %p85, %p86
      %p89 = scmp.ne.s32.totalorder %s74, %s88
      %p90 = scmp.eq.s32.totalorder %s22, 0
      %p91 = por %p89, %p90
      %s93 = sadd.s32 %s92, 1
      %p96 = scmp.eq.s32.totalorder %s16, 1
      %p97 = scmp.ne.s32.totalorder %s92, %s94
      %p98 = scmp.eq.s32.totalorder %s16, 0
      %p99 = por %p97, %p98
      %p100 = scmp.ne.s32.totalorder %s92, %s94
      %p101 = scmp.eq.s32.totalorder %s21, 1
      %p102 = por %p100, %p101
      %p103 = scmp.ne.s32.totalorder %s94, %s95
      %p104 = scmp.eq.s32.totalorder %s21, 0
      %p105 = por %p103, %p104
      %p106 = scmp.ne.s32.totalorder %s94, %s95
      %p107 = scmp.eq.s32.totalorder %s22, 1
      %p108 = por %p106, %p107
      %p110 = scmp.ne.s32.totalorder %s95, %s109
      %p111 = scmp.eq.s32.totalorder %s22, 0
      %p112 = por %p110, %p111
      %s114 = sadd.s32 %s113, 1
      %p117 = scmp.eq.s32.totalorder %s16, 1
      %p118 = scmp.ne.s32.totalorder %s113, %s115
      %p119 = scmp.eq.s32.totalorder %s16, 0
      %p120 = por %p118, %p119
      %p121 = scmp.ne.s32.totalorder %s113, %s115
      %p122 = scmp.eq.s32.totalorder %s21, 1
      %p123 = por %p121, %p122
      %p124 = scmp.ne.s32.totalorder %s115, %s116
      %p125 = scmp.eq.s32.totalorder %s21, 0
      %p126 = por %p124, %p125
      %p127 = scmp.ne.s32.totalorder %s115, %s116
      %p128 = scmp.eq.s32.totalorder %s22, 1
      %p129 = por %p127, %p128
      %p131 = scmp.ne.s32.totalorder %s116, %s130
      %p132 = scmp.eq.s32.totalorder %s22, 0
      %p133 = por %p131, %p132
      %s135 = sadd.s32 %s134, 1
      %p138 = scmp.eq.s32.totalorder %s16, 1
      %p139 = scmp.ne.s32.totalorder %s134, %s136
      %p140 = scmp.eq.s32.totalorder %s16, 0
      %p141 = por %p139, %p140
      %p142 = scmp.ne.s32.totalorder %s134, %s136
      %p143 = scmp.eq.s32.totalorder %s21, 1
      %p144 = por %p142, %p143
      %p145 = scmp.ne.s32.totalorder %s136, %s137
      %p146 = scmp.eq.s32.totalorder %s21, 0
      %p147 = por %p145, %p146
      %p148 = scmp.ne.s32.totalorder %s136, %s137
      %p149 = scmp.eq.s32.totalorder %s22, 1
      %p150 = por %p148, %p149
      %p152 = scmp.ne.s32.totalorder %s137, %s151
      %p153 = scmp.eq.s32.totalorder %s22, 0
      %p154 = por %p152, %p153
      %s156 = sadd.s32 %s155, 1
      %p159 = scmp.eq.s32.totalorder %s16, 1
      %p160 = scmp.ne.s32.totalorder %s155, %s157
      %p161 = scmp.eq.s32.totalorder %s16, 0
      %p162 = por %p160, %p161
      %p163 = scmp.ne.s32.totalorder %s155, %s157
      %p164 = scmp.eq.s32.totalorder %s21, 1
      %p165 = por %p163, %p164
      %p166 = scmp.ne.s32.totalorder %s157, %s158
      %p167 = scmp.eq.s32.totalorder %s21, 0
      %p168 = por %p166, %p167
      %p169 = scmp.ne.s32.totalorder %s157, %s158
      %p170 = scmp.eq.s32.totalorder %s22, 1
      %p171 = por %p169, %p170
      %p173 = scmp.ne.s32.totalorder %s158, %s172
      %p174 = scmp.eq.s32.totalorder %s22, 0
      %p175 = por %p173, %p174
      %s176 = ssub.s32 %s16, %s23
      %p177 = scmp.eq.s32.totalorder %s176, 0
      %s179 = sadd.s32 %s178, 1
      %s180 = scalar_select %p177, %s178, %s179
      %p183 = pneg %p177
      %p184 = scmp.eq.s32.totalorder %s16, 1
      %p185 = por %p183, %p184
      %p186 = scmp.ne.s32.totalorder %s178, %s181
      %p187 = scmp.eq.s32.totalorder %s16, 0
      %p188 = por %p186, %p187
      %p189 = scmp.ne.s32.totalorder %s178, %s181
      %p190 = scmp.eq.s32.totalorder %s21, 1
      %p191 = por %p189, %p190
      %p192 = scmp.ne.s32.totalorder %s181, %s182
      %p193 = scmp.eq.s32.totalorder %s21, 0
      %p194 = por %p192, %p193
      %p195 = scmp.ne.s32.totalorder %s181, %s182
      %p196 = scmp.eq.s32.totalorder %s22, 1
      %p197 = por %p195, %p196
      %p199 = scmp.ne.s32.totalorder %s182, %s198
      %p200 = scmp.eq.s32.totalorder %s22, 0
      %p201 = por %p199, %p200
      %p202 = scmp.le.s32.totalorder 1, %s16
      %p203 = scmp.lt.s32.totalorder %s16, 3
      %p204 = pnand %p202, %p203
      %p205 = pneg %p204
      // Predicated region
      $region9: #{mlp_forward.1} parent=5 // pred_check
        _
      $region10: #{mlp_forward.1} parent=5 // pred_check_branch
        %207 = sbr.rel (%p204) target = $region12
      $region11: #{mlp_forward.1} parent=5 // pred_region
        %s208 = ssub.s32 %s16, 1
        // Predicated region
        $region13: #{mlp_forward.1} parent=11 // pred_check
          %p209 = pneg %p63
        $region14: #{mlp_forward.1} parent=11 // pred_check_branch
          %211 = sbr.rel (%p209) target = $region16
        $region15: #{mlp_forward.1} parent=11 // pred_region
          _
        $region16: #{mlp_forward.1} parent=11 // pred_fallthru
          _
        // Predicated region
        $region17: #{mlp_forward.1} parent=11 // pred_check
          %p212 = pneg %p84
        $region18: #{mlp_forward.1} parent=11 // pred_check_branch
          %214 = sbr.rel (%p212) target = $region20
        $region19: #{mlp_forward.1} parent=11 // pred_region
          _
        $region20: #{mlp_forward.1} parent=11 // pred_fallthru
          _
        // Predicated region
        $region21: #{mlp_forward.1} parent=11 // pred_check
          %p215 = pneg %p105
        $region22: #{mlp_forward.1} parent=11 // pred_check_branch
          %217 = sbr.rel (%p215) target = $region24
        $region23: #{mlp_forward.1} parent=11 // pred_region
          _
        $region24: #{mlp_forward.1} parent=11 // pred_fallthru
          _
        // Predicated region
        $region25: #{mlp_forward.1} parent=11 // pred_check
          %p218 = pneg %p126
        $region26: #{mlp_forward.1} parent=11 // pred_check_branch
          %220 = sbr.rel (%p218) target = $region28
        $region27: #{mlp_forward.1} parent=11 // pred_region
          _
        $region28: #{mlp_forward.1} parent=11 // pred_fallthru
          _
        // Predicated region
        $region29: #{mlp_forward.1} parent=11 // pred_check
          %p221 = pneg %p147
        $region30: #{mlp_forward.1} parent=11 // pred_check_branch
          %223 = sbr.rel (%p221) target = $region32
        $region31: #{mlp_forward.1} parent=11 // pred_region
          _
        $region32: #{mlp_forward.1} parent=11 // pred_fallthru
          _
        // Predicated region
        $region33: #{mlp_forward.1} parent=11 // pred_check
          %p224 = pneg %p168
        $region34: #{mlp_forward.1} parent=11 // pred_check_branch
          %226 = sbr.rel (%p224) target = $region36
        $region35: #{mlp_forward.1} parent=11 // pred_region
          _
        $region36: #{mlp_forward.1} parent=11 // pred_fallthru
          _
      $region12: #{mlp_forward.1} parent=5 // pred_fallthru
        _
      %p227 = scmp.lt.s32.totalorder %s16, 2
      // Predicated region
      $region37: #{mlp_forward.1} parent=5 // pred_check
        %p228 = pneg %p227
      $region38: #{mlp_forward.1} parent=5 // pred_check_branch
        %230 = sbr.rel (%p228) target = $region40
      $region39: #{mlp_forward.1} parent=5 // pred_region
        // Predicated region
        $region41: #{mlp_forward.1} parent=39 // pred_check
          %p231 = pneg %p36
        $region42: #{mlp_forward.1} parent=39 // pred_check_branch
          %233 = sbr.rel (%p231) target = $region44
        $region43: #{mlp_forward.1} parent=39 // pred_region
          %p234 = scmp.lt.s32.totalorder %s16, 1
          %s235 = scalar_select %p234, %s16, 1
          %s236 = smul.addr %s235, 32
          %s237 = smul.addr %s236, 8
          %s238 = scalar_lea.vmem %s0, %s237
        $region44: #{mlp_forward.1} parent=39 // pred_fallthru
          _
      $region40: #{mlp_forward.1} parent=5 // pred_fallthru
        _
      %p239 = scmp.le.s32.totalorder 1, %s16
      %p240 = scmp.lt.s32.totalorder %s16, 3
      %p241 = pnand %p239, %p240
      %p242 = pneg %p241
      // Predicated region
      $region45: #{mlp_forward.1} parent=5 // pred_check
        _
      $region46: #{mlp_forward.1} parent=5 // pred_check_branch
        %244 = sbr.rel (%p241) target = $region48
      $region47: #{mlp_forward.1} parent=5 // pred_region
        %s245 = ssub.s32 %s16, 1
        %p246 = scmp.lt.s32.totalorder %s21, 1
        %s247 = scalar_select %p246, %s21, 1
        %s248 = smul.addr %s247, 32
        %s249 = smul.addr %s248, 8
        %s250 = scalar_lea.vmem %s0, %s249
        %p251 = pneg %p42
        %p252 = pneg %p39
        %p253 = pneg %p63
        %p254 = pneg %p60
        %p255 = pneg %p84
        %p256 = pneg %p81
        %p257 = pneg %p105
        %p258 = pneg %p102
        %p259 = pneg %p126
        %p260 = pneg %p123
        %p261 = pneg %p147
        %p262 = pneg %p144
        %p263 = pneg %p168
        %p264 = pneg %p165
        %p265 = pneg %p194
        %p266 = pneg %p191
        %s267 = sand.u32 %s181, 1
        %s268 = scalar_lea.sflag [#allocation4], %s267
        %s269 = sand.u32 %s181, 1
        %s270 = smul.addr %s269, 256
        %s271 = scalar_lea.vmem [#allocation3], %s270
        %p272 = scmp.lt.s32.totalorder %s21, 1
        %s273 = scalar_select %p272, %s21, 1
        %s274 = smul.addr %s273, 32
        %s275 = smul.addr %s274, 8
        %s276 = scalar_lea.vmem %s0, %s275
        %v278 = vld [vmem:[%s276] sm:$0xff]
        %v279 = vld [vmem:[%s276 + $0x8] sm:$0xff]
        %v280 = vld [vmem:[%s276 + $0x10] sm:$0xff]
        %v281 = vld [vmem:[%s276 + $0x18] sm:$0xff]
        %v282 = vld [vmem:[%s276 + $0x20] sm:$0xff]
        %v283 = vld [vmem:[%s276 + $0x28] sm:$0xff]
        %v284 = vld [vmem:[%s276 + $0x30] sm:$0xff]
        %v285 = vld [vmem:[%s276 + $0x38] sm:$0xff]
        %v286 = vld [vmem:[%s276 + $0x40] sm:$0xff]
        %v287 = vld [vmem:[%s276 + $0x48] sm:$0xff]
        %v288 = vld [vmem:[%s276 + $0x50] sm:$0xff]
        %v289 = vld [vmem:[%s276 + $0x58] sm:$0xff]
        %v290 = vld [vmem:[%s276 + $0x60] sm:$0xff]
        %v291 = vld [vmem:[%s276 + $0x68] sm:$0xff]
        %v292 = vld [vmem:[%s276 + $0x70] sm:$0xff]
        %v293 = vld [vmem:[%s276 + $0x78] sm:$0xff]
        %v294 = vld [vmem:[%s276 + $0x80] sm:$0xff]
        %v295 = vld [vmem:[%s276 + $0x88] sm:$0xff]
        %v296 = vld [vmem:[%s276 + $0x90] sm:$0xff]
        %v297 = vld [vmem:[%s276 + $0x98] sm:$0xff]
        %v298 = vld [vmem:[%s276 + $0xa0] sm:$0xff]
        %v299 = vld [vmem:[%s276 + $0xa8] sm:$0xff]
        %v300 = vld [vmem:[%s276 + $0xb0] sm:$0xff]
        %v301 = vld [vmem:[%s276 + $0xb8] sm:$0xff]
        %v302 = vld [vmem:[%s276 + $0xc0] sm:$0xff]
        %v303 = vld [vmem:[%s276 + $0xc8] sm:$0xff]
        %v304 = vld [vmem:[%s276 + $0xd0] sm:$0xff]
        %v305 = vld [vmem:[%s276 + $0xd8] sm:$0xff]
        %v306 = vld [vmem:[%s276 + $0xe0] sm:$0xff]
        %v307 = vld [vmem:[%s276 + $0xe8] sm:$0xff]
        %v308 = vld [vmem:[%s276 + $0xf0] sm:$0xff]
        %v309 = vld [vmem:[%s276 + $0xf8] sm:$0xff]
        %v310 = vpack.c.bf16 %v279, %v278
        %v311 = vpack.c.bf16 %v281, %v280
        %v312 = vpack.c.bf16 %v283, %v282
        %v313 = vpack.c.bf16 %v285, %v284
        %v314 = vpack.c.bf16 %v287, %v286
        %v315 = vpack.c.bf16 %v289, %v288
        %v316 = vpack.c.bf16 %v291, %v290
        %v317 = vpack.c.bf16 %v293, %v292
        %v318 = vpack.c.bf16 %v295, %v294
        %v319 = vpack.c.bf16 %v297, %v296
        %v320 = vpack.c.bf16 %v299, %v298
        %v321 = vpack.c.bf16 %v301, %v300
        %v322 = vpack.c.bf16 %v303, %v302
        %v323 = vpack.c.bf16 %v305, %v304
        %v324 = vpack.c.bf16 %v307, %v306
        %v325 = vpack.c.bf16 %v309, %v308
        %v326 = vld [vmem:[%s1] sm:$0xf]
        %v327 = vld [vmem:[%s1 + $0x4] sm:$0xf]
        %v328 = vld [vmem:[%s1 + $0x8] sm:$0xf]
        %v329 = vld [vmem:[%s1 + $0xc] sm:$0xf]
        %v330 = vld [vmem:[%s1 + $0x10] sm:$0xf]
        %v331 = vld [vmem:[%s1 + $0x14] sm:$0xf]
        %v332 = vld [vmem:[%s1 + $0x18] sm:$0xf]
        %v333 = vld [vmem:[%s1 + $0x1c] sm:$0xf]
        %v334 = vld [vmem:[%s1 + $0x20] sm:$0xf]
        %v335 = vld [vmem:[%s1 + $0x24] sm:$0xf]
        %v336 = vld [vmem:[%s1 + $0x28] sm:$0xf]
        %v337 = vld [vmem:[%s1 + $0x2c] sm:$0xf]
        %v338 = vld [vmem:[%s1 + $0x30] sm:$0xf]
        %v339 = vld [vmem:[%s1 + $0x34] sm:$0xf]
        %v340 = vld [vmem:[%s1 + $0x38] sm:$0xf]
        %v341 = vld [vmem:[%s1 + $0x3c] sm:$0xf]
        %v342 = vld [vmem:[%s2] sm:$0x1]
        %v344 = vlaneseq
        %v345 = vshrl.u32 %v344, 7
        %v346 = vsub.s32 0, %v345
        %v347 = vrot.slane %v342, %v346
        %v365 = vunpack.c.l.b16 %v326
        %v366 = vunpack.c.l.b16 %v327
        %v367 = vunpack.c.l.b16 %v328
        %v368 = vunpack.c.l.b16 %v329
        %v369 = vunpack.c.l.b16 %v330
        %v370 = vunpack.c.l.b16 %v331
        %v371 = vunpack.c.l.b16 %v332
        %v372 = vunpack.c.l.b16 %v333
        %v373 = vunpack.c.l.b16 %v334
        %v374 = vunpack.c.l.b16 %v335
        %v375 = vunpack.c.l.b16 %v336
        %v376 = vunpack.c.l.b16 %v337
        %v377 = vunpack.c.l.b16 %v338
        %v378 = vunpack.c.l.b16 %v339
        %v379 = vunpack.c.l.b16 %v340
        %v380 = vunpack.c.l.b16 %v341
        %v381 = vpack.c.b16 %v366, %v365
        %v382 = vpack.c.b16 %v368, %v367
        %v383 = vpack.c.b16 %v370, %v369
        %v384 = vpack.c.b16 %v372, %v371
        %v385 = vpack.c.b16 %v374, %v373
        %v386 = vpack.c.b16 %v376, %v375
        %v387 = vpack.c.b16 %v378, %v377
        %v388 = vpack.c.b16 %v380, %v379
        %397 = vmatprep.subr.bf16.mxu0 0
        %398 = vmatpush1.bf16.msra.mxu0 %v381
        %399 = vmatprep.subr.bf16.mxu0 0
        %400 = vmatpush1.bf16.msra.mxu0 %v382
        %401 = vmatprep.subr.bf16.mxu0 0
        %402 = vmatpush1.bf16.msra.mxu0 %v383
        %403 = vmatprep.subr.bf16.mxu0 0
        %404 = vmatpush1.bf16.msra.mxu0 %v384
        %405 = vmatprep.subr.bf16.mxu0 0
        %406 = vmatpush1.bf16.msra.mxu0 %v385
        %407 = vmatprep.subr.bf16.mxu0 0
        %408 = vmatpush1.bf16.msra.mxu0 %v386
        %409 = vmatprep.subr.bf16.mxu0 0
        %410 = vmatpush1.bf16.msra.mxu0 %v387
        %411 = vmatprep.subr.bf16.mxu0 0
        %412 = vmatpush1.bf16.msra.mxu0 %v388
        %413 = vmatprep.subr.bf16.mxu0 0
        %414 = vmatpush1.bf16.msra.mxu0 0
        %415 = vmatprep.subr.bf16.mxu0 0
        %416 = vmatpush1.bf16.msra.mxu0 0
        %417 = vmatprep.subr.bf16.mxu0 0
        %418 = vmatpush1.bf16.msra.mxu0 0
        %419 = vmatprep.subr.bf16.mxu0 0
        %420 = vmatpush1.bf16.msra.mxu0 0
        %421 = vmatprep.subr.bf16.mxu0 0
        %422 = vmatpush1.bf16.msra.mxu0 0
        %423 = vmatprep.subr.bf16.mxu0 0
        %424 = vmatpush1.bf16.msra.mxu0 0
        %425 = vmatprep.subr.bf16.mxu0 0
        %426 = vmatpush1.bf16.msra.mxu0 0
        %427 = vmatprep.subr.bf16.mxu0 0
        %428 = vmatpush1.bf16.msra.mxu0 0
        %429 = vmatprep.mubr.bf16.mxu0 0
        %430 = vmatmul.mubr.bf16.gmra.mrb[0].mxu0 %v310
        %v431 = vpop.f32.mrb[0].mxu0
        %v432 = vadd.f32 %v347, %v431
        %v433 = vpop.f32.mrb[0].mxu0
        %v434 = vpop.f32.mrb[0].mxu0
        %v435 = vadd.f32 %v347, %v434
        %v436 = vpop.f32.mrb[0].mxu0
        %437 = vmatprep.mubr.bf16.mxu0 0
        %438 = vmatmul.mubr.bf16.gmra.mrb[0].mxu0 %v311
        %v439 = vpop.f32.mrb[0].mxu0
        %v440 = vadd.f32 %v347, %v439
        %v441 = vpop.f32.mrb[0].mxu0
        %v442 = vpop.f32.mrb[0].mxu0
        %v443 = vadd.f32 %v347, %v442
        %v444 = vpop.f32.mrb[0].mxu0
        %445 = vmatprep.mubr.bf16.mxu0 0
        %446 = vmatmul.mubr.bf16.gmra.mrb[0].mxu0 %v312
        %v447 = vpop.f32.mrb[0].mxu0
        %v448 = vadd.f32 %v347, %v447
        %v449 = vpop.f32.mrb[0].mxu0
        %v450 = vpop.f32.mrb[0].mxu0
        %v451 = vadd.f32 %v347, %v450
        %v452 = vpop.f32.mrb[0].mxu0
        %453 = vmatprep.mubr.bf16.mxu0 0
        %454 = vmatmul.mubr.bf16.gmra.mrb[0].mxu0 %v313
        %v455 = vpop.f32.mrb[0].mxu0
        %v456 = vadd.f32 %v347, %v455
        %v457 = vpop.f32.mrb[0].mxu0
        %v458 = vpop.f32.mrb[0].mxu0
        %v459 = vadd.f32 %v347, %v458
        %v460 = vpop.f32.mrb[0].mxu0
        %461 = vmatprep.mubr.bf16.mxu0 0
        %462 = vmatmul.mubr.bf16.gmra.mrb[0].mxu0 %v314
        %v463 = vpop.f32.mrb[0].mxu0
        %v464 = vadd.f32 %v347, %v463
        %v465 = vpop.f32.mrb[0].mxu0
        %v466 = vpop.f32.mrb[0].mxu0
        %v467 = vadd.f32 %v347, %v466
        %v468 = vpop.f32.mrb[0].mxu0
        %469 = vmatprep.mubr.bf16.mxu0 0
        %470 = vmatmul.mubr.bf16.gmra.mrb[0].mxu0 %v315
        %v471 = vpop.f32.mrb[0].mxu0
        %v472 = vadd.f32 %v347, %v471
        %v473 = vpop.f32.mrb[0].mxu0
        %v474 = vpop.f32.mrb[0].mxu0
        %v475 = vadd.f32 %v347, %v474
        %v476 = vpop.f32.mrb[0].mxu0
        %477 = vmatprep.mubr.bf16.mxu0 0
        %478 = vmatmul.mubr.bf16.gmra.mrb[0].mxu0 %v316
        %v479 = vpop.f32.mrb[0].mxu0
        %v480 = vadd.f32 %v347, %v479
        %v481 = vpop.f32.mrb[0].mxu0
        %v482 = vpop.f32.mrb[0].mxu0
        %v483 = vadd.f32 %v347, %v482
        %v484 = vpop.f32.mrb[0].mxu0
        %485 = vmatprep.mubr.bf16.mxu0 0
        %486 = vmatmul.mubr.bf16.gmra.mrb[0].mxu0 %v317
        %v487 = vpop.f32.mrb[0].mxu0
        %v488 = vadd.f32 %v347, %v487
        %v489 = vpop.f32.mrb[0].mxu0
        %v490 = vpop.f32.mrb[0].mxu0
        %v491 = vadd.f32 %v347, %v490
        %v492 = vpop.f32.mrb[0].mxu0
        %493 = vmatprep.mubr.bf16.mxu0 0
        %494 = vmatmul.mubr.bf16.gmra.mrb[0].mxu0 %v318
        %v495 = vpop.f32.mrb[0].mxu0
        %v496 = vadd.f32 %v347, %v495
        %v497 = vpop.f32.mrb[0].mxu0
        %v498 = vpop.f32.mrb[0].mxu0
        %v499 = vadd.f32 %v347, %v498
        %v500 = vpop.f32.mrb[0].mxu0
        %501 = vmatprep.mubr.bf16.mxu0 0
        %502 = vmatmul.mubr.bf16.gmra.mrb[0].mxu0 %v319
        %v503 = vpop.f32.mrb[0].mxu0
        %v504 = vadd.f32 %v347, %v503
        %v505 = vpop.f32.mrb[0].mxu0
        %v506 = vpop.f32.mrb[0].mxu0
        %v507 = vadd.f32 %v347, %v506
        %v508 = vpop.f32.mrb[0].mxu0
        %509 = vmatprep.mubr.bf16.mxu0 0
        %510 = vmatmul.mubr.bf16.gmra.mrb[0].mxu0 %v320
        %v511 = vpop.f32.mrb[0].mxu0
        %v512 = vadd.f32 %v347, %v511
        %v513 = vpop.f32.mrb[0].mxu0
        %v514 = vpop.f32.mrb[0].mxu0
        %v515 = vadd.f32 %v347, %v514
        %v516 = vpop.f32.mrb[0].mxu0
        %517 = vmatprep.mubr.bf16.mxu0 0
        %518 = vmatmul.mubr.bf16.gmra.mrb[0].mxu0 %v321
        %v519 = vpop.f32.mrb[0].mxu0
        %v520 = vadd.f32 %v347, %v519
        %v521 = vpop.f32.mrb[0].mxu0
        %v522 = vpop.f32.mrb[0].mxu0
        %v523 = vadd.f32 %v347, %v522
        %v524 = vpop.f32.mrb[0].mxu0
        %525 = vmatprep.mubr.bf16.mxu0 0
        %526 = vmatmul.mubr.bf16.gmra.mrb[0].mxu0 %v322
        %v527 = vpop.f32.mrb[0].mxu0
        %v528 = vadd.f32 %v347, %v527
        %v529 = vpop.f32.mrb[0].mxu0
        %v530 = vpop.f32.mrb[0].mxu0
        %v531 = vadd.f32 %v347, %v530
        %v532 = vpop.f32.mrb[0].mxu0
        %533 = vmatprep.mubr.bf16.mxu0 0
        %534 = vmatmul.mubr.bf16.gmra.mrb[0].mxu0 %v323
        %v535 = vpop.f32.mrb[0].mxu0
        %v536 = vadd.f32 %v347, %v535
        %v537 = vpop.f32.mrb[0].mxu0
        %v538 = vpop.f32.mrb[0].mxu0
        %v539 = vadd.f32 %v347, %v538
        %v540 = vpop.f32.mrb[0].mxu0
        %541 = vmatprep.mubr.bf16.mxu0 0
        %542 = vmatmul.mubr.bf16.gmra.mrb[0].mxu0 %v324
        %v543 = vpop.f32.mrb[0].mxu0
        %v544 = vadd.f32 %v347, %v543
        %v545 = vpop.f32.mrb[0].mxu0
        %v546 = vpop.f32.mrb[0].mxu0
        %v547 = vadd.f32 %v347, %v546
        %v548 = vpop.f32.mrb[0].mxu0
        %549 = vmatprep.mubr.bf16.mxu0 0
        %550 = vmatmul.mubr.bf16.gmra.mrb[0].mxu0 %v325
        %v551 = vpop.f32.mrb[0].mxu0
        %v552 = vadd.f32 %v347, %v551
        %v553 = vpop.f32.mrb[0].mxu0
        %v554 = vpop.f32.mrb[0].mxu0
        %v555 = vadd.f32 %v347, %v554
        %v556 = vpop.f32.mrb[0].mxu0
        %557 = vdwg.mxu0
        %558 = vst [vmem:[#allocation2] sm:$0xff] 0.0
        %559 = vst [vmem:[#allocation2 + $0x8] sm:$0xff] 0.0
        %560 = vst [vmem:[#allocation2 + $0x10] sm:$0xff] 0.0
        %561 = vst [vmem:[#allocation2 + $0x18] sm:$0xff] 0.0
        %562 = vst [vmem:[#allocation2 + $0x20] sm:$0xff] 0.0
        %563 = vst [vmem:[#allocation2 + $0x28] sm:$0xff] 0.0
        %564 = vst [vmem:[#allocation2 + $0x30] sm:$0xff] 0.0
        %565 = vst [vmem:[#allocation2 + $0x38] sm:$0xff] 0.0
        %566 = vst [vmem:[#allocation2 + $0x40] sm:$0xff] 0.0
        %567 = vst [vmem:[#allocation2 + $0x48] sm:$0xff] 0.0
        %568 = vst [vmem:[#allocation2 + $0x50] sm:$0xff] 0.0
        %569 = vst [vmem:[#allocation2 + $0x58] sm:$0xff] 0.0
        %570 = vst [vmem:[#allocation2 + $0x60] sm:$0xff] 0.0
        %571 = vst [vmem:[#allocation2 + $0x68] sm:$0xff] 0.0
        %572 = vst [vmem:[#allocation2 + $0x70] sm:$0xff] 0.0
        %573 = vst [vmem:[#allocation2 + $0x78] sm:$0xff] 0.0
        %574 = vst [vmem:[#allocation2 + $0x80] sm:$0xff] 0.0
        %575 = vst [vmem:[#allocation2 + $0x88] sm:$0xff] 0.0
        %576 = vst [vmem:[#allocation2 + $0x90] sm:$0xff] 0.0
        %577 = vst [vmem:[#allocation2 + $0x98] sm:$0xff] 0.0
        %578 = vst [vmem:[#allocation2 + $0xa0] sm:$0xff] 0.0
        %579 = vst [vmem:[#allocation2 + $0xa8] sm:$0xff] 0.0
        %580 = vst [vmem:[#allocation2 + $0xb0] sm:$0xff] 0.0
        %581 = vst [vmem:[#allocation2 + $0xb8] sm:$0xff] 0.0
        %582 = vst [vmem:[#allocation2 + $0xc0] sm:$0xff] 0.0
        %583 = vst [vmem:[#allocation2 + $0xc8] sm:$0xff] 0.0
        %584 = vst [vmem:[#allocation2 + $0xd0] sm:$0xff] 0.0
        %585 = vst [vmem:[#allocation2 + $0xd8] sm:$0xff] 0.0
        %586 = vst [vmem:[#allocation2 + $0xe0] sm:$0xff] 0.0
        %587 = vst [vmem:[#allocation2 + $0xe8] sm:$0xff] 0.0
        %588 = vst [vmem:[#allocation2 + $0xf0] sm:$0xff] 0.0
        %589 = vst [vmem:[#allocation2 + $0xf8] sm:$0xff] 0.0
        %590 = vst [vmem:[#allocation2 + $0x100] sm:$0xff] 0.0
        %591 = vst [vmem:[#allocation2 + $0x108] sm:$0xff] 0.0
        %592 = vst [vmem:[#allocation2 + $0x110] sm:$0xff] 0.0
        %593 = vst [vmem:[#allocation2 + $0x118] sm:$0xff] 0.0
        %594 = vst [vmem:[#allocation2 + $0x120] sm:$0xff] 0.0
        %595 = vst [vmem:[#allocation2 + $0x128] sm:$0xff] 0.0
        %596 = vst [vmem:[#allocation2 + $0x130] sm:$0xff] 0.0
        %597 = vst [vmem:[#allocation2 + $0x138] sm:$0xff] 0.0
        %598 = vst [vmem:[#allocation2 + $0x140] sm:$0xff] 0.0
        %599 = vst [vmem:[#allocation2 + $0x148] sm:$0xff] 0.0
        %600 = vst [vmem:[#allocation2 + $0x150] sm:$0xff] 0.0
        %601 = vst [vmem:[#allocation2 + $0x158] sm:$0xff] 0.0
        %602 = vst [vmem:[#allocation2 + $0x160] sm:$0xff] 0.0
        %603 = vst [vmem:[#allocation2 + $0x168] sm:$0xff] 0.0
        %604 = vst [vmem:[#allocation2 + $0x170] sm:$0xff] 0.0
        %605 = vst [vmem:[#allocation2 + $0x178] sm:$0xff] 0.0
        %606 = vst [vmem:[#allocation2 + $0x180] sm:$0xff] 0.0
        %607 = vst [vmem:[#allocation2 + $0x188] sm:$0xff] 0.0
        %608 = vst [vmem:[#allocation2 + $0x190] sm:$0xff] 0.0
        %609 = vst [vmem:[#allocation2 + $0x198] sm:$0xff] 0.0
        %610 = vst [vmem:[#allocation2 + $0x1a0] sm:$0xff] 0.0
        %611 = vst [vmem:[#allocation2 + $0x1a8] sm:$0xff] 0.0
        %612 = vst [vmem:[#allocation2 + $0x1b0] sm:$0xff] 0.0
        %613 = vst [vmem:[#allocation2 + $0x1b8] sm:$0xff] 0.0
        %614 = vst [vmem:[#allocation2 + $0x1c0] sm:$0xff] 0.0
        %615 = vst [vmem:[#allocation2 + $0x1c8] sm:$0xff] 0.0
        %616 = vst [vmem:[#allocation2 + $0x1d0] sm:$0xff] 0.0
        %617 = vst [vmem:[#allocation2 + $0x1d8] sm:$0xff] 0.0
        %618 = vst [vmem:[#allocation2 + $0x1e0] sm:$0xff] 0.0
        %619 = vst [vmem:[#allocation2 + $0x1e8] sm:$0xff] 0.0
        %620 = vst [vmem:[#allocation2 + $0x1f0] sm:$0xff] 0.0
        %621 = vst [vmem:[#allocation2 + $0x1f8] sm:$0xff] 0.0
        %622 = vst [vmem:[#allocation2 + $0x200] sm:$0xff] 0.0
        %623 = vst [vmem:[#allocation2 + $0x208] sm:$0xff] 0.0
        %624 = vst [vmem:[#allocation2 + $0x210] sm:$0xff] 0.0
        %625 = vst [vmem:[#allocation2 + $0x218] sm:$0xff] 0.0
        %626 = vst [vmem:[#allocation2 + $0x220] sm:$0xff] 0.0
        %627 = vst [vmem:[#allocation2 + $0x228] sm:$0xff] 0.0
        %628 = vst [vmem:[#allocation2 + $0x230] sm:$0xff] 0.0
        %629 = vst [vmem:[#allocation2 + $0x238] sm:$0xff] 0.0
        %s630 = scalar_lea.vmem [#allocation2], 32
        %631 = vst [vmem:[%s630 + $0x8] sm:$0xff] %v432
        %632 = vst [vmem:[%s630 + $0x10] sm:$0xff] %v435
        %633 = vst [vmem:[%s630 + $0x28] sm:$0xff] %v440
        %634 = vst [vmem:[%s630 + $0x30] sm:$0xff] %v443
        %635 = vst [vmem:[%s630 + $0x48] sm:$0xff] %v448
        %636 = vst [vmem:[%s630 + $0x50] sm:$0xff] %v451
        %637 = vst [vmem:[%s630 + $0x68] sm:$0xff] %v456
        %638 = vst [vmem:[%s630 + $0x70] sm:$0xff] %v459
        %639 = vst [vmem:[%s630 + $0x88] sm:$0xff] %v464
        %640 = vst [vmem:[%s630 + $0x90] sm:$0xff] %v467
        %641 = vst [vmem:[%s630 + $0xa8] sm:$0xff] %v472
        %642 = vst [vmem:[%s630 + $0xb0] sm:$0xff] %v475
        %643 = vst [vmem:[%s630 + $0xc8] sm:$0xff] %v480
        %644 = vst [vmem:[%s630 + $0xd0] sm:$0xff] %v483
        %645 = vst [vmem:[%s630 + $0xe8] sm:$0xff] %v488
        %646 = vst [vmem:[%s630 + $0xf0] sm:$0xff] %v491
        %647 = vst [vmem:[%s630 + $0x108] sm:$0xff] %v496
        %648 = vst [vmem:[%s630 + $0x110] sm:$0xff] %v499
        %649 = vst [vmem:[%s630 + $0x128] sm:$0xff] %v504
        %650 = vst [vmem:[%s630 + $0x130] sm:$0xff] %v507
        %651 = vst [vmem:[%s630 + $0x148] sm:$0xff] %v512
        %652 = vst [vmem:[%s630 + $0x150] sm:$0xff] %v515
        %653 = vst [vmem:[%s630 + $0x168] sm:$0xff] %v520
        %654 = vst [vmem:[%s630 + $0x170] sm:$0xff] %v523
        %655 = vst [vmem:[%s630 + $0x188] sm:$0xff] %v528
        %656 = vst [vmem:[%s630 + $0x190] sm:$0xff] %v531
        %657 = vst [vmem:[%s630 + $0x1a8] sm:$0xff] %v536
        %658 = vst [vmem:[%s630 + $0x1b0] sm:$0xff] %v539
        %659 = vst [vmem:[%s630 + $0x1c8] sm:$0xff] %v544
        %660 = vst [vmem:[%s630 + $0x1d0] sm:$0xff] %v547
        %661 = vst [vmem:[%s630 + $0x1e8] sm:$0xff] %v552
        %662 = vst [vmem:[%s630 + $0x1f0] sm:$0xff] %v555
        %v663 = vld [vmem:[#allocation2 + $0x7] sm:$0xff]
        %v664 = vld [vmem:[#allocation2 + $0xf] sm:$0xff]
        %v665 = vld [vmem:[#allocation2 + $0x27] sm:$0xff]
        %v666 = vld [vmem:[#allocation2 + $0x2f] sm:$0xff]
        %v667 = vld [vmem:[#allocation2 + $0x47] sm:$0xff]
        %v668 = vld [vmem:[#allocation2 + $0x4f] sm:$0xff]
        %v669 = vld [vmem:[#allocation2 + $0x67] sm:$0xff]
        %v670 = vld [vmem:[#allocation2 + $0x6f] sm:$0xff]
        %v671 = vld [vmem:[#allocation2 + $0x87] sm:$0xff]
        %v672 = vld [vmem:[#allocation2 + $0x8f] sm:$0xff]
        %v673 = vld [vmem:[#allocation2 + $0xa7] sm:$0xff]
        %v674 = vld [vmem:[#allocation2 + $0xaf] sm:$0xff]
        %v675 = vld [vmem:[#allocation2 + $0xc7] sm:$0xff]
        %v676 = vld [vmem:[#allocation2 + $0xcf] sm:$0xff]
        %v677 = vld [vmem:[#allocation2 + $0xe7] sm:$0xff]
        %v678 = vld [vmem:[#allocation2 + $0xef] sm:$0xff]
        %v679 = vld [vmem:[#allocation2 + $0x107] sm:$0xff]
        %v680 = vld [vmem:[#allocation2 + $0x10f] sm:$0xff]
        %v681 = vld [vmem:[#allocation2 + $0x127] sm:$0xff]
        %v682 = vld [vmem:[#allocation2 + $0x12f] sm:$0xff]
        %v683 = vld [vmem:[#allocation2 + $0x147] sm:$0xff]
        %v684 = vld [vmem:[#allocation2 + $0x14f] sm:$0xff]
        %v685 = vld [vmem:[#allocation2 + $0x167] sm:$0xff]
        %v686 = vld [vmem:[#allocation2 + $0x16f] sm:$0xff]
        %v687 = vld [vmem:[#allocation2 + $0x187] sm:$0xff]
        %v688 = vld [vmem:[#allocation2 + $0x18f] sm:$0xff]
        %v689 = vld [vmem:[#allocation2 + $0x1a7] sm:$0xff]
        %v690 = vld [vmem:[#allocation2 + $0x1af] sm:$0xff]
        %v691 = vld [vmem:[#allocation2 + $0x1c7] sm:$0xff]
        %v692 = vld [vmem:[#allocation2 + $0x1cf] sm:$0xff]
        %v693 = vld [vmem:[#allocation2 + $0x1e7] sm:$0xff]
        %v694 = vld [vmem:[#allocation2 + $0x1ef] sm:$0xff]
        %v695 = vld [vmem:[%s3] sm:$0x1]
        %v696 = vlaneseq
        %v697 = vshrl.u32 %v696, 7
        %v698 = vsub.s32 0, %v697
        %v699 = vrot.slane %v695, %v698
        %v700 = vmul.f32 %v663, %v699
        %v701 = vmul.f32 %v664, %v699
        %v702 = vmul.f32 %v665, %v699
        %v703 = vmul.f32 %v666, %v699
        %v704 = vmul.f32 %v667, %v699
        %v705 = vmul.f32 %v668, %v699
        %v706 = vmul.f32 %v669, %v699
        %v707 = vmul.f32 %v670, %v699
        %v708 = vmul.f32 %v671, %v699
        %v709 = vmul.f32 %v672, %v699
        %v710 = vmul.f32 %v673, %v699
        %v711 = vmul.f32 %v674, %v699
        %v712 = vmul.f32 %v675, %v699
        %v713 = vmul.f32 %v676, %v699
        %v714 = vmul.f32 %v677, %v699
        %v715 = vmul.f32 %v678, %v699
        %v716 = vmul.f32 %v679, %v699
        %v717 = vmul.f32 %v680, %v699
        %v718 = vmul.f32 %v681, %v699
        %v719 = vmul.f32 %v682, %v699
        %v720 = vmul.f32 %v683, %v699
        %v721 = vmul.f32 %v684, %v699
        %v722 = vmul.f32 %v685, %v699
        %v723 = vmul.f32 %v686, %v699
        %v724 = vmul.f32 %v687, %v699
        %v725 = vmul.f32 %v688, %v699
        %v726 = vmul.f32 %v689, %v699
        %v727 = vmul.f32 %v690, %v699
        %v728 = vmul.f32 %v691, %v699
        %v729 = vmul.f32 %v692, %v699
        %v730 = vmul.f32 %v693, %v699
        %v731 = vmul.f32 %v694, %v699
        %v732 = vld [vmem:[%s4] sm:$0x1]
        %v734 = vlaneseq
        %v735 = vshrl.u32 %v734, 7
        %v736 = vsub.s32 0, %v735
        %v737 = vrot.slane %v732, %v736
        %v739 = vadd.f32 %v700, %v737
        %v740 = vadd.f32 %v701, %v737
        %v741 = vadd.f32 %v702, %v737
        %v742 = vadd.f32 %v703, %v737
        %v743 = vadd.f32 %v704, %v737
        %v744 = vadd.f32 %v705, %v737
        %v745 = vadd.f32 %v706, %v737
        %v746 = vadd.f32 %v707, %v737
        %v747 = vadd.f32 %v708, %v737
        %v748 = vadd.f32 %v709, %v737
        %v749 = vadd.f32 %v710, %v737
        %v750 = vadd.f32 %v711, %v737
        %v751 = vadd.f32 %v712, %v737
        %v752 = vadd.f32 %v713, %v737
        %v753 = vadd.f32 %v714, %v737
        %v754 = vadd.f32 %v715, %v737
        %v755 = vadd.f32 %v716, %v737
        %v756 = vadd.f32 %v717, %v737
        %v757 = vadd.f32 %v718, %v737
        %v758 = vadd.f32 %v719, %v737
        %v759 = vadd.f32 %v720, %v737
        %v760 = vadd.f32 %v721, %v737
        %v761 = vadd.f32 %v722, %v737
        %v762 = vadd.f32 %v723, %v737
        %v763 = vadd.f32 %v724, %v737
        %v764 = vadd.f32 %v725, %v737
        %v765 = vadd.f32 %v726, %v737
        %v766 = vadd.f32 %v727, %v737
        %v767 = vadd.f32 %v728, %v737
        %v768 = vadd.f32 %v729, %v737
        %v769 = vadd.f32 %v730, %v737
        %v770 = vadd.f32 %v731, %v737
        %v771 = vld [vmem:[#allocation2 + $0x8] sm:$0xff]
        %v772 = vld [vmem:[#allocation2 + $0x10] sm:$0xff]
        %v773 = vld [vmem:[#allocation2 + $0x28] sm:$0xff]
        %v774 = vld [vmem:[#allocation2 + $0x30] sm:$0xff]
        %v775 = vld [vmem:[#allocation2 + $0x48] sm:$0xff]
        %v776 = vld [vmem:[#allocation2 + $0x50] sm:$0xff]
        %v777 = vld [vmem:[#allocation2 + $0x68] sm:$0xff]
        %v778 = vld [vmem:[#allocation2 + $0x70] sm:$0xff]
        %v779 = vld [vmem:[#allocation2 + $0x88] sm:$0xff]
        %v780 = vld [vmem:[#allocation2 + $0x90] sm:$0xff]
        %v781 = vld [vmem:[#allocation2 + $0xa8] sm:$0xff]
        %v782 = vld [vmem:[#allocation2 + $0xb0] sm:$0xff]
        %v783 = vld [vmem:[#allocation2 + $0xc8] sm:$0xff]
        %v784 = vld [vmem:[#allocation2 + $0xd0] sm:$0xff]
        %v785 = vld [vmem:[#allocation2 + $0xe8] sm:$0xff]
        %v786 = vld [vmem:[#allocation2 + $0xf0] sm:$0xff]
        %v787 = vld [vmem:[#allocation2 + $0x108] sm:$0xff]
        %v788 = vld [vmem:[#allocation2 + $0x110] sm:$0xff]
        %v789 = vld [vmem:[#allocation2 + $0x128] sm:$0xff]
        %v790 = vld [vmem:[#allocation2 + $0x130] sm:$0xff]
        %v791 = vld [vmem:[#allocation2 + $0x148] sm:$0xff]
        %v792 = vld [vmem:[#allocation2 + $0x150] sm:$0xff]
        %v793 = vld [vmem:[#allocation2 + $0x168] sm:$0xff]
        %v794 = vld [vmem:[#allocation2 + $0x170] sm:$0xff]
        %v795 = vld [vmem:[#allocation2 + $0x188] sm:$0xff]
        %v796 = vld [vmem:[#allocation2 + $0x190] sm:$0xff]
        %v797 = vld [vmem:[#allocation2 + $0x1a8] sm:$0xff]
        %v798 = vld [vmem:[#allocation2 + $0x1b0] sm:$0xff]
        %v799 = vld [vmem:[#allocation2 + $0x1c8] sm:$0xff]
        %v800 = vld [vmem:[#allocation2 + $0x1d0] sm:$0xff]
        %v801 = vld [vmem:[#allocation2 + $0x1e8] sm:$0xff]
        %v802 = vld [vmem:[#allocation2 + $0x1f0] sm:$0xff]
        %v803 = vld [vmem:[%s3 + $0x1] sm:$0x1]
        %v804 = vlaneseq
        %v805 = vshrl.u32 %v804, 7
        %v806 = vsub.s32 0, %v805
        %v807 = vrot.slane %v803, %v806
        %v808 = vmul.f32 %v771, %v807
        %v809 = vmul.f32 %v772, %v807
        %v810 = vmul.f32 %v773, %v807
        %v811 = vmul.f32 %v774, %v807
        %v812 = vmul.f32 %v775, %v807
        %v813 = vmul.f32 %v776, %v807
        %v814 = vmul.f32 %v777, %v807
        %v815 = vmul.f32 %v778, %v807
        %v816 = vmul.f32 %v779, %v807
        %v817 = vmul.f32 %v780, %v807
        %v818 = vmul.f32 %v781, %v807
        %v819 = vmul.f32 %v782, %v807
        %v820 = vmul.f32 %v783, %v807
        %v821 = vmul.f32 %v784, %v807
        %v822 = vmul.f32 %v785, %v807
        %v823 = vmul.f32 %v786, %v807
        %v824 = vmul.f32 %v787, %v807
        %v825 = vmul.f32 %v788, %v807
        %v826 = vmul.f32 %v789, %v807
        %v827 = vmul.f32 %v790, %v807
        %v828 = vmul.f32 %v791, %v807
        %v829 = vmul.f32 %v792, %v807
        %v830 = vmul.f32 %v793, %v807
        %v831 = vmul.f32 %v794, %v807
        %v832 = vmul.f32 %v795, %v807
        %v833 = vmul.f32 %v796, %v807
        %v834 = vmul.f32 %v797, %v807
        %v835 = vmul.f32 %v798, %v807
        %v836 = vmul.f32 %v799, %v807
        %v837 = vmul.f32 %v800, %v807
        %v838 = vmul.f32 %v801, %v807
        %v839 = vmul.f32 %v802, %v807
        %v840 = vadd.f32 %v739, %v808
        %v841 = vadd.f32 %v740, %v809
        %v842 = vadd.f32 %v741, %v810
        %v843 = vadd.f32 %v742, %v811
        %v844 = vadd.f32 %v743, %v812
        %v845 = vadd.f32 %v744, %v813
        %v846 = vadd.f32 %v745, %v814
        %v847 = vadd.f32 %v746, %v815
        %v848 = vadd.f32 %v747, %v816
        %v849 = vadd.f32 %v748, %v817
        %v850 = vadd.f32 %v749, %v818
        %v851 = vadd.f32 %v750, %v819
        %v852 = vadd.f32 %v751, %v820
        %v853 = vadd.f32 %v752, %v821
        %v854 = vadd.f32 %v753, %v822
        %v855 = vadd.f32 %v754, %v823
        %v856 = vadd.f32 %v755, %v824
        %v857 = vadd.f32 %v756, %v825
        %v858 = vadd.f32 %v757, %v826
        %v859 = vadd.f32 %v758, %v827
        %v860 = vadd.f32 %v759, %v828
        %v861 = vadd.f32 %v760, %v829
        %v862 = vadd.f32 %v761, %v830
        %v863 = vadd.f32 %v762, %v831
        %v864 = vadd.f32 %v763, %v832
        %v865 = vadd.f32 %v764, %v833
        %v866 = vadd.f32 %v765, %v834
        %v867 = vadd.f32 %v766, %v835
        %v868 = vadd.f32 %v767, %v836
        %v869 = vadd.f32 %v768, %v837
        %v870 = vadd.f32 %v769, %v838
        %v871 = vadd.f32 %v770, %v839
        %v872 = vld [vmem:[#allocation2 + $0x9] sm:$0xff]
        %v873 = vld [vmem:[#allocation2 + $0x11] sm:$0xff]
        %v874 = vld [vmem:[#allocation2 + $0x29] sm:$0xff]
        %v875 = vld [vmem:[#allocation2 + $0x31] sm:$0xff]
        %v876 = vld [vmem:[#allocation2 + $0x49] sm:$0xff]
        %v877 = vld [vmem:[#allocation2 + $0x51] sm:$0xff]
        %v878 = vld [vmem:[#allocation2 + $0x69] sm:$0xff]
        %v879 = vld [vmem:[#allocation2 + $0x71] sm:$0xff]
        %v880 = vld [vmem:[#allocation2 + $0x89] sm:$0xff]
        %v881 = vld [vmem:[#allocation2 + $0x91] sm:$0xff]
        %v882 = vld [vmem:[#allocation2 + $0xa9] sm:$0xff]
        %v883 = vld [vmem:[#allocation2 + $0xb1] sm:$0xff]
        %v884 = vld [vmem:[#allocation2 + $0xc9] sm:$0xff]
        %v885 = vld [vmem:[#allocation2 + $0xd1] sm:$0xff]
        %v886 = vld [vmem:[#allocation2 + $0xe9] sm:$0xff]
        %v887 = vld [vmem:[#allocation2 + $0xf1] sm:$0xff]
        %v888 = vld [vmem:[#allocation2 + $0x109] sm:$0xff]
        %v889 = vld [vmem:[#allocation2 + $0x111] sm:$0xff]
        %v890 = vld [vmem:[#allocation2 + $0x129] sm:$0xff]
        %v891 = vld [vmem:[#allocation2 + $0x131] sm:$0xff]
        %v892 = vld [vmem:[#allocation2 + $0x149] sm:$0xff]
        %v893 = vld [vmem:[#allocation2 + $0x151] sm:$0xff]
        %v894 = vld [vmem:[#allocation2 + $0x169] sm:$0xff]
        %v895 = vld [vmem:[#allocation2 + $0x171] sm:$0xff]
        %v896 = vld [vmem:[#allocation2 + $0x189] sm:$0xff]
        %v897 = vld [vmem:[#allocation2 + $0x191] sm:$0xff]
        %v898 = vld [vmem:[#allocation2 + $0x1a9] sm:$0xff]
        %v899 = vld [vmem:[#allocation2 + $0x1b1] sm:$0xff]
        %v900 = vld [vmem:[#allocation2 + $0x1c9] sm:$0xff]
        %v901 = vld [vmem:[#allocation2 + $0x1d1] sm:$0xff]
        %v902 = vld [vmem:[#allocation2 + $0x1e9] sm:$0xff]
        %v903 = vld [vmem:[#allocation2 + $0x1f1] sm:$0xff]
        %v904 = vld [vmem:[%s3 + $0x2] sm:$0x1]
        %v905 = vlaneseq
        %v906 = vshrl.u32 %v905, 7
        %v907 = vsub.s32 0, %v906
        %v908 = vrot.slane %v904, %v907
        %v909 = vmul.f32 %v872, %v908
        %v910 = vmul.f32 %v873, %v908
        %v911 = vmul.f32 %v874, %v908
        %v912 = vmul.f32 %v875, %v908
        %v913 = vmul.f32 %v876, %v908
        %v914 = vmul.f32 %v877, %v908
        %v915 = vmul.f32 %v878, %v908
        %v916 = vmul.f32 %v879, %v908
        %v917 = vmul.f32 %v880, %v908
        %v918 = vmul.f32 %v881, %v908
        %v919 = vmul.f32 %v882, %v908
        %v920 = vmul.f32 %v883, %v908
        %v921 = vmul.f32 %v884, %v908
        %v922 = vmul.f32 %v885, %v908
        %v923 = vmul.f32 %v886, %v908
        %v924 = vmul.f32 %v887, %v908
        %v925 = vmul.f32 %v888, %v908
        %v926 = vmul.f32 %v889, %v908
        %v927 = vmul.f32 %v890, %v908
        %v928 = vmul.f32 %v891, %v908
        %v929 = vmul.f32 %v892, %v908
        %v930 = vmul.f32 %v893, %v908
        %v931 = vmul.f32 %v894, %v908
        %v932 = vmul.f32 %v895, %v908
        %v933 = vmul.f32 %v896, %v908
        %v934 = vmul.f32 %v897, %v908
        %v935 = vmul.f32 %v898, %v908
        %v936 = vmul.f32 %v899, %v908
        %v937 = vmul.f32 %v900, %v908
        %v938 = vmul.f32 %v901, %v908
        %v939 = vmul.f32 %v902, %v908
        %v940 = vmul.f32 %v903, %v908
        %v941 = vadd.f32 %v840, %v909
        %v942 = vadd.f32 %v841, %v910
        %v943 = vadd.f32 %v842, %v911
        %v944 = vadd.f32 %v843, %v912
        %v945 = vadd.f32 %v844, %v913
        %v946 = vadd.f32 %v845, %v914
        %v947 = vadd.f32 %v846, %v915
        %v948 = vadd.f32 %v847, %v916
        %v949 = vadd.f32 %v848, %v917
        %v950 = vadd.f32 %v849, %v918
        %v951 = vadd.f32 %v850, %v919
        %v952 = vadd.f32 %v851, %v920
        %v953 = vadd.f32 %v852, %v921
        %v954 = vadd.f32 %v853, %v922
        %v955 = vadd.f32 %v854, %v923
        %v956 = vadd.f32 %v855, %v924
        %v957 = vadd.f32 %v856, %v925
        %v958 = vadd.f32 %v857, %v926
        %v959 = vadd.f32 %v858, %v927
        %v960 = vadd.f32 %v859, %v928
        %v961 = vadd.f32 %v860, %v929
        %v962 = vadd.f32 %v861, %v930
        %v963 = vadd.f32 %v862, %v931
        %v964 = vadd.f32 %v863, %v932
        %v965 = vadd.f32 %v864, %v933
        %v966 = vadd.f32 %v865, %v934
        %v967 = vadd.f32 %v866, %v935
        %v968 = vadd.f32 %v867, %v936
        %v969 = vadd.f32 %v868, %v937
        %v970 = vadd.f32 %v869, %v938
        %v971 = vadd.f32 %v870, %v939
        %v972 = vadd.f32 %v871, %v940
        %v973 = vld [vmem:[%s630 + $0x7] sm:$0xff]
        %v974 = vld [vmem:[%s630 + $0xf] sm:$0xff]
        %v975 = vld [vmem:[%s630 + $0x27] sm:$0xff]
        %v976 = vld [vmem:[%s630 + $0x2f] sm:$0xff]
        %v977 = vld [vmem:[%s630 + $0x47] sm:$0xff]
        %v978 = vld [vmem:[%s630 + $0x4f] sm:$0xff]
        %v979 = vld [vmem:[%s630 + $0x67] sm:$0xff]
        %v980 = vld [vmem:[%s630 + $0x6f] sm:$0xff]
        %v981 = vld [vmem:[%s630 + $0x87] sm:$0xff]
        %v982 = vld [vmem:[%s630 + $0x8f] sm:$0xff]
        %v983 = vld [vmem:[%s630 + $0xa7] sm:$0xff]
        %v984 = vld [vmem:[%s630 + $0xaf] sm:$0xff]
        %v985 = vld [vmem:[%s630 + $0xc7] sm:$0xff]
        %v986 = vld [vmem:[%s630 + $0xcf] sm:$0xff]
        %v987 = vld [vmem:[%s630 + $0xe7] sm:$0xff]
        %v988 = vld [vmem:[%s630 + $0xef] sm:$0xff]
        %v989 = vld [vmem:[%s630 + $0x107] sm:$0xff]
        %v990 = vld [vmem:[%s630 + $0x10f] sm:$0xff]
        %v991 = vld [vmem:[%s630 + $0x127] sm:$0xff]
        %v992 = vld [vmem:[%s630 + $0x12f] sm:$0xff]
        %v993 = vld [vmem:[%s630 + $0x147] sm:$0xff]
        %v994 = vld [vmem:[%s630 + $0x14f] sm:$0xff]
        %v995 = vld [vmem:[%s630 + $0x167] sm:$0xff]
        %v996 = vld [vmem:[%s630 + $0x16f] sm:$0xff]
        %v997 = vld [vmem:[%s630 + $0x187] sm:$0xff]
        %v998 = vld [vmem:[%s630 + $0x18f] sm:$0xff]
        %v999 = vld [vmem:[%s630 + $0x1a7] sm:$0xff]
        %v1000 = vld [vmem:[%s630 + $0x1af] sm:$0xff]
        %v1001 = vld [vmem:[%s630 + $0x1c7] sm:$0xff]
        %v1002 = vld [vmem:[%s630 + $0x1cf] sm:$0xff]
        %v1003 = vld [vmem:[%s630 + $0x1e7] sm:$0xff]
        %v1004 = vld [vmem:[%s630 + $0x1ef] sm:$0xff]
        %v1005 = vld [vmem:[%s3 + $0x3] sm:$0x1]
        %v1006 = vlaneseq
        %v1007 = vshrl.u32 %v1006, 7
        %v1008 = vsub.s32 0, %v1007
        %v1009 = vrot.slane %v1005, %v1008
        %v1010 = vmul.f32 %v973, %v1009
        %v1011 = vmul.f32 %v974, %v1009
        %v1012 = vmul.f32 %v975, %v1009
        %v1013 = vmul.f32 %v976, %v1009
        %v1014 = vmul.f32 %v977, %v1009
        %v1015 = vmul.f32 %v978, %v1009
        %v1016 = vmul.f32 %v979, %v1009
        %v1017 = vmul.f32 %v980, %v1009
        %v1018 = vmul.f32 %v981, %v1009
        %v1019 = vmul.f32 %v982, %v1009
        %v1020 = vmul.f32 %v983, %v1009
        %v1021 = vmul.f32 %v984, %v1009
        %v1022 = vmul.f32 %v985, %v1009
        %v1023 = vmul.f32 %v986, %v1009
        %v1024 = vmul.f32 %v987, %v1009
        %v1025 = vmul.f32 %v988, %v1009
        %v1026 = vmul.f32 %v989, %v1009
        %v1027 = vmul.f32 %v990, %v1009
        %v1028 = vmul.f32 %v991, %v1009
        %v1029 = vmul.f32 %v992, %v1009
        %v1030 = vmul.f32 %v993, %v1009
        %v1031 = vmul.f32 %v994, %v1009
        %v1032 = vmul.f32 %v995, %v1009
        %v1033 = vmul.f32 %v996, %v1009
        %v1034 = vmul.f32 %v997, %v1009
        %v1035 = vmul.f32 %v998, %v1009
        %v1036 = vmul.f32 %v999, %v1009
        %v1037 = vmul.f32 %v1000, %v1009
        %v1038 = vmul.f32 %v1001, %v1009
        %v1039 = vmul.f32 %v1002, %v1009
        %v1040 = vmul.f32 %v1003, %v1009
        %v1041 = vmul.f32 %v1004, %v1009
        %v1042 = vadd.f32 %v941, %v1010
        %v1043 = vadd.f32 %v942, %v1011
        %v1044 = vadd.f32 %v943, %v1012
        %v1045 = vadd.f32 %v944, %v1013
        %v1046 = vadd.f32 %v945, %v1014
        %v1047 = vadd.f32 %v946, %v1015
        %v1048 = vadd.f32 %v947, %v1016
        %v1049 = vadd.f32 %v948, %v1017
        %v1050 = vadd.f32 %v949, %v1018
        %v1051 = vadd.f32 %v950, %v1019
        %v1052 = vadd.f32 %v951, %v1020
        %v1053 = vadd.f32 %v952, %v1021
        %v1054 = vadd.f32 %v953, %v1022
        %v1055 = vadd.f32 %v954, %v1023
        %v1056 = vadd.f32 %v955, %v1024
        %v1057 = vadd.f32 %v956, %v1025
        %v1058 = vadd.f32 %v957, %v1026
        %v1059 = vadd.f32 %v958, %v1027
        %v1060 = vadd.f32 %v959, %v1028
        %v1061 = vadd.f32 %v960, %v1029
        %v1062 = vadd.f32 %v961, %v1030
        %v1063 = vadd.f32 %v962, %v1031
        %v1064 = vadd.f32 %v963, %v1032
        %v1065 = vadd.f32 %v964, %v1033
        %v1066 = vadd.f32 %v965, %v1034
        %v1067 = vadd.f32 %v966, %v1035
        %v1068 = vadd.f32 %v967, %v1036
        %v1069 = vadd.f32 %v968, %v1037
        %v1070 = vadd.f32 %v969, %v1038
        %v1071 = vadd.f32 %v970, %v1039
        %v1072 = vadd.f32 %v971, %v1040
        %v1073 = vadd.f32 %v972, %v1041
        %v1074 = vld [vmem:[%s630 + $0x8] sm:$0xff]
        %v1075 = vld [vmem:[%s630 + $0x10] sm:$0xff]
        %v1076 = vld [vmem:[%s630 + $0x28] sm:$0xff]
        %v1077 = vld [vmem:[%s630 + $0x30] sm:$0xff]
        %v1078 = vld [vmem:[%s630 + $0x48] sm:$0xff]
        %v1079 = vld [vmem:[%s630 + $0x50] sm:$0xff]
        %v1080 = vld [vmem:[%s630 + $0x68] sm:$0xff]
        %v1081 = vld [vmem:[%s630 + $0x70] sm:$0xff]
        %v1082 = vld [vmem:[%s630 + $0x88] sm:$0xff]
        %v1083 = vld [vmem:[%s630 + $0x90] sm:$0xff]
        %v1084 = vld [vmem:[%s630 + $0xa8] sm:$0xff]
        %v1085 = vld [vmem:[%s630 + $0xb0] sm:$0xff]
        %v1086 = vld [vmem:[%s630 + $0xc8] sm:$0xff]
        %v1087 = vld [vmem:[%s630 + $0xd0] sm:$0xff]
        %v1088 = vld [vmem:[%s630 + $0xe8] sm:$0xff]
        %v1089 = vld [vmem:[%s630 + $0xf0] sm:$0xff]
        %v1090 = vld [vmem:[%s630 + $0x108] sm:$0xff]
        %v1091 = vld [vmem:[%s630 + $0x110] sm:$0xff]
        %v1092 = vld [vmem:[%s630 + $0x128] sm:$0xff]
        %v1093 = vld [vmem:[%s630 + $0x130] sm:$0xff]
        %v1094 = vld [vmem:[%s630 + $0x148] sm:$0xff]
        %v1095 = vld [vmem:[%s630 + $0x150] sm:$0xff]
        %v1096 = vld [vmem:[%s630 + $0x168] sm:$0xff]
        %v1097 = vld [vmem:[%s630 + $0x170] sm:$0xff]
        %v1098 = vld [vmem:[%s630 + $0x188] sm:$0xff]
        %v1099 = vld [vmem:[%s630 + $0x190] sm:$0xff]
        %v1100 = vld [vmem:[%s630 + $0x1a8] sm:$0xff]
        %v1101 = vld [vmem:[%s630 + $0x1b0] sm:$0xff]
        %v1102 = vld [vmem:[%s630 + $0x1c8] sm:$0xff]
        %v1103 = vld [vmem:[%s630 + $0x1d0] sm:$0xff]
        %v1104 = vld [vmem:[%s630 + $0x1e8] sm:$0xff]
        %v1105 = vld [vmem:[%s630 + $0x1f0] sm:$0xff]
        %v1106 = vld [vmem:[%s3 + $0x4] sm:$0x1]
        %v1107 = vlaneseq
        %v1108 = vshrl.u32 %v1107, 7
        %v1109 = vsub.s32 0, %v1108
        %v1110 = vrot.slane %v1106, %v1109
        %v1111 = vmul.f32 %v1074, %v1110
        %v1112 = vmul.f32 %v1075, %v1110
        %v1113 = vmul.f32 %v1076, %v1110
        %v1114 = vmul.f32 %v1077, %v1110
        %v1115 = vmul.f32 %v1078, %v1110
        %v1116 = vmul.f32 %v1079, %v1110
        %v1117 = vmul.f32 %v1080, %v1110
        %v1118 = vmul.f32 %v1081, %v1110
        %v1119 = vmul.f32 %v1082, %v1110
        %v1120 = vmul.f32 %v1083, %v1110
        %v1121 = vmul.f32 %v1084, %v1110
        %v1122 = vmul.f32 %v1085, %v1110
        %v1123 = vmul.f32 %v1086, %v1110
        %v1124 = vmul.f32 %v1087, %v1110
        %v1125 = vmul.f32 %v1088, %v1110
        %v1126 = vmul.f32 %v1089, %v1110
        %v1127 = vmul.f32 %v1090, %v1110
        %v1128 = vmul.f32 %v1091, %v1110
        %v1129 = vmul.f32 %v1092, %v1110
        %v1130 = vmul.f32 %v1093, %v1110
        %v1131 = vmul.f32 %v1094, %v1110
        %v1132 = vmul.f32 %v1095, %v1110
        %v1133 = vmul.f32 %v1096, %v1110
        %v1134 = vmul.f32 %v1097, %v1110
        %v1135 = vmul.f32 %v1098, %v1110
        %v1136 = vmul.f32 %v1099, %v1110
        %v1137 = vmul.f32 %v1100, %v1110
        %v1138 = vmul.f32 %v1101, %v1110
        %v1139 = vmul.f32 %v1102, %v1110
        %v1140 = vmul.f32 %v1103, %v1110
        %v1141 = vmul.f32 %v1104, %v1110
        %v1142 = vmul.f32 %v1105, %v1110
        %v1143 = vadd.f32 %v1042, %v1111
        %v1144 = vadd.f32 %v1043, %v1112
        %v1145 = vadd.f32 %v1044, %v1113
        %v1146 = vadd.f32 %v1045, %v1114
        %v1147 = vadd.f32 %v1046, %v1115
        %v1148 = vadd.f32 %v1047, %v1116
        %v1149 = vadd.f32 %v1048, %v1117
        %v1150 = vadd.f32 %v1049, %v1118
        %v1151 = vadd.f32 %v1050, %v1119
        %v1152 = vadd.f32 %v1051, %v1120
        %v1153 = vadd.f32 %v1052, %v1121
        %v1154 = vadd.f32 %v1053, %v1122
        %v1155 = vadd.f32 %v1054, %v1123
        %v1156 = vadd.f32 %v1055, %v1124
        %v1157 = vadd.f32 %v1056, %v1125
        %v1158 = vadd.f32 %v1057, %v1126
        %v1159 = vadd.f32 %v1058, %v1127
        %v1160 = vadd.f32 %v1059, %v1128
        %v1161 = vadd.f32 %v1060, %v1129
        %v1162 = vadd.f32 %v1061, %v1130
        %v1163 = vadd.f32 %v1062, %v1131
        %v1164 = vadd.f32 %v1063, %v1132
        %v1165 = vadd.f32 %v1064, %v1133
        %v1166 = vadd.f32 %v1065, %v1134
        %v1167 = vadd.f32 %v1066, %v1135
        %v1168 = vadd.f32 %v1067, %v1136
        %v1169 = vadd.f32 %v1068, %v1137
        %v1170 = vadd.f32 %v1069, %v1138
        %v1171 = vadd.f32 %v1070, %v1139
        %v1172 = vadd.f32 %v1071, %v1140
        %v1173 = vadd.f32 %v1072, %v1141
        %v1174 = vadd.f32 %v1073, %v1142
        %v1175 = vld [vmem:[%s630 + $0x9] sm:$0xff]
        %v1176 = vld [vmem:[%s630 + $0x11] sm:$0xff]
        %v1177 = vld [vmem:[%s630 + $0x29] sm:$0xff]
        %v1178 = vld [vmem:[%s630 + $0x31] sm:$0xff]
        %v1179 = vld [vmem:[%s630 + $0x49] sm:$0xff]
        %v1180 = vld [vmem:[%s630 + $0x51] sm:$0xff]
        %v1181 = vld [vmem:[%s630 + $0x69] sm:$0xff]
        %v1182 = vld [vmem:[%s630 + $0x71] sm:$0xff]
        %v1183 = vld [vmem:[%s630 + $0x89] sm:$0xff]
        %v1184 = vld [vmem:[%s630 + $0x91] sm:$0xff]
        %v1185 = vld [vmem:[%s630 + $0xa9] sm:$0xff]
        %v1186 = vld [vmem:[%s630 + $0xb1] sm:$0xff]
        %v1187 = vld [vmem:[%s630 + $0xc9] sm:$0xff]
        %v1188 = vld [vmem:[%s630 + $0xd1] sm:$0xff]
        %v1189 = vld [vmem:[%s630 + $0xe9] sm:$0xff]
        %v1190 = vld [vmem:[%s630 + $0xf1] sm:$0xff]
        %v1191 = vld [vmem:[%s630 + $0x109] sm:$0xff]
        %v1192 = vld [vmem:[%s630 + $0x111] sm:$0xff]
        %v1193 = vld [vmem:[%s630 + $0x129] sm:$0xff]
        %v1194 = vld [vmem:[%s630 + $0x131] sm:$0xff]
        %v1195 = vld [vmem:[%s630 + $0x149] sm:$0xff]
        %v1196 = vld [vmem:[%s630 + $0x151] sm:$0xff]
        %v1197 = vld [vmem:[%s630 + $0x169] sm:$0xff]
        %v1198 = vld [vmem:[%s630 + $0x171] sm:$0xff]
        %v1199 = vld [vmem:[%s630 + $0x189] sm:$0xff]
        %v1200 = vld [vmem:[%s630 + $0x191] sm:$0xff]
        %v1201 = vld [vmem:[%s630 + $0x1a9] sm:$0xff]
        %v1202 = vld [vmem:[%s630 + $0x1b1] sm:$0xff]
        %v1203 = vld [vmem:[%s630 + $0x1c9] sm:$0xff]
        %v1204 = vld [vmem:[%s630 + $0x1d1] sm:$0xff]
        %v1205 = vld [vmem:[%s630 + $0x1e9] sm:$0xff]
        %v1206 = vld [vmem:[%s630 + $0x1f1] sm:$0xff]
        %v1207 = vld [vmem:[%s3 + $0x5] sm:$0x1]
        %v1208 = vlaneseq
        %v1209 = vshrl.u32 %v1208, 7
        %v1210 = vsub.s32 0, %v1209
        %v1211 = vrot.slane %v1207, %v1210
        %v1212 = vmul.f32 %v1175, %v1211
        %v1213 = vmul.f32 %v1176, %v1211
        %v1214 = vmul.f32 %v1177, %v1211
        %v1215 = vmul.f32 %v1178, %v1211
        %v1216 = vmul.f32 %v1179, %v1211
        %v1217 = vmul.f32 %v1180, %v1211
        %v1218 = vmul.f32 %v1181, %v1211
        %v1219 = vmul.f32 %v1182, %v1211
        %v1220 = vmul.f32 %v1183, %v1211
        %v1221 = vmul.f32 %v1184, %v1211
        %v1222 = vmul.f32 %v1185, %v1211
        %v1223 = vmul.f32 %v1186, %v1211
        %v1224 = vmul.f32 %v1187, %v1211
        %v1225 = vmul.f32 %v1188, %v1211
        %v1226 = vmul.f32 %v1189, %v1211
        %v1227 = vmul.f32 %v1190, %v1211
        %v1228 = vmul.f32 %v1191, %v1211
        %v1229 = vmul.f32 %v1192, %v1211
        %v1230 = vmul.f32 %v1193, %v1211
        %v1231 = vmul.f32 %v1194, %v1211
        %v1232 = vmul.f32 %v1195, %v1211
        %v1233 = vmul.f32 %v1196, %v1211
        %v1234 = vmul.f32 %v1197, %v1211
        %v1235 = vmul.f32 %v1198, %v1211
        %v1236 = vmul.f32 %v1199, %v1211
        %v1237 = vmul.f32 %v1200, %v1211
        %v1238 = vmul.f32 %v1201, %v1211
        %v1239 = vmul.f32 %v1202, %v1211
        %v1240 = vmul.f32 %v1203, %v1211
        %v1241 = vmul.f32 %v1204, %v1211
        %v1242 = vmul.f32 %v1205, %v1211
        %v1243 = vmul.f32 %v1206, %v1211
        %v1244 = vadd.f32 %v1143, %v1212
        %v1245 = vadd.f32 %v1144, %v1213
        %v1246 = vadd.f32 %v1145, %v1214
        %v1247 = vadd.f32 %v1146, %v1215
        %v1248 = vadd.f32 %v1147, %v1216
        %v1249 = vadd.f32 %v1148, %v1217
        %v1250 = vadd.f32 %v1149, %v1218
        %v1251 = vadd.f32 %v1150, %v1219
        %v1252 = vadd.f32 %v1151, %v1220
        %v1253 = vadd.f32 %v1152, %v1221
        %v1254 = vadd.f32 %v1153, %v1222
        %v1255 = vadd.f32 %v1154, %v1223
        %v1256 = vadd.f32 %v1155, %v1224
        %v1257 = vadd.f32 %v1156, %v1225
        %v1258 = vadd.f32 %v1157, %v1226
        %v1259 = vadd.f32 %v1158, %v1227
        %v1260 = vadd.f32 %v1159, %v1228
        %v1261 = vadd.f32 %v1160, %v1229
        %v1262 = vadd.f32 %v1161, %v1230
        %v1263 = vadd.f32 %v1162, %v1231
        %v1264 = vadd.f32 %v1163, %v1232
        %v1265 = vadd.f32 %v1164, %v1233
        %v1266 = vadd.f32 %v1165, %v1234
        %v1267 = vadd.f32 %v1166, %v1235
        %v1268 = vadd.f32 %v1167, %v1236
        %v1269 = vadd.f32 %v1168, %v1237
        %v1270 = vadd.f32 %v1169, %v1238
        %v1271 = vadd.f32 %v1170, %v1239
        %v1272 = vadd.f32 %v1171, %v1240
        %v1273 = vadd.f32 %v1172, %v1241
        %v1274 = vadd.f32 %v1173, %v1242
        %v1275 = vadd.f32 %v1174, %v1243
        %s1276 = scalar_lea.vmem [#allocation2], 64
        %v1277 = vld [vmem:[%s1276 + $0x7] sm:$0xff]
        %v1278 = vld [vmem:[%s1276 + $0xf] sm:$0xff]
        %v1279 = vld [vmem:[%s1276 + $0x27] sm:$0xff]
        %v1280 = vld [vmem:[%s1276 + $0x2f] sm:$0xff]
        %v1281 = vld [vmem:[%s1276 + $0x47] sm:$0xff]
        %v1282 = vld [vmem:[%s1276 + $0x4f] sm:$0xff]
        %v1283 = vld [vmem:[%s1276 + $0x67] sm:$0xff]
        %v1284 = vld [vmem:[%s1276 + $0x6f] sm:$0xff]
        %v1285 = vld [vmem:[%s1276 + $0x87] sm:$0xff]
        %v1286 = vld [vmem:[%s1276 + $0x8f] sm:$0xff]
        %v1287 = vld [vmem:[%s1276 + $0xa7] sm:$0xff]
        %v1288 = vld [vmem:[%s1276 + $0xaf] sm:$0xff]
        %v1289 = vld [vmem:[%s1276 + $0xc7] sm:$0xff]
        %v1290 = vld [vmem:[%s1276 + $0xcf] sm:$0xff]
        %v1291 = vld [vmem:[%s1276 + $0xe7] sm:$0xff]
        %v1292 = vld [vmem:[%s1276 + $0xef] sm:$0xff]
        %v1293 = vld [vmem:[%s1276 + $0x107] sm:$0xff]
        %v1294 = vld [vmem:[%s1276 + $0x10f] sm:$0xff]
        %v1295 = vld [vmem:[%s1276 + $0x127] sm:$0xff]
        %v1296 = vld [vmem:[%s1276 + $0x12f] sm:$0xff]
        %v1297 = vld [vmem:[%s1276 + $0x147] sm:$0xff]
        %v1298 = vld [vmem:[%s1276 + $0x14f] sm:$0xff]
        %v1299 = vld [vmem:[%s1276 + $0x167] sm:$0xff]
        %v1300 = vld [vmem:[%s1276 + $0x16f] sm:$0xff]
        %v1301 = vld [vmem:[%s1276 + $0x187] sm:$0xff]
        %v1302 = vld [vmem:[%s1276 + $0x18f] sm:$0xff]
        %v1303 = vld [vmem:[%s1276 + $0x1a7] sm:$0xff]
        %v1304 = vld [vmem:[%s1276 + $0x1af] sm:$0xff]
        %v1305 = vld [vmem:[%s1276 + $0x1c7] sm:$0xff]
        %v1306 = vld [vmem:[%s1276 + $0x1cf] sm:$0xff]
        %v1307 = vld [vmem:[%s1276 + $0x1e7] sm:$0xff]
        %v1308 = vld [vmem:[%s1276 + $0x1ef] sm:$0xff]
        %v1309 = vld [vmem:[%s3 + $0x6] sm:$0x1]
        %v1310 = vlaneseq
        %v1311 = vshrl.u32 %v1310, 7
        %v1312 = vsub.s32 0, %v1311
        %v1313 = vrot.slane %v1309, %v1312
        %v1314 = vmul.f32 %v1277, %v1313
        %v1315 = vmul.f32 %v1278, %v1313
        %v1316 = vmul.f32 %v1279, %v1313
        %v1317 = vmul.f32 %v1280, %v1313
        %v1318 = vmul.f32 %v1281, %v1313
        %v1319 = vmul.f32 %v1282, %v1313
        %v1320 = vmul.f32 %v1283, %v1313
        %v1321 = vmul.f32 %v1284, %v1313
        %v1322 = vmul.f32 %v1285, %v1313
        %v1323 = vmul.f32 %v1286, %v1313
        %v1324 = vmul.f32 %v1287, %v1313
        %v1325 = vmul.f32 %v1288, %v1313
        %v1326 = vmul.f32 %v1289, %v1313
        %v1327 = vmul.f32 %v1290, %v1313
        %v1328 = vmul.f32 %v1291, %v1313
        %v1329 = vmul.f32 %v1292, %v1313
        %v1330 = vmul.f32 %v1293, %v1313
        %v1331 = vmul.f32 %v1294, %v1313
        %v1332 = vmul.f32 %v1295, %v1313
        %v1333 = vmul.f32 %v1296, %v1313
        %v1334 = vmul.f32 %v1297, %v1313
        %v1335 = vmul.f32 %v1298, %v1313
        %v1336 = vmul.f32 %v1299, %v1313
        %v1337 = vmul.f32 %v1300, %v1313
        %v1338 = vmul.f32 %v1301, %v1313
        %v1339 = vmul.f32 %v1302, %v1313
        %v1340 = vmul.f32 %v1303, %v1313
        %v1341 = vmul.f32 %v1304, %v1313
        %v1342 = vmul.f32 %v1305, %v1313
        %v1343 = vmul.f32 %v1306, %v1313
        %v1344 = vmul.f32 %v1307, %v1313
        %v1345 = vmul.f32 %v1308, %v1313
        %v1346 = vadd.f32 %v1244, %v1314
        %v1347 = vadd.f32 %v1245, %v1315
        %v1348 = vadd.f32 %v1246, %v1316
        %v1349 = vadd.f32 %v1247, %v1317
        %v1350 = vadd.f32 %v1248, %v1318
        %v1351 = vadd.f32 %v1249, %v1319
        %v1352 = vadd.f32 %v1250, %v1320
        %v1353 = vadd.f32 %v1251, %v1321
        %v1354 = vadd.f32 %v1252, %v1322
        %v1355 = vadd.f32 %v1253, %v1323
        %v1356 = vadd.f32 %v1254, %v1324
        %v1357 = vadd.f32 %v1255, %v1325
        %v1358 = vadd.f32 %v1256, %v1326
        %v1359 = vadd.f32 %v1257, %v1327
        %v1360 = vadd.f32 %v1258, %v1328
        %v1361 = vadd.f32 %v1259, %v1329
        %v1362 = vadd.f32 %v1260, %v1330
        %v1363 = vadd.f32 %v1261, %v1331
        %v1364 = vadd.f32 %v1262, %v1332
        %v1365 = vadd.f32 %v1263, %v1333
        %v1366 = vadd.f32 %v1264, %v1334
        %v1367 = vadd.f32 %v1265, %v1335
        %v1368 = vadd.f32 %v1266, %v1336
        %v1369 = vadd.f32 %v1267, %v1337
        %v1370 = vadd.f32 %v1268, %v1338
        %v1371 = vadd.f32 %v1269, %v1339
        %v1372 = vadd.f32 %v1270, %v1340
        %v1373 = vadd.f32 %v1271, %v1341
        %v1374 = vadd.f32 %v1272, %v1342
        %v1375 = vadd.f32 %v1273, %v1343
        %v1376 = vadd.f32 %v1274, %v1344
        %v1377 = vadd.f32 %v1275, %v1345
        %v1378 = vld [vmem:[%s1276 + $0x8] sm:$0xff]
        %v1379 = vld [vmem:[%s1276 + $0x10] sm:$0xff]
        %v1380 = vld [vmem:[%s1276 + $0x28] sm:$0xff]
        %v1381 = vld [vmem:[%s1276 + $0x30] sm:$0xff]
        %v1382 = vld [vmem:[%s1276 + $0x48] sm:$0xff]
        %v1383 = vld [vmem:[%s1276 + $0x50] sm:$0xff]
        %v1384 = vld [vmem:[%s1276 + $0x68] sm:$0xff]
        %v1385 = vld [vmem:[%s1276 + $0x70] sm:$0xff]
        %v1386 = vld [vmem:[%s1276 + $0x88] sm:$0xff]
        %v1387 = vld [vmem:[%s1276 + $0x90] sm:$0xff]
        %v1388 = vld [vmem:[%s1276 + $0xa8] sm:$0xff]
        %v1389 = vld [vmem:[%s1276 + $0xb0] sm:$0xff]
        %v1390 = vld [vmem:[%s1276 + $0xc8] sm:$0xff]
        %v1391 = vld [vmem:[%s1276 + $0xd0] sm:$0xff]
        %v1392 = vld [vmem:[%s1276 + $0xe8] sm:$0xff]
        %v1393 = vld [vmem:[%s1276 + $0xf0] sm:$0xff]
        %v1394 = vld [vmem:[%s1276 + $0x108] sm:$0xff]
        %v1395 = vld [vmem:[%s1276 + $0x110] sm:$0xff]
        %v1396 = vld [vmem:[%s1276 + $0x128] sm:$0xff]
        %v1397 = vld [vmem:[%s1276 + $0x130] sm:$0xff]
        %v1398 = vld [vmem:[%s1276 + $0x148] sm:$0xff]
        %v1399 = vld [vmem:[%s1276 + $0x150] sm:$0xff]
        %v1400 = vld [vmem:[%s1276 + $0x168] sm:$0xff]
        %v1401 = vld [vmem:[%s1276 + $0x170] sm:$0xff]
        %v1402 = vld [vmem:[%s1276 + $0x188] sm:$0xff]
        %v1403 = vld [vmem:[%s1276 + $0x190] sm:$0xff]
        %v1404 = vld [vmem:[%s1276 + $0x1a8] sm:$0xff]
        %v1405 = vld [vmem:[%s1276 + $0x1b0] sm:$0xff]
        %v1406 = vld [vmem:[%s1276 + $0x1c8] sm:$0xff]
        %v1407 = vld [vmem:[%s1276 + $0x1d0] sm:$0xff]
        %v1408 = vld [vmem:[%s1276 + $0x1e8] sm:$0xff]
        %v1409 = vld [vmem:[%s1276 + $0x1f0] sm:$0xff]
        %v1410 = vld [vmem:[%s3 + $0x7] sm:$0x1]
        %v1411 = vlaneseq
        %v1412 = vshrl.u32 %v1411, 7
        %v1413 = vsub.s32 0, %v1412
        %v1414 = vrot.slane %v1410, %v1413
        %v1415 = vmul.f32 %v1378, %v1414
        %v1416 = vmul.f32 %v1379, %v1414
        %v1417 = vmul.f32 %v1380, %v1414
        %v1418 = vmul.f32 %v1381, %v1414
        %v1419 = vmul.f32 %v1382, %v1414
        %v1420 = vmul.f32 %v1383, %v1414
        %v1421 = vmul.f32 %v1384, %v1414
        %v1422 = vmul.f32 %v1385, %v1414
        %v1423 = vmul.f32 %v1386, %v1414
        %v1424 = vmul.f32 %v1387, %v1414
        %v1425 = vmul.f32 %v1388, %v1414
        %v1426 = vmul.f32 %v1389, %v1414
        %v1427 = vmul.f32 %v1390, %v1414
        %v1428 = vmul.f32 %v1391, %v1414
        %v1429 = vmul.f32 %v1392, %v1414
        %v1430 = vmul.f32 %v1393, %v1414
        %v1431 = vmul.f32 %v1394, %v1414
        %v1432 = vmul.f32 %v1395, %v1414
        %v1433 = vmul.f32 %v1396, %v1414
        %v1434 = vmul.f32 %v1397, %v1414
        %v1435 = vmul.f32 %v1398, %v1414
        %v1436 = vmul.f32 %v1399, %v1414
        %v1437 = vmul.f32 %v1400, %v1414
        %v1438 = vmul.f32 %v1401, %v1414
        %v1439 = vmul.f32 %v1402, %v1414
        %v1440 = vmul.f32 %v1403, %v1414
        %v1441 = vmul.f32 %v1404, %v1414
        %v1442 = vmul.f32 %v1405, %v1414
        %v1443 = vmul.f32 %v1406, %v1414
        %v1444 = vmul.f32 %v1407, %v1414
        %v1445 = vmul.f32 %v1408, %v1414
        %v1446 = vmul.f32 %v1409, %v1414
        %v1447 = vadd.f32 %v1346, %v1415
        %v1448 = vadd.f32 %v1347, %v1416
        %v1449 = vadd.f32 %v1348, %v1417
        %v1450 = vadd.f32 %v1349, %v1418
        %v1451 = vadd.f32 %v1350, %v1419
        %v1452 = vadd.f32 %v1351, %v1420
        %v1453 = vadd.f32 %v1352, %v1421
        %v1454 = vadd.f32 %v1353, %v1422
        %v1455 = vadd.f32 %v1354, %v1423
        %v1456 = vadd.f32 %v1355, %v1424
        %v1457 = vadd.f32 %v1356, %v1425
        %v1458 = vadd.f32 %v1357, %v1426
        %v1459 = vadd.f32 %v1358, %v1427
        %v1460 = vadd.f32 %v1359, %v1428
        %v1461 = vadd.f32 %v1360, %v1429
        %v1462 = vadd.f32 %v1361, %v1430
        %v1463 = vadd.f32 %v1362, %v1431
        %v1464 = vadd.f32 %v1363, %v1432
        %v1465 = vadd.f32 %v1364, %v1433
        %v1466 = vadd.f32 %v1365, %v1434
        %v1467 = vadd.f32 %v1366, %v1435
        %v1468 = vadd.f32 %v1367, %v1436
        %v1469 = vadd.f32 %v1368, %v1437
        %v1470 = vadd.f32 %v1369, %v1438
        %v1471 = vadd.f32 %v1370, %v1439
        %v1472 = vadd.f32 %v1371, %v1440
        %v1473 = vadd.f32 %v1372, %v1441
        %v1474 = vadd.f32 %v1373, %v1442
        %v1475 = vadd.f32 %v1374, %v1443
        %v1476 = vadd.f32 %v1375, %v1444
        %v1477 = vadd.f32 %v1376, %v1445
        %v1478 = vadd.f32 %v1377, %v1446
        %v1479 = vld [vmem:[%s1276 + $0x9] sm:$0xff]
        %v1480 = vld [vmem:[%s1276 + $0x11] sm:$0xff]
        %v1481 = vld [vmem:[%s1276 + $0x29] sm:$0xff]
        %v1482 = vld [vmem:[%s1276 + $0x31] sm:$0xff]
        %v1483 = vld [vmem:[%s1276 + $0x49] sm:$0xff]
        %v1484 = vld [vmem:[%s1276 + $0x51] sm:$0xff]
        %v1485 = vld [vmem:[%s1276 + $0x69] sm:$0xff]
        %v1486 = vld [vmem:[%s1276 + $0x71] sm:$0xff]
        %v1487 = vld [vmem:[%s1276 + $0x89] sm:$0xff]
        %v1488 = vld [vmem:[%s1276 + $0x91] sm:$0xff]
        %v1489 = vld [vmem:[%s1276 + $0xa9] sm:$0xff]
        %v1490 = vld [vmem:[%s1276 + $0xb1] sm:$0xff]
        %v1491 = vld [vmem:[%s1276 + $0xc9] sm:$0xff]
        %v1492 = vld [vmem:[%s1276 + $0xd1] sm:$0xff]
        %v1493 = vld [vmem:[%s1276 + $0xe9] sm:$0xff]
        %v1494 = vld [vmem:[%s1276 + $0xf1] sm:$0xff]
        %v1495 = vld [vmem:[%s1276 + $0x109] sm:$0xff]
        %v1496 = vld [vmem:[%s1276 + $0x111] sm:$0xff]
        %v1497 = vld [vmem:[%s1276 + $0x129] sm:$0xff]
        %v1498 = vld [vmem:[%s1276 + $0x131] sm:$0xff]
        %v1499 = vld [vmem:[%s1276 + $0x149] sm:$0xff]
        %v1500 = vld [vmem:[%s1276 + $0x151] sm:$0xff]
        %v1501 = vld [vmem:[%s1276 + $0x169] sm:$0xff]
        %v1502 = vld [vmem:[%s1276 + $0x171] sm:$0xff]
        %v1503 = vld [vmem:[%s1276 + $0x189] sm:$0xff]
        %v1504 = vld [vmem:[%s1276 + $0x191] sm:$0xff]
        %v1505 = vld [vmem:[%s1276 + $0x1a9] sm:$0xff]
        %v1506 = vld [vmem:[%s1276 + $0x1b1] sm:$0xff]
        %v1507 = vld [vmem:[%s1276 + $0x1c9] sm:$0xff]
        %v1508 = vld [vmem:[%s1276 + $0x1d1] sm:$0xff]
        %v1509 = vld [vmem:[%s1276 + $0x1e9] sm:$0xff]
        %v1510 = vld [vmem:[%s1276 + $0x1f1] sm:$0xff]
        %v1511 = vld [vmem:[%s3 + $0x8] sm:$0x1]
        %v1512 = vlaneseq
        %v1513 = vshrl.u32 %v1512, 7
        %v1514 = vsub.s32 0, %v1513
        %v1515 = vrot.slane %v1511, %v1514
        %v1516 = vmul.f32 %v1479, %v1515
        %v1517 = vmul.f32 %v1480, %v1515
        %v1518 = vmul.f32 %v1481, %v1515
        %v1519 = vmul.f32 %v1482, %v1515
        %v1520 = vmul.f32 %v1483, %v1515
        %v1521 = vmul.f32 %v1484, %v1515
        %v1522 = vmul.f32 %v1485, %v1515
        %v1523 = vmul.f32 %v1486, %v1515
        %v1524 = vmul.f32 %v1487, %v1515
        %v1525 = vmul.f32 %v1488, %v1515
        %v1526 = vmul.f32 %v1489, %v1515
        %v1527 = vmul.f32 %v1490, %v1515
        %v1528 = vmul.f32 %v1491, %v1515
        %v1529 = vmul.f32 %v1492, %v1515
        %v1530 = vmul.f32 %v1493, %v1515
        %v1531 = vmul.f32 %v1494, %v1515
        %v1532 = vmul.f32 %v1495, %v1515
        %v1533 = vmul.f32 %v1496, %v1515
        %v1534 = vmul.f32 %v1497, %v1515
        %v1535 = vmul.f32 %v1498, %v1515
        %v1536 = vmul.f32 %v1499, %v1515
        %v1537 = vmul.f32 %v1500, %v1515
        %v1538 = vmul.f32 %v1501, %v1515
        %v1539 = vmul.f32 %v1502, %v1515
        %v1540 = vmul.f32 %v1503, %v1515
        %v1541 = vmul.f32 %v1504, %v1515
        %v1542 = vmul.f32 %v1505, %v1515
        %v1543 = vmul.f32 %v1506, %v1515
        %v1544 = vmul.f32 %v1507, %v1515
        %v1545 = vmul.f32 %v1508, %v1515
        %v1546 = vmul.f32 %v1509, %v1515
        %v1547 = vmul.f32 %v1510, %v1515
        %v1548 = vadd.f32 %v1447, %v1516
        %v1549 = vadd.f32 %v1448, %v1517
        %v1550 = vadd.f32 %v1449, %v1518
        %v1551 = vadd.f32 %v1450, %v1519
        %v1552 = vadd.f32 %v1451, %v1520
        %v1553 = vadd.f32 %v1452, %v1521
        %v1554 = vadd.f32 %v1453, %v1522
        %v1555 = vadd.f32 %v1454, %v1523
        %v1556 = vadd.f32 %v1455, %v1524
        %v1557 = vadd.f32 %v1456, %v1525
        %v1558 = vadd.f32 %v1457, %v1526
        %v1559 = vadd.f32 %v1458, %v1527
        %v1560 = vadd.f32 %v1459, %v1528
        %v1561 = vadd.f32 %v1460, %v1529
        %v1562 = vadd.f32 %v1461, %v1530
        %v1563 = vadd.f32 %v1462, %v1531
        %v1564 = vadd.f32 %v1463, %v1532
        %v1565 = vadd.f32 %v1464, %v1533
        %v1566 = vadd.f32 %v1465, %v1534
        %v1567 = vadd.f32 %v1466, %v1535
        %v1568 = vadd.f32 %v1467, %v1536
        %v1569 = vadd.f32 %v1468, %v1537
        %v1570 = vadd.f32 %v1469, %v1538
        %v1571 = vadd.f32 %v1470, %v1539
        %v1572 = vadd.f32 %v1471, %v1540
        %v1573 = vadd.f32 %v1472, %v1541
        %v1574 = vadd.f32 %v1473, %v1542
        %v1575 = vadd.f32 %v1474, %v1543
        %v1576 = vadd.f32 %v1475, %v1544
        %v1577 = vadd.f32 %v1476, %v1545
        %v1578 = vadd.f32 %v1477, %v1546
        %v1579 = vadd.f32 %v1478, %v1547
        %v1580 = vmul.f32 %v1548, 0.70710677
        %v1581 = vmul.f32 %v1549, 0.70710677
        %v1582 = vmul.f32 %v1550, 0.70710677
        %v1583 = vmul.f32 %v1551, 0.70710677
        %v1584 = vmul.f32 %v1552, 0.70710677
        %v1585 = vmul.f32 %v1553, 0.70710677
        %v1586 = vmul.f32 %v1554, 0.70710677
        %v1587 = vmul.f32 %v1555, 0.70710677
        %v1588 = vmul.f32 %v1556, 0.70710677
        %v1589 = vmul.f32 %v1557, 0.70710677
        %v1590 = vmul.f32 %v1558, 0.70710677
        %v1591 = vmul.f32 %v1559, 0.70710677
        %v1592 = vmul.f32 %v1560, 0.70710677
        %v1593 = vmul.f32 %v1561, 0.70710677
        %v1594 = vmul.f32 %v1562, 0.70710677
        %v1595 = vmul.f32 %v1563, 0.70710677
        %v1596 = vmul.f32 %v1564, 0.70710677
        %v1597 = vmul.f32 %v1565, 0.70710677
        %v1598 = vmul.f32 %v1566, 0.70710677
        %v1599 = vmul.f32 %v1567, 0.70710677
        %v1600 = vmul.f32 %v1568, 0.70710677
        %v1601 = vmul.f32 %v1569, 0.70710677
        %v1602 = vmul.f32 %v1570, 0.70710677
        %v1603 = vmul.f32 %v1571, 0.70710677
        %v1604 = vmul.f32 %v1572, 0.70710677
        %v1605 = vmul.f32 %v1573, 0.70710677
        %v1606 = vmul.f32 %v1574, 0.70710677
        %v1607 = vmul.f32 %v1575, 0.70710677
        %v1608 = vmul.f32 %v1576, 0.70710677
        %v1609 = vmul.f32 %v1577, 0.70710677
        %v1610 = vmul.f32 %v1578, 0.70710677
        %v1611 = vmul.f32 %v1579, 0.70710677
        %v1612 = vand.u32 2147483647, %v1580
        %v1613 = vand.u32 2147483647, %v1581
        %v1614 = vand.u32 2147483647, %v1582
        %v1615 = vand.u32 2147483647, %v1583
        %v1616 = vand.u32 2147483647, %v1584
        %v1617 = vand.u32 2147483647, %v1585
        %v1618 = vand.u32 2147483647, %v1586
        %v1619 = vand.u32 2147483647, %v1587
        %v1620 = vand.u32 2147483647, %v1588
        %v1621 = vand.u32 2147483647, %v1589
        %v1622 = vand.u32 2147483647, %v1590
        %v1623 = vand.u32 2147483647, %v1591
        %v1624 = vand.u32 2147483647, %v1592
        %v1625 = vand.u32 2147483647, %v1593
        %v1626 = vand.u32 2147483647, %v1594
        %v1627 = vand.u32 2147483647, %v1595
        %v1628 = vand.u32 2147483647, %v1596
        %v1629 = vand.u32 2147483647, %v1597
        %v1630 = vand.u32 2147483647, %v1598
        %v1631 = vand.u32 2147483647, %v1599
        %v1632 = vand.u32 2147483647, %v1600
        %v1633 = vand.u32 2147483647, %v1601
        %v1634 = vand.u32 2147483647, %v1602
        %v1635 = vand.u32 2147483647, %v1603
        %v1636 = vand.u32 2147483647, %v1604
        %v1637 = vand.u32 2147483647, %v1605
        %v1638 = vand.u32 2147483647, %v1606
        %v1639 = vand.u32 2147483647, %v1607
        %v1640 = vand.u32 2147483647, %v1608
        %v1641 = vand.u32 2147483647, %v1609
        %v1642 = vand.u32 2147483647, %v1610
        %v1643 = vand.u32 2147483647, %v1611
        %v1644 = vmul.f32 %v1612, 0.3275911
        %v1645 = vmul.f32 %v1613, 0.3275911
        %v1646 = vmul.f32 %v1614, 0.3275911
        %v1647 = vmul.f32 %v1615, 0.3275911
        %v1648 = vmul.f32 %v1616, 0.3275911
        %v1649 = vmul.f32 %v1617, 0.3275911
        %v1650 = vmul.f32 %v1618, 0.3275911
        %v1651 = vmul.f32 %v1619, 0.3275911
        %v1652 = vmul.f32 %v1620, 0.3275911
        %v1653 = vmul.f32 %v1621, 0.3275911
        %v1654 = vmul.f32 %v1622, 0.3275911
        %v1655 = vmul.f32 %v1623, 0.3275911
        %v1656 = vmul.f32 %v1624, 0.3275911
        %v1657 = vmul.f32 %v1625, 0.3275911
        %v1658 = vmul.f32 %v1626, 0.3275911
        %v1659 = vmul.f32 %v1627, 0.3275911
        %v1660 = vmul.f32 %v1628, 0.3275911
        %v1661 = vmul.f32 %v1629, 0.3275911
        %v1662 = vmul.f32 %v1630, 0.3275911
        %v1663 = vmul.f32 %v1631, 0.3275911
        %v1664 = vmul.f32 %v1632, 0.3275911
        %v1665 = vmul.f32 %v1633, 0.3275911
        %v1666 = vmul.f32 %v1634, 0.3275911
        %v1667 = vmul.f32 %v1635, 0.3275911
        %v1668 = vmul.f32 %v1636, 0.3275911
        %v1669 = vmul.f32 %v1637, 0.3275911
        %v1670 = vmul.f32 %v1638, 0.3275911
        %v1671 = vmul.f32 %v1639, 0.3275911
        %v1672 = vmul.f32 %v1640, 0.3275911
        %v1673 = vmul.f32 %v1641, 0.3275911
        %v1674 = vmul.f32 %v1642, 0.3275911
        %v1675 = vmul.f32 %v1643, 0.3275911
        %v1676 = vadd.f32 %v1644, 1.0
        %v1677 = vadd.f32 %v1645, 1.0
        %v1678 = vadd.f32 %v1646, 1.0
        %v1679 = vadd.f32 %v1647, 1.0
        %v1680 = vadd.f32 %v1648, 1.0
        %v1681 = vadd.f32 %v1649, 1.0
        %v1682 = vadd.f32 %v1650, 1.0
        %v1683 = vadd.f32 %v1651, 1.0
        %v1684 = vadd.f32 %v1652, 1.0
        %v1685 = vadd.f32 %v1653, 1.0
        %v1686 = vadd.f32 %v1654, 1.0
        %v1687 = vadd.f32 %v1655, 1.0
        %v1688 = vadd.f32 %v1656, 1.0
        %v1689 = vadd.f32 %v1657, 1.0
        %v1690 = vadd.f32 %v1658, 1.0
        %v1691 = vadd.f32 %v1659, 1.0
        %v1692 = vadd.f32 %v1660, 1.0
        %v1693 = vadd.f32 %v1661, 1.0
        %v1694 = vadd.f32 %v1662, 1.0
        %v1695 = vadd.f32 %v1663, 1.0
        %v1696 = vadd.f32 %v1664, 1.0
        %v1697 = vadd.f32 %v1665, 1.0
        %v1698 = vadd.f32 %v1666, 1.0
        %v1699 = vadd.f32 %v1667, 1.0
        %v1700 = vadd.f32 %v1668, 1.0
        %v1701 = vadd.f32 %v1669, 1.0
        %v1702 = vadd.f32 %v1670, 1.0
        %v1703 = vadd.f32 %v1671, 1.0
        %v1704 = vadd.f32 %v1672, 1.0
        %v1705 = vadd.f32 %v1673, 1.0
        %v1706 = vadd.f32 %v1674, 1.0
        %v1707 = vadd.f32 %v1675, 1.0
        %v1708 = vrcp.pop %v1676
        %v1709 = vmul.f32 1.0, %v1708
        %v1710 = vrcp.pop %v1677
        %v1711 = vmul.f32 1.0, %v1710
        %v1712 = vrcp.pop %v1678
        %v1713 = vmul.f32 1.0, %v1712
        %v1714 = vrcp.pop %v1679
        %v1715 = vmul.f32 1.0, %v1714
        %v1716 = vrcp.pop %v1680
        %v1717 = vmul.f32 1.0, %v1716
        %v1718 = vrcp.pop %v1681
        %v1719 = vmul.f32 1.0, %v1718
        %v1720 = vrcp.pop %v1682
        %v1721 = vmul.f32 1.0, %v1720
        %v1722 = vrcp.pop %v1683
        %v1723 = vmul.f32 1.0, %v1722
        %v1724 = vrcp.pop %v1684
        %v1725 = vmul.f32 1.0, %v1724
        %v1726 = vrcp.pop %v1685
        %v1727 = vmul.f32 1.0, %v1726
        %v1728 = vrcp.pop %v1686
        %v1729 = vmul.f32 1.0, %v1728
        %v1730 = vrcp.pop %v1687
        %v1731 = vmul.f32 1.0, %v1730
        %v1732 = vrcp.pop %v1688
        %v1733 = vmul.f32 1.0, %v1732
        %v1734 = vrcp.pop %v1689
        %v1735 = vmul.f32 1.0, %v1734
        %v1736 = vrcp.pop %v1690
        %v1737 = vmul.f32 1.0, %v1736
        %v1738 = vrcp.pop %v1691
        %v1739 = vmul.f32 1.0, %v1738
        %v1740 = vrcp.pop %v1692
        %v1741 = vmul.f32 1.0, %v1740
        %v1742 = vrcp.pop %v1693
        %v1743 = vmul.f32 1.0, %v1742
        %v1744 = vrcp.pop %v1694
        %v1745 = vmul.f32 1.0, %v1744
        %v1746 = vrcp.pop %v1695
        %v1747 = vmul.f32 1.0, %v1746
        %v1748 = vrcp.pop %v1696
        %v1749 = vmul.f32 1.0, %v1748
        %v1750 = vrcp.pop %v1697
        %v1751 = vmul.f32 1.0, %v1750
        %v1752 = vrcp.pop %v1698
        %v1753 = vmul.f32 1.0, %v1752
        %v1754 = vrcp.pop %v1699
        %v1755 = vmul.f32 1.0, %v1754
        %v1756 = vrcp.pop %v1700
        %v1757 = vmul.f32 1.0, %v1756
        %v1758 = vrcp.pop %v1701
        %v1759 = vmul.f32 1.0, %v1758
        %v1760 = vrcp.pop %v1702
        %v1761 = vmul.f32 1.0, %v1760
        %v1762 = vrcp.pop %v1703
        %v1763 = vmul.f32 1.0, %v1762
        %v1764 = vrcp.pop %v1704
        %v1765 = vmul.f32 1.0, %v1764
        %v1766 = vrcp.pop %v1705
        %v1767 = vmul.f32 1.0, %v1766
        %v1768 = vrcp.pop %v1706
        %v1769 = vmul.f32 1.0, %v1768
        %v1770 = vrcp.pop %v1707
        %v1771 = vmul.f32 1.0, %v1770
        %v1772 = vmul.f32 %v1709, 1.0614054
        %v1773 = vmul.f32 %v1711, 1.0614054
        %v1774 = vmul.f32 %v1713, 1.0614054
        %v1775 = vmul.f32 %v1715, 1.0614054
        %v1776 = vmul.f32 %v1717, 1.0614054
        %v1777 = vmul.f32 %v1719, 1.0614054
        %v1778 = vmul.f32 %v1721, 1.0614054
        %v1779 = vmul.f32 %v1723, 1.0614054
        %v1780 = vmul.f32 %v1725, 1.0614054
        %v1781 = vmul.f32 %v1727, 1.0614054
        %v1782 = vmul.f32 %v1729, 1.0614054
        %v1783 = vmul.f32 %v1731, 1.0614054
        %v1784 = vmul.f32 %v1733, 1.0614054
        %v1785 = vmul.f32 %v1735, 1.0614054
        %v1786 = vmul.f32 %v1737, 1.0614054
        %v1787 = vmul.f32 %v1739, 1.0614054
        %v1788 = vmul.f32 %v1741, 1.0614054
        %v1789 = vmul.f32 %v1743, 1.0614054
        %v1790 = vmul.f32 %v1745, 1.0614054
        %v1791 = vmul.f32 %v1747, 1.0614054
        %v1792 = vmul.f32 %v1749, 1.0614054
        %v1793 = vmul.f32 %v1751, 1.0614054
        %v1794 = vmul.f32 %v1753, 1.0614054
        %v1795 = vmul.f32 %v1755, 1.0614054
        %v1796 = vmul.f32 %v1757, 1.0614054
        %v1797 = vmul.f32 %v1759, 1.0614054
        %v1798 = vmul.f32 %v1761, 1.0614054
        %v1799 = vmul.f32 %v1763, 1.0614054
        %v1800 = vmul.f32 %v1765, 1.0614054
        %v1801 = vmul.f32 %v1767, 1.0614054
        %v1802 = vmul.f32 %v1769, 1.0614054
        %v1803 = vmul.f32 %v1771, 1.0614054
        %v1804 = vadd.f32 %v1772, -1.4531521
        %v1805 = vadd.f32 %v1773, -1.4531521
        %v1806 = vadd.f32 %v1774, -1.4531521
        %v1807 = vadd.f32 %v1775, -1.4531521
        %v1808 = vadd.f32 %v1776, -1.4531521
        %v1809 = vadd.f32 %v1777, -1.4531521
        %v1810 = vadd.f32 %v1778, -1.4531521
        %v1811 = vadd.f32 %v1779, -1.4531521
        %v1812 = vadd.f32 %v1780, -1.4531521
        %v1813 = vadd.f32 %v1781, -1.4531521
        %v1814 = vadd.f32 %v1782, -1.4531521
        %v1815 = vadd.f32 %v1783, -1.4531521
        %v1816 = vadd.f32 %v1784, -1.4531521
        %v1817 = vadd.f32 %v1785, -1.4531521
        %v1818 = vadd.f32 %v1786, -1.4531521
        %v1819 = vadd.f32 %v1787, -1.4531521
        %v1820 = vadd.f32 %v1788, -1.4531521
        %v1821 = vadd.f32 %v1789, -1.4531521
        %v1822 = vadd.f32 %v1790, -1.4531521
        %v1823 = vadd.f32 %v1791, -1.4531521
        %v1824 = vadd.f32 %v1792, -1.4531521
        %v1825 = vadd.f32 %v1793, -1.4531521
        %v1826 = vadd.f32 %v1794, -1.4531521
        %v1827 = vadd.f32 %v1795, -1.4531521
        %v1828 = vadd.f32 %v1796, -1.4531521
        %v1829 = vadd.f32 %v1797, -1.4531521
        %v1830 = vadd.f32 %v1798, -1.4531521
        %v1831 = vadd.f32 %v1799, -1.4531521
        %v1832 = vadd.f32 %v1800, -1.4531521
        %v1833 = vadd.f32 %v1801, -1.4531521
        %v1834 = vadd.f32 %v1802, -1.4531521
        %v1835 = vadd.f32 %v1803, -1.4531521
        %v1836 = vmul.f32 %v1709, %v1804
        %v1837 = vmul.f32 %v1711, %v1805
        %v1838 = vmul.f32 %v1713, %v1806
        %v1839 = vmul.f32 %v1715, %v1807
        %v1840 = vmul.f32 %v1717, %v1808
        %v1841 = vmul.f32 %v1719, %v1809
        %v1842 = vmul.f32 %v1721, %v1810
        %v1843 = vmul.f32 %v1723, %v1811
        %v1844 = vmul.f32 %v1725, %v1812
        %v1845 = vmul.f32 %v1727, %v1813
        %v1846 = vmul.f32 %v1729, %v1814
        %v1847 = vmul.f32 %v1731, %v1815
        %v1848 = vmul.f32 %v1733, %v1816
        %v1849 = vmul.f32 %v1735, %v1817
        %v1850 = vmul.f32 %v1737, %v1818
        %v1851 = vmul.f32 %v1739, %v1819
        %v1852 = vmul.f32 %v1741, %v1820
        %v1853 = vmul.f32 %v1743, %v1821
        %v1854 = vmul.f32 %v1745, %v1822
        %v1855 = vmul.f32 %v1747, %v1823
        %v1856 = vmul.f32 %v1749, %v1824
        %v1857 = vmul.f32 %v1751, %v1825
        %v1858 = vmul.f32 %v1753, %v1826
        %v1859 = vmul.f32 %v1755, %v1827
        %v1860 = vmul.f32 %v1757, %v1828
        %v1861 = vmul.f32 %v1759, %v1829
        %v1862 = vmul.f32 %v1761, %v1830
        %v1863 = vmul.f32 %v1763, %v1831
        %v1864 = vmul.f32 %v1765, %v1832
        %v1865 = vmul.f32 %v1767, %v1833
        %v1866 = vmul.f32 %v1769, %v1834
        %v1867 = vmul.f32 %v1771, %v1835
        %v1868 = vadd.f32 %v1836, 1.4214138
        %v1869 = vadd.f32 %v1837, 1.4214138
        %v1870 = vadd.f32 %v1838, 1.4214138
        %v1871 = vadd.f32 %v1839, 1.4214138
        %v1872 = vadd.f32 %v1840, 1.4214138
        %v1873 = vadd.f32 %v1841, 1.4214138
        %v1874 = vadd.f32 %v1842, 1.4214138
        %v1875 = vadd.f32 %v1843, 1.4214138
        %v1876 = vadd.f32 %v1844, 1.4214138
        %v1877 = vadd.f32 %v1845, 1.4214138
        %v1878 = vadd.f32 %v1846, 1.4214138
        %v1879 = vadd.f32 %v1847, 1.4214138
        %v1880 = vadd.f32 %v1848, 1.4214138
        %v1881 = vadd.f32 %v1849, 1.4214138
        %v1882 = vadd.f32 %v1850, 1.4214138
        %v1883 = vadd.f32 %v1851, 1.4214138
        %v1884 = vadd.f32 %v1852, 1.4214138
        %v1885 = vadd.f32 %v1853, 1.4214138
        %v1886 = vadd.f32 %v1854, 1.4214138
        %v1887 = vadd.f32 %v1855, 1.4214138
        %v1888 = vadd.f32 %v1856, 1.4214138
        %v1889 = vadd.f32 %v1857, 1.4214138
        %v1890 = vadd.f32 %v1858, 1.4214138
        %v1891 = vadd.f32 %v1859, 1.4214138
        %v1892 = vadd.f32 %v1860, 1.4214138
        %v1893 = vadd.f32 %v1861, 1.4214138
        %v1894 = vadd.f32 %v1862, 1.4214138
        %v1895 = vadd.f32 %v1863, 1.4214138
        %v1896 = vadd.f32 %v1864, 1.4214138
        %v1897 = vadd.f32 %v1865, 1.4214138
        %v1898 = vadd.f32 %v1866, 1.4214138
        %v1899 = vadd.f32 %v1867, 1.4214138
        %v1900 = vmul.f32 %v1709, %v1868
        %v1901 = vmul.f32 %v1711, %v1869
        %v1902 = vmul.f32 %v1713, %v1870
        %v1903 = vmul.f32 %v1715, %v1871
        %v1904 = vmul.f32 %v1717, %v1872
        %v1905 = vmul.f32 %v1719, %v1873
        %v1906 = vmul.f32 %v1721, %v1874
        %v1907 = vmul.f32 %v1723, %v1875
        %v1908 = vmul.f32 %v1725, %v1876
        %v1909 = vmul.f32 %v1727, %v1877
        %v1910 = vmul.f32 %v1729, %v1878
        %v1911 = vmul.f32 %v1731, %v1879
        %v1912 = vmul.f32 %v1733, %v1880
        %v1913 = vmul.f32 %v1735, %v1881
        %v1914 = vmul.f32 %v1737, %v1882
        %v1915 = vmul.f32 %v1739, %v1883
        %v1916 = vmul.f32 %v1741, %v1884
        %v1917 = vmul.f32 %v1743, %v1885
        %v1918 = vmul.f32 %v1745, %v1886
        %v1919 = vmul.f32 %v1747, %v1887
        %v1920 = vmul.f32 %v1749, %v1888
        %v1921 = vmul.f32 %v1751, %v1889
        %v1922 = vmul.f32 %v1753, %v1890
        %v1923 = vmul.f32 %v1755, %v1891
        %v1924 = vmul.f32 %v1757, %v1892
        %v1925 = vmul.f32 %v1759, %v1893
        %v1926 = vmul.f32 %v1761, %v1894
        %v1927 = vmul.f32 %v1763, %v1895
        %v1928 = vmul.f32 %v1765, %v1896
        %v1929 = vmul.f32 %v1767, %v1897
        %v1930 = vmul.f32 %v1769, %v1898
        %v1931 = vmul.f32 %v1771, %v1899
        %v1932 = vadd.f32 %v1900, -0.28449672
        %v1933 = vadd.f32 %v1901, -0.28449672
        %v1934 = vadd.f32 %v1902, -0.28449672
        %v1935 = vadd.f32 %v1903, -0.28449672
        %v1936 = vadd.f32 %v1904, -0.28449672
        %v1937 = vadd.f32 %v1905, -0.28449672
        %v1938 = vadd.f32 %v1906, -0.28449672
        %v1939 = vadd.f32 %v1907, -0.28449672
        %v1940 = vadd.f32 %v1908, -0.28449672
        %v1941 = vadd.f32 %v1909, -0.28449672
        %v1942 = vadd.f32 %v1910, -0.28449672
        %v1943 = vadd.f32 %v1911, -0.28449672
        %v1944 = vadd.f32 %v1912, -0.28449672
        %v1945 = vadd.f32 %v1913, -0.28449672
        %v1946 = vadd.f32 %v1914, -0.28449672
        %v1947 = vadd.f32 %v1915, -0.28449672
        %v1948 = vadd.f32 %v1916, -0.28449672
        %v1949 = vadd.f32 %v1917, -0.28449672
        %v1950 = vadd.f32 %v1918, -0.28449672
        %v1951 = vadd.f32 %v1919, -0.28449672
        %v1952 = vadd.f32 %v1920, -0.28449672
        %v1953 = vadd.f32 %v1921, -0.28449672
        %v1954 = vadd.f32 %v1922, -0.28449672
        %v1955 = vadd.f32 %v1923, -0.28449672
        %v1956 = vadd.f32 %v1924, -0.28449672
        %v1957 = vadd.f32 %v1925, -0.28449672
        %v1958 = vadd.f32 %v1926, -0.28449672
        %v1959 = vadd.f32 %v1927, -0.28449672
        %v1960 = vadd.f32 %v1928, -0.28449672
        %v1961 = vadd.f32 %v1929, -0.28449672
        %v1962 = vadd.f32 %v1930, -0.28449672
        %v1963 = vadd.f32 %v1931, -0.28449672
        %v1964 = vmul.f32 %v1709, %v1932
        %v1965 = vmul.f32 %v1711, %v1933
        %v1966 = vmul.f32 %v1713, %v1934
        %v1967 = vmul.f32 %v1715, %v1935
        %v1968 = vmul.f32 %v1717, %v1936
        %v1969 = vmul.f32 %v1719, %v1937
        %v1970 = vmul.f32 %v1721, %v1938
        %v1971 = vmul.f32 %v1723, %v1939
        %v1972 = vmul.f32 %v1725, %v1940
        %v1973 = vmul.f32 %v1727, %v1941
        %v1974 = vmul.f32 %v1729, %v1942
        %v1975 = vmul.f32 %v1731, %v1943
        %v1976 = vmul.f32 %v1733, %v1944
        %v1977 = vmul.f32 %v1735, %v1945
        %v1978 = vmul.f32 %v1737, %v1946
        %v1979 = vmul.f32 %v1739, %v1947
        %v1980 = vmul.f32 %v1741, %v1948
        %v1981 = vmul.f32 %v1743, %v1949
        %v1982 = vmul.f32 %v1745, %v1950
        %v1983 = vmul.f32 %v1747, %v1951
        %v1984 = vmul.f32 %v1749, %v1952
        %v1985 = vmul.f32 %v1751, %v1953
        %v1986 = vmul.f32 %v1753, %v1954
        %v1987 = vmul.f32 %v1755, %v1955
        %v1988 = vmul.f32 %v1757, %v1956
        %v1989 = vmul.f32 %v1759, %v1957
        %v1990 = vmul.f32 %v1761, %v1958
        %v1991 = vmul.f32 %v1763, %v1959
        %v1992 = vmul.f32 %v1765, %v1960
        %v1993 = vmul.f32 %v1767, %v1961
        %v1994 = vmul.f32 %v1769, %v1962
        %v1995 = vmul.f32 %v1771, %v1963
        %v1996 = vadd.f32 %v1964, 0.2548296
        %v1997 = vadd.f32 %v1965, 0.2548296
        %v1998 = vadd.f32 %v1966, 0.2548296
        %v1999 = vadd.f32 %v1967, 0.2548296
        %v2000 = vadd.f32 %v1968, 0.2548296
        %v2001 = vadd.f32 %v1969, 0.2548296
        %v2002 = vadd.f32 %v1970, 0.2548296
        %v2003 = vadd.f32 %v1971, 0.2548296
        %v2004 = vadd.f32 %v1972, 0.2548296
        %v2005 = vadd.f32 %v1973, 0.2548296
        %v2006 = vadd.f32 %v1974, 0.2548296
        %v2007 = vadd.f32 %v1975, 0.2548296
        %v2008 = vadd.f32 %v1976, 0.2548296
        %v2009 = vadd.f32 %v1977, 0.2548296
        %v2010 = vadd.f32 %v1978, 0.2548296
        %v2011 = vadd.f32 %v1979, 0.2548296
        %v2012 = vadd.f32 %v1980, 0.2548296
        %v2013 = vadd.f32 %v1981, 0.2548296
        %v2014 = vadd.f32 %v1982, 0.2548296
        %v2015 = vadd.f32 %v1983, 0.2548296
        %v2016 = vadd.f32 %v1984, 0.2548296
        %v2017 = vadd.f32 %v1985, 0.2548296
        %v2018 = vadd.f32 %v1986, 0.2548296
        %v2019 = vadd.f32 %v1987, 0.2548296
        %v2020 = vadd.f32 %v1988, 0.2548296
        %v2021 = vadd.f32 %v1989, 0.2548296
        %v2022 = vadd.f32 %v1990, 0.2548296
        %v2023 = vadd.f32 %v1991, 0.2548296
        %v2024 = vadd.f32 %v1992, 0.2548296
        %v2025 = vadd.f32 %v1993, 0.2548296
        %v2026 = vadd.f32 %v1994, 0.2548296
        %v2027 = vadd.f32 %v1995, 0.2548296
        %v2028 = vmul.f32 %v1709, %v1996
        %v2029 = vmul.f32 %v1711, %v1997
        %v2030 = vmul.f32 %v1713, %v1998
        %v2031 = vmul.f32 %v1715, %v1999
        %v2032 = vmul.f32 %v1717, %v2000
        %v2033 = vmul.f32 %v1719, %v2001
        %v2034 = vmul.f32 %v1721, %v2002
        %v2035 = vmul.f32 %v1723, %v2003
        %v2036 = vmul.f32 %v1725, %v2004
        %v2037 = vmul.f32 %v1727, %v2005
        %v2038 = vmul.f32 %v1729, %v2006
        %v2039 = vmul.f32 %v1731, %v2007
        %v2040 = vmul.f32 %v1733, %v2008
        %v2041 = vmul.f32 %v1735, %v2009
        %v2042 = vmul.f32 %v1737, %v2010
        %v2043 = vmul.f32 %v1739, %v2011
        %v2044 = vmul.f32 %v1741, %v2012
        %v2045 = vmul.f32 %v1743, %v2013
        %v2046 = vmul.f32 %v1745, %v2014
        %v2047 = vmul.f32 %v1747, %v2015
        %v2048 = vmul.f32 %v1749, %v2016
        %v2049 = vmul.f32 %v1751, %v2017
        %v2050 = vmul.f32 %v1753, %v2018
        %v2051 = vmul.f32 %v1755, %v2019
        %v2052 = vmul.f32 %v1757, %v2020
        %v2053 = vmul.f32 %v1759, %v2021
        %v2054 = vmul.f32 %v1761, %v2022
        %v2055 = vmul.f32 %v1763, %v2023
        %v2056 = vmul.f32 %v1765, %v2024
        %v2057 = vmul.f32 %v1767, %v2025
        %v2058 = vmul.f32 %v1769, %v2026
        %v2059 = vmul.f32 %v1771, %v2027
        %v2060 = vsub.f32 0.0, %v1612
        %v2061 = vsub.f32 0.0, %v1613
        %v2062 = vsub.f32 0.0, %v1614
        %v2063 = vsub.f32 0.0, %v1615
        %v2064 = vsub.f32 0.0, %v1616
        %v2065 = vsub.f32 0.0, %v1617
        %v2066 = vsub.f32 0.0, %v1618
        %v2067 = vsub.f32 0.0, %v1619
        %v2068 = vsub.f32 0.0, %v1620
        %v2069 = vsub.f32 0.0, %v1621
        %v2070 = vsub.f32 0.0, %v1622
        %v2071 = vsub.f32 0.0, %v1623
        %v2072 = vsub.f32 0.0, %v1624
        %v2073 = vsub.f32 0.0, %v1625
        %v2074 = vsub.f32 0.0, %v1626
        %v2075 = vsub.f32 0.0, %v1627
        %v2076 = vsub.f32 0.0, %v1628
        %v2077 = vsub.f32 0.0, %v1629
        %v2078 = vsub.f32 0.0, %v1630
        %v2079 = vsub.f32 0.0, %v1631
        %v2080 = vsub.f32 0.0, %v1632
        %v2081 = vsub.f32 0.0, %v1633
        %v2082 = vsub.f32 0.0, %v1634
        %v2083 = vsub.f32 0.0, %v1635
        %v2084 = vsub.f32 0.0, %v1636
        %v2085 = vsub.f32 0.0, %v1637
        %v2086 = vsub.f32 0.0, %v1638
        %v2087 = vsub.f32 0.0, %v1639
        %v2088 = vsub.f32 0.0, %v1640
        %v2089 = vsub.f32 0.0, %v1641
        %v2090 = vsub.f32 0.0, %v1642
        %v2091 = vsub.f32 0.0, %v1643
        %v2092 = vmul.f32 %v2060, %v1612
        %v2093 = vmul.f32 %v2061, %v1613
        %v2094 = vmul.f32 %v2062, %v1614
        %v2095 = vmul.f32 %v2063, %v1615
        %v2096 = vmul.f32 %v2064, %v1616
        %v2097 = vmul.f32 %v2065, %v1617
        %v2098 = vmul.f32 %v2066, %v1618
        %v2099 = vmul.f32 %v2067, %v1619
        %v2100 = vmul.f32 %v2068, %v1620
        %v2101 = vmul.f32 %v2069, %v1621
        %v2102 = vmul.f32 %v2070, %v1622
        %v2103 = vmul.f32 %v2071, %v1623
        %v2104 = vmul.f32 %v2072, %v1624
        %v2105 = vmul.f32 %v2073, %v1625
        %v2106 = vmul.f32 %v2074, %v1626
        %v2107 = vmul.f32 %v2075, %v1627
        %v2108 = vmul.f32 %v2076, %v1628
        %v2109 = vmul.f32 %v2077, %v1629
        %v2110 = vmul.f32 %v2078, %v1630
        %v2111 = vmul.f32 %v2079, %v1631
        %v2112 = vmul.f32 %v2080, %v1632
        %v2113 = vmul.f32 %v2081, %v1633
        %v2114 = vmul.f32 %v2082, %v1634
        %v2115 = vmul.f32 %v2083, %v1635
        %v2116 = vmul.f32 %v2084, %v1636
        %v2117 = vmul.f32 %v2085, %v1637
        %v2118 = vmul.f32 %v2086, %v1638
        %v2119 = vmul.f32 %v2087, %v1639
        %v2120 = vmul.f32 %v2088, %v1640
        %v2121 = vmul.f32 %v2089, %v1641
        %v2122 = vmul.f32 %v2090, %v1642
        %v2123 = vmul.f32 %v2091, %v1643
        %v2124 = vmul.f32 %v2092, 1.442695
        %v2125 = vpow.pop %v2124
        %v2126 = vmul.f32 %v2093, 1.442695
        %v2127 = vpow.pop %v2126
        %v2128 = vmul.f32 %v2094, 1.442695
        %v2129 = vpow.pop %v2128
        %v2130 = vmul.f32 %v2095, 1.442695
        %v2131 = vpow.pop %v2130
        %v2132 = vmul.f32 %v2096, 1.442695
        %v2133 = vpow.pop %v2132
        %v2134 = vmul.f32 %v2097, 1.442695
        %v2135 = vpow.pop %v2134
        %v2136 = vmul.f32 %v2098, 1.442695
        %v2137 = vpow.pop %v2136
        %v2138 = vmul.f32 %v2099, 1.442695
        %v2139 = vpow.pop %v2138
        %v2140 = vmul.f32 %v2100, 1.442695
        %v2141 = vpow.pop %v2140
        %v2142 = vmul.f32 %v2101, 1.442695
        %v2143 = vpow.pop %v2142
        %v2144 = vmul.f32 %v2102, 1.442695
        %v2145 = vpow.pop %v2144
        %v2146 = vmul.f32 %v2103, 1.442695
        %v2147 = vpow.pop %v2146
        %v2148 = vmul.f32 %v2104, 1.442695
        %v2149 = vpow.pop %v2148
        %v2150 = vmul.f32 %v2105, 1.442695
        %v2151 = vpow.pop %v2150
        %v2152 = vmul.f32 %v2106, 1.442695
        %v2153 = vpow.pop %v2152
        %v2154 = vmul.f32 %v2107, 1.442695
        %v2155 = vpow.pop %v2154
        %v2156 = vmul.f32 %v2108, 1.442695
        %v2157 = vpow.pop %v2156
        %v2158 = vmul.f32 %v2109, 1.442695
        %v2159 = vpow.pop %v2158
        %v2160 = vmul.f32 %v2110, 1.442695
        %v2161 = vpow.pop %v2160
        %v2162 = vmul.f32 %v2111, 1.442695
        %v2163 = vpow.pop %v2162
        %v2164 = vmul.f32 %v2112, 1.442695
        %v2165 = vpow.pop %v2164
        %v2166 = vmul.f32 %v2113, 1.442695
        %v2167 = vpow.pop %v2166
        %v2168 = vmul.f32 %v2114, 1.442695
        %v2169 = vpow.pop %v2168
        %v2170 = vmul.f32 %v2115, 1.442695
        %v2171 = vpow.pop %v2170
        %v2172 = vmul.f32 %v2116, 1.442695
        %v2173 = vpow.pop %v2172
        %v2174 = vmul.f32 %v2117, 1.442695
        %v2175 = vpow.pop %v2174
        %v2176 = vmul.f32 %v2118, 1.442695
        %v2177 = vpow.pop %v2176
        %v2178 = vmul.f32 %v2119, 1.442695
        %v2179 = vpow.pop %v2178
        %v2180 = vmul.f32 %v2120, 1.442695
        %v2181 = vpow.pop %v2180
        %v2182 = vmul.f32 %v2121, 1.442695
        %v2183 = vpow.pop %v2182
        %v2184 = vmul.f32 %v2122, 1.442695
        %v2185 = vpow.pop %v2184
        %v2186 = vmul.f32 %v2123, 1.442695
        %v2187 = vpow.pop %v2186
        %v2188 = vmul.f32 %v2028, %v2125
        %v2189 = vmul.f32 %v2029, %v2127
        %v2190 = vmul.f32 %v2030, %v2129
        %v2191 = vmul.f32 %v2031, %v2131
        %v2192 = vmul.f32 %v2032, %v2133
        %v2193 = vmul.f32 %v2033, %v2135
        %v2194 = vmul.f32 %v2034, %v2137
        %v2195 = vmul.f32 %v2035, %v2139
        %v2196 = vmul.f32 %v2036, %v2141
        %v2197 = vmul.f32 %v2037, %v2143
        %v2198 = vmul.f32 %v2038, %v2145
        %v2199 = vmul.f32 %v2039, %v2147
        %v2200 = vmul.f32 %v2040, %v2149
        %v2201 = vmul.f32 %v2041, %v2151
        %v2202 = vmul.f32 %v2042, %v2153
        %v2203 = vmul.f32 %v2043, %v2155
        %v2204 = vmul.f32 %v2044, %v2157
        %v2205 = vmul.f32 %v2045, %v2159
        %v2206 = vmul.f32 %v2046, %v2161
        %v2207 = vmul.f32 %v2047, %v2163
        %v2208 = vmul.f32 %v2048, %v2165
        %v2209 = vmul.f32 %v2049, %v2167
        %v2210 = vmul.f32 %v2050, %v2169
        %v2211 = vmul.f32 %v2051, %v2171
        %v2212 = vmul.f32 %v2052, %v2173
        %v2213 = vmul.f32 %v2053, %v2175
        %v2214 = vmul.f32 %v2054, %v2177
        %v2215 = vmul.f32 %v2055, %v2179
        %v2216 = vmul.f32 %v2056, %v2181
        %v2217 = vmul.f32 %v2057, %v2183
        %v2218 = vmul.f32 %v2058, %v2185
        %v2219 = vmul.f32 %v2059, %v2187
        %v2220 = vsub.f32 1.0, %v2188
        %v2221 = vsub.f32 1.0, %v2189
        %v2222 = vsub.f32 1.0, %v2190
        %v2223 = vsub.f32 1.0, %v2191
        %v2224 = vsub.f32 1.0, %v2192
        %v2225 = vsub.f32 1.0, %v2193
        %v2226 = vsub.f32 1.0, %v2194
        %v2227 = vsub.f32 1.0, %v2195
        %v2228 = vsub.f32 1.0, %v2196
        %v2229 = vsub.f32 1.0, %v2197
        %v2230 = vsub.f32 1.0, %v2198
        %v2231 = vsub.f32 1.0, %v2199
        %v2232 = vsub.f32 1.0, %v2200
        %v2233 = vsub.f32 1.0, %v2201
        %v2234 = vsub.f32 1.0, %v2202
        %v2235 = vsub.f32 1.0, %v2203
        %v2236 = vsub.f32 1.0, %v2204
        %v2237 = vsub.f32 1.0, %v2205
        %v2238 = vsub.f32 1.0, %v2206
        %v2239 = vsub.f32 1.0, %v2207
        %v2240 = vsub.f32 1.0, %v2208
        %v2241 = vsub.f32 1.0, %v2209
        %v2242 = vsub.f32 1.0, %v2210
        %v2243 = vsub.f32 1.0, %v2211
        %v2244 = vsub.f32 1.0, %v2212
        %v2245 = vsub.f32 1.0, %v2213
        %v2246 = vsub.f32 1.0, %v2214
        %v2247 = vsub.f32 1.0, %v2215
        %v2248 = vsub.f32 1.0, %v2216
        %v2249 = vsub.f32 1.0, %v2217
        %v2250 = vsub.f32 1.0, %v2218
        %v2251 = vsub.f32 1.0, %v2219
        %vm2252 = vcmp.lt.f32.partialorder %v1580, 0.0
        %vm2253 = vcmp.lt.f32.partialorder %v1581, 0.0
        %vm2254 = vcmp.lt.f32.partialorder %v1582, 0.0
        %vm2255 = vcmp.lt.f32.partialorder %v1583, 0.0
        %vm2256 = vcmp.lt.f32.partialorder %v1584, 0.0
        %vm2257 = vcmp.lt.f32.partialorder %v1585, 0.0
        %vm2258 = vcmp.lt.f32.partialorder %v1586, 0.0
        %vm2259 = vcmp.lt.f32.partialorder %v1587, 0.0
        %vm2260 = vcmp.lt.f32.partialorder %v1588, 0.0
        %vm2261 = vcmp.lt.f32.partialorder %v1589, 0.0
        %vm2262 = vcmp.lt.f32.partialorder %v1590, 0.0
        %vm2263 = vcmp.lt.f32.partialorder %v1591, 0.0
        %vm2264 = vcmp.lt.f32.partialorder %v1592, 0.0
        %vm2265 = vcmp.lt.f32.partialorder %v1593, 0.0
        %vm2266 = vcmp.lt.f32.partialorder %v1594, 0.0
        %vm2267 = vcmp.lt.f32.partialorder %v1595, 0.0
        %vm2268 = vcmp.lt.f32.partialorder %v1596, 0.0
        %vm2269 = vcmp.lt.f32.partialorder %v1597, 0.0
        %vm2270 = vcmp.lt.f32.partialorder %v1598, 0.0
        %vm2271 = vcmp.lt.f32.partialorder %v1599, 0.0
        %vm2272 = vcmp.lt.f32.partialorder %v1600, 0.0
        %vm2273 = vcmp.lt.f32.partialorder %v1601, 0.0
        %vm2274 = vcmp.lt.f32.partialorder %v1602, 0.0
        %vm2275 = vcmp.lt.f32.partialorder %v1603, 0.0
        %vm2276 = vcmp.lt.f32.partialorder %v1604, 0.0
        %vm2277 = vcmp.lt.f32.partialorder %v1605, 0.0
        %vm2278 = vcmp.lt.f32.partialorder %v1606, 0.0
        %vm2279 = vcmp.lt.f32.partialorder %v1607, 0.0
        %vm2280 = vcmp.lt.f32.partialorder %v1608, 0.0
        %vm2281 = vcmp.lt.f32.partialorder %v1609, 0.0
        %vm2282 = vcmp.lt.f32.partialorder %v1610, 0.0
        %vm2283 = vcmp.lt.f32.partialorder %v1611, 0.0
        %v2284 = vsub.f32 0.0, %v2220
        %v2285 = vsub.f32 0.0, %v2221
        %v2286 = vsub.f32 0.0, %v2222
        %v2287 = vsub.f32 0.0, %v2223
        %v2288 = vsub.f32 0.0, %v2224
        %v2289 = vsub.f32 0.0, %v2225
        %v2290 = vsub.f32 0.0, %v2226
        %v2291 = vsub.f32 0.0, %v2227
        %v2292 = vsub.f32 0.0, %v2228
        %v2293 = vsub.f32 0.0, %v2229
        %v2294 = vsub.f32 0.0, %v2230
        %v2295 = vsub.f32 0.0, %v2231
        %v2296 = vsub.f32 0.0, %v2232
        %v2297 = vsub.f32 0.0, %v2233
        %v2298 = vsub.f32 0.0, %v2234
        %v2299 = vsub.f32 0.0, %v2235
        %v2300 = vsub.f32 0.0, %v2236
        %v2301 = vsub.f32 0.0, %v2237
        %v2302 = vsub.f32 0.0, %v2238
        %v2303 = vsub.f32 0.0, %v2239
        %v2304 = vsub.f32 0.0, %v2240
        %v2305 = vsub.f32 0.0, %v2241
        %v2306 = vsub.f32 0.0, %v2242
        %v2307 = vsub.f32 0.0, %v2243
        %v2308 = vsub.f32 0.0, %v2244
        %v2309 = vsub.f32 0.0, %v2245
        %v2310 = vsub.f32 0.0, %v2246
        %v2311 = vsub.f32 0.0, %v2247
        %v2312 = vsub.f32 0.0, %v2248
        %v2313 = vsub.f32 0.0, %v2249
        %v2314 = vsub.f32 0.0, %v2250
        %v2315 = vsub.f32 0.0, %v2251
        %v2316 = vsel %vm2252, %v2284, %v2220
        %v2317 = vsel %vm2253, %v2285, %v2221
        %v2318 = vsel %vm2254, %v2286, %v2222
        %v2319 = vsel %vm2255, %v2287, %v2223
        %v2320 = vsel %vm2256, %v2288, %v2224
        %v2321 = vsel %vm2257, %v2289, %v2225
        %v2322 = vsel %vm2258, %v2290, %v2226
        %v2323 = vsel %vm2259, %v2291, %v2227
        %v2324 = vsel %vm2260, %v2292, %v2228
        %v2325 = vsel %vm2261, %v2293, %v2229
        %v2326 = vsel %vm2262, %v2294, %v2230
        %v2327 = vsel %vm2263, %v2295, %v2231
        %v2328 = vsel %vm2264, %v2296, %v2232
        %v2329 = vsel %vm2265, %v2297, %v2233
        %v2330 = vsel %vm2266, %v2298, %v2234
        %v2331 = vsel %vm2267, %v2299, %v2235
        %v2332 = vsel %vm2268, %v2300, %v2236
        %v2333 = vsel %vm2269, %v2301, %v2237
        %v2334 = vsel %vm2270, %v2302, %v2238
        %v2335 = vsel %vm2271, %v2303, %v2239
        %v2336 = vsel %vm2272, %v2304, %v2240
        %v2337 = vsel %vm2273, %v2305, %v2241
        %v2338 = vsel %vm2274, %v2306, %v2242
        %v2339 = vsel %vm2275, %v2307, %v2243
        %v2340 = vsel %vm2276, %v2308, %v2244
        %v2341 = vsel %vm2277, %v2309, %v2245
        %v2342 = vsel %vm2278, %v2310, %v2246
        %v2343 = vsel %vm2279, %v2311, %v2247
        %v2344 = vsel %vm2280, %v2312, %v2248
        %v2345 = vsel %vm2281, %v2313, %v2249
        %v2346 = vsel %vm2282, %v2314, %v2250
        %v2347 = vsel %vm2283, %v2315, %v2251
        %v2348 = vmul.f32 %v1548, 0.5
        %v2349 = vmul.f32 %v1549, 0.5
        %v2350 = vmul.f32 %v1550, 0.5
        %v2351 = vmul.f32 %v1551, 0.5
        %v2352 = vmul.f32 %v1552, 0.5
        %v2353 = vmul.f32 %v1553, 0.5
        %v2354 = vmul.f32 %v1554, 0.5
        %v2355 = vmul.f32 %v1555, 0.5
        %v2356 = vmul.f32 %v1556, 0.5
        %v2357 = vmul.f32 %v1557, 0.5
        %v2358 = vmul.f32 %v1558, 0.5
        %v2359 = vmul.f32 %v1559, 0.5
        %v2360 = vmul.f32 %v1560, 0.5
        %v2361 = vmul.f32 %v1561, 0.5
        %v2362 = vmul.f32 %v1562, 0.5
        %v2363 = vmul.f32 %v1563, 0.5
        %v2364 = vmul.f32 %v1564, 0.5
        %v2365 = vmul.f32 %v1565, 0.5
        %v2366 = vmul.f32 %v1566, 0.5
        %v2367 = vmul.f32 %v1567, 0.5
        %v2368 = vmul.f32 %v1568, 0.5
        %v2369 = vmul.f32 %v1569, 0.5
        %v2370 = vmul.f32 %v1570, 0.5
        %v2371 = vmul.f32 %v1571, 0.5
        %v2372 = vmul.f32 %v1572, 0.5
        %v2373 = vmul.f32 %v1573, 0.5
        %v2374 = vmul.f32 %v1574, 0.5
        %v2375 = vmul.f32 %v1575, 0.5
        %v2376 = vmul.f32 %v1576, 0.5
        %v2377 = vmul.f32 %v1577, 0.5
        %v2378 = vmul.f32 %v1578, 0.5
        %v2379 = vmul.f32 %v1579, 0.5
        %v2380 = vadd.f32 %v2316, 1.0
        %v2381 = vadd.f32 %v2317, 1.0
        %v2382 = vadd.f32 %v2318, 1.0
        %v2383 = vadd.f32 %v2319, 1.0
        %v2384 = vadd.f32 %v2320, 1.0
        %v2385 = vadd.f32 %v2321, 1.0
        %v2386 = vadd.f32 %v2322, 1.0
        %v2387 = vadd.f32 %v2323, 1.0
        %v2388 = vadd.f32 %v2324, 1.0
        %v2389 = vadd.f32 %v2325, 1.0
        %v2390 = vadd.f32 %v2326, 1.0
        %v2391 = vadd.f32 %v2327, 1.0
        %v2392 = vadd.f32 %v2328, 1.0
        %v2393 = vadd.f32 %v2329, 1.0
        %v2394 = vadd.f32 %v2330, 1.0
        %v2395 = vadd.f32 %v2331, 1.0
        %v2396 = vadd.f32 %v2332, 1.0
        %v2397 = vadd.f32 %v2333, 1.0
        %v2398 = vadd.f32 %v2334, 1.0
        %v2399 = vadd.f32 %v2335, 1.0
        %v2400 = vadd.f32 %v2336, 1.0
        %v2401 = vadd.f32 %v2337, 1.0
        %v2402 = vadd.f32 %v2338, 1.0
        %v2403 = vadd.f32 %v2339, 1.0
        %v2404 = vadd.f32 %v2340, 1.0
        %v2405 = vadd.f32 %v2341, 1.0
        %v2406 = vadd.f32 %v2342, 1.0
        %v2407 = vadd.f32 %v2343, 1.0
        %v2408 = vadd.f32 %v2344, 1.0
        %v2409 = vadd.f32 %v2345, 1.0
        %v2410 = vadd.f32 %v2346, 1.0
        %v2411 = vadd.f32 %v2347, 1.0
        %v2412 = vmul.f32 %v2348, %v2380
        %v2413 = vmul.f32 %v2349, %v2381
        %v2414 = vmul.f32 %v2350, %v2382
        %v2415 = vmul.f32 %v2351, %v2383
        %v2416 = vmul.f32 %v2352, %v2384
        %v2417 = vmul.f32 %v2353, %v2385
        %v2418 = vmul.f32 %v2354, %v2386
        %v2419 = vmul.f32 %v2355, %v2387
        %v2420 = vmul.f32 %v2356, %v2388
        %v2421 = vmul.f32 %v2357, %v2389
        %v2422 = vmul.f32 %v2358, %v2390
        %v2423 = vmul.f32 %v2359, %v2391
        %v2424 = vmul.f32 %v2360, %v2392
        %v2425 = vmul.f32 %v2361, %v2393
        %v2426 = vmul.f32 %v2362, %v2394
        %v2427 = vmul.f32 %v2363, %v2395
        %v2428 = vmul.f32 %v2364, %v2396
        %v2429 = vmul.f32 %v2365, %v2397
        %v2430 = vmul.f32 %v2366, %v2398
        %v2431 = vmul.f32 %v2367, %v2399
        %v2432 = vmul.f32 %v2368, %v2400
        %v2433 = vmul.f32 %v2369, %v2401
        %v2434 = vmul.f32 %v2370, %v2402
        %v2435 = vmul.f32 %v2371, %v2403
        %v2436 = vmul.f32 %v2372, %v2404
        %v2437 = vmul.f32 %v2373, %v2405
        %v2438 = vmul.f32 %v2374, %v2406
        %v2439 = vmul.f32 %v2375, %v2407
        %v2440 = vmul.f32 %v2376, %v2408
        %v2441 = vmul.f32 %v2377, %v2409
        %v2442 = vmul.f32 %v2378, %v2410
        %v2443 = vmul.f32 %v2379, %v2411
        %v2444 = vpack.c.bf16 %v2413, %v2412
        %v2445 = vpack.c.bf16 %v2415, %v2414
        %v2446 = vpack.c.bf16 %v2417, %v2416
        %v2447 = vpack.c.bf16 %v2419, %v2418
        %v2448 = vpack.c.bf16 %v2421, %v2420
        %v2449 = vpack.c.bf16 %v2423, %v2422
        %v2450 = vpack.c.bf16 %v2425, %v2424
        %v2451 = vpack.c.bf16 %v2427, %v2426
        %v2452 = vpack.c.bf16 %v2429, %v2428
        %v2453 = vpack.c.bf16 %v2431, %v2430
        %v2454 = vpack.c.bf16 %v2433, %v2432
        %v2455 = vpack.c.bf16 %v2435, %v2434
        %v2456 = vpack.c.bf16 %v2437, %v2436
        %v2457 = vpack.c.bf16 %v2439, %v2438
        %v2458 = vpack.c.bf16 %v2441, %v2440
        %v2459 = vpack.c.bf16 %v2443, %v2442
        %v2460 = vld [vmem:[%s5] sm:$0xf]
        %v2461 = vld [vmem:[%s5 + $0x4] sm:$0xf]
        %v2462 = vld [vmem:[%s5 + $0x8] sm:$0xf]
        %v2463 = vld [vmem:[%s5 + $0xc] sm:$0xf]
        %v2464 = vld [vmem:[%s5 + $0x10] sm:$0xf]
        %v2465 = vld [vmem:[%s5 + $0x14] sm:$0xf]
        %v2466 = vld [vmem:[%s5 + $0x18] sm:$0xf]
        %v2467 = vld [vmem:[%s5 + $0x1c] sm:$0xf]
        %v2468 = vld [vmem:[%s5 + $0x20] sm:$0xf]
        %v2469 = vld [vmem:[%s5 + $0x24] sm:$0xf]
        %v2470 = vld [vmem:[%s5 + $0x28] sm:$0xf]
        %v2471 = vld [vmem:[%s5 + $0x2c] sm:$0xf]
        %v2472 = vld [vmem:[%s5 + $0x30] sm:$0xf]
        %v2473 = vld [vmem:[%s5 + $0x34] sm:$0xf]
        %v2474 = vld [vmem:[%s5 + $0x38] sm:$0xf]
        %v2475 = vld [vmem:[%s5 + $0x3c] sm:$0xf]
        %v2476 = vld [vmem:[%s6] sm:$0x1]
        %v2478 = vlaneseq
        %v2479 = vshrl.u32 %v2478, 7
        %v2480 = vsub.s32 0, %v2479
        %v2481 = vrot.slane %v2476, %v2480
        %v2499 = vunpack.c.l.b16 %v2460
        %v2500 = vunpack.c.l.b16 %v2461
        %v2501 = vunpack.c.l.b16 %v2462
        %v2502 = vunpack.c.l.b16 %v2463
        %v2503 = vunpack.c.l.b16 %v2464
        %v2504 = vunpack.c.l.b16 %v2465
        %v2505 = vunpack.c.l.b16 %v2466
        %v2506 = vunpack.c.l.b16 %v2467
        %v2507 = vunpack.c.l.b16 %v2468
        %v2508 = vunpack.c.l.b16 %v2469
        %v2509 = vunpack.c.l.b16 %v2470
        %v2510 = vunpack.c.l.b16 %v2471
        %v2511 = vunpack.c.l.b16 %v2472
        %v2512 = vunpack.c.l.b16 %v2473
        %v2513 = vunpack.c.l.b16 %v2474
        %v2514 = vunpack.c.l.b16 %v2475
        %v2515 = vpack.c.b16 %v2500, %v2499
        %v2516 = vpack.c.b16 %v2502, %v2501
        %v2517 = vpack.c.b16 %v2504, %v2503
        %v2518 = vpack.c.b16 %v2506, %v2505
        %v2519 = vpack.c.b16 %v2508, %v2507
        %v2520 = vpack.c.b16 %v2510, %v2509
        %v2521 = vpack.c.b16 %v2512, %v2511
        %v2522 = vpack.c.b16 %v2514, %v2513
        %2531 = vmatprep.subr.bf16.mxu0 0
        %2532 = vmatpush1.bf16.msra.mxu0 %v2515
        %2533 = vmatprep.subr.bf16.mxu0 0
        %2534 = vmatpush1.bf16.msra.mxu0 %v2516
        %2535 = vmatprep.subr.bf16.mxu0 0
        %2536 = vmatpush1.bf16.msra.mxu0 %v2517
        %2537 = vmatprep.subr.bf16.mxu0 0
        %2538 = vmatpush1.bf16.msra.mxu0 %v2518
        %2539 = vmatprep.subr.bf16.mxu0 0
        %2540 = vmatpush1.bf16.msra.mxu0 %v2519
        %2541 = vmatprep.subr.bf16.mxu0 0
        %2542 = vmatpush1.bf16.msra.mxu0 %v2520
        %2543 = vmatprep.subr.bf16.mxu0 0
        %2544 = vmatpush1.bf16.msra.mxu0 %v2521
        %2545 = vmatprep.subr.bf16.mxu0 0
        %2546 = vmatpush1.bf16.msra.mxu0 %v2522
        %2547 = vmatprep.subr.bf16.mxu0 0
        %2548 = vmatpush1.bf16.msra.mxu0 0
        %2549 = vmatprep.subr.bf16.mxu0 0
        %2550 = vmatpush1.bf16.msra.mxu0 0
        %2551 = vmatprep.subr.bf16.mxu0 0
        %2552 = vmatpush1.bf16.msra.mxu0 0
        %2553 = vmatprep.subr.bf16.mxu0 0
        %2554 = vmatpush1.bf16.msra.mxu0 0
        %2555 = vmatprep.subr.bf16.mxu0 0
        %2556 = vmatpush1.bf16.msra.mxu0 0
        %2557 = vmatprep.subr.bf16.mxu0 0
        %2558 = vmatpush1.bf16.msra.mxu0 0
        %2559 = vmatprep.subr.bf16.mxu0 0
        %2560 = vmatpush1.bf16.msra.mxu0 0
        %2561 = vmatprep.subr.bf16.mxu0 0
        %2562 = vmatpush1.bf16.msra.mxu0 0
        %2563 = vmatprep.mubr.bf16.mxu0 0
        %2564 = vmatmul.mubr.bf16.gmra.mrb[0].mxu0 %v2444
        %v2565 = vpop.f32.mrb[0].mxu0
        %v2566 = vadd.f32 %v2481, %v2565
        %v2567 = vpop.f32.mrb[0].mxu0
        %v2568 = vpop.f32.mrb[0].mxu0
        %v2569 = vadd.f32 %v2481, %v2568
        %v2570 = vpop.f32.mrb[0].mxu0
        %2571 = vmatprep.mubr.bf16.mxu0 0
        %2572 = vmatmul.mubr.bf16.gmra.mrb[0].mxu0 %v2445
        %v2573 = vpop.f32.mrb[0].mxu0
        %v2574 = vadd.f32 %v2481, %v2573
        %v2575 = vpop.f32.mrb[0].mxu0
        %v2576 = vpop.f32.mrb[0].mxu0
        %v2577 = vadd.f32 %v2481, %v2576
        %v2578 = vpop.f32.mrb[0].mxu0
        %2579 = vmatprep.mubr.bf16.mxu0 0
        %2580 = vmatmul.mubr.bf16.gmra.mrb[0].mxu0 %v2446
        %v2581 = vpop.f32.mrb[0].mxu0
        %v2582 = vadd.f32 %v2481, %v2581
        %v2583 = vpop.f32.mrb[0].mxu0
        %v2584 = vpop.f32.mrb[0].mxu0
        %v2585 = vadd.f32 %v2481, %v2584
        %v2586 = vpop.f32.mrb[0].mxu0
        %2587 = vmatprep.mubr.bf16.mxu0 0
        %2588 = vmatmul.mubr.bf16.gmra.mrb[0].mxu0 %v2447
        %v2589 = vpop.f32.mrb[0].mxu0
        %v2590 = vadd.f32 %v2481, %v2589
        %v2591 = vpop.f32.mrb[0].mxu0
        %v2592 = vpop.f32.mrb[0].mxu0
        %v2593 = vadd.f32 %v2481, %v2592
        %v2594 = vpop.f32.mrb[0].mxu0
        %2595 = vmatprep.mubr.bf16.mxu0 0
        %2596 = vmatmul.mubr.bf16.gmra.mrb[0].mxu0 %v2448
        %v2597 = vpop.f32.mrb[0].mxu0
        %v2598 = vadd.f32 %v2481, %v2597
        %v2599 = vpop.f32.mrb[0].mxu0
        %v2600 = vpop.f32.mrb[0].mxu0
        %v2601 = vadd.f32 %v2481, %v2600
        %v2602 = vpop.f32.mrb[0].mxu0
        %2603 = vmatprep.mubr.bf16.mxu0 0
        %2604 = vmatmul.mubr.bf16.gmra.mrb[0].mxu0 %v2449
        %v2605 = vpop.f32.mrb[0].mxu0
        %v2606 = vadd.f32 %v2481, %v2605
        %v2607 = vpop.f32.mrb[0].mxu0
        %v2608 = vpop.f32.mrb[0].mxu0
        %v2609 = vadd.f32 %v2481, %v2608
        %v2610 = vpop.f32.mrb[0].mxu0
        %2611 = vmatprep.mubr.bf16.mxu0 0
        %2612 = vmatmul.mubr.bf16.gmra.mrb[0].mxu0 %v2450
        %v2613 = vpop.f32.mrb[0].mxu0
        %v2614 = vadd.f32 %v2481, %v2613
        %v2615 = vpop.f32.mrb[0].mxu0
        %v2616 = vpop.f32.mrb[0].mxu0
        %v2617 = vadd.f32 %v2481, %v2616
        %v2618 = vpop.f32.mrb[0].mxu0
        %2619 = vmatprep.mubr.bf16.mxu0 0
        %2620 = vmatmul.mubr.bf16.gmra.mrb[0].mxu0 %v2451
        %v2621 = vpop.f32.mrb[0].mxu0
        %v2622 = vadd.f32 %v2481, %v2621
        %v2623 = vpop.f32.mrb[0].mxu0
        %v2624 = vpop.f32.mrb[0].mxu0
        %v2625 = vadd.f32 %v2481, %v2624
        %v2626 = vpop.f32.mrb[0].mxu0
        %2627 = vmatprep.mubr.bf16.mxu0 0
        %2628 = vmatmul.mubr.bf16.gmra.mrb[0].mxu0 %v2452
        %v2629 = vpop.f32.mrb[0].mxu0
        %v2630 = vadd.f32 %v2481, %v2629
        %v2631 = vpop.f32.mrb[0].mxu0
        %v2632 = vpop.f32.mrb[0].mxu0
        %v2633 = vadd.f32 %v2481, %v2632
        %v2634 = vpop.f32.mrb[0].mxu0
        %2635 = vmatprep.mubr.bf16.mxu0 0
        %2636 = vmatmul.mubr.bf16.gmra.mrb[0].mxu0 %v2453
        %v2637 = vpop.f32.mrb[0].mxu0
        %v2638 = vadd.f32 %v2481, %v2637
        %v2639 = vpop.f32.mrb[0].mxu0
        %v2640 = vpop.f32.mrb[0].mxu0
        %v2641 = vadd.f32 %v2481, %v2640
        %v2642 = vpop.f32.mrb[0].mxu0
        %2643 = vmatprep.mubr.bf16.mxu0 0
        %2644 = vmatmul.mubr.bf16.gmra.mrb[0].mxu0 %v2454
        %v2645 = vpop.f32.mrb[0].mxu0
        %v2646 = vadd.f32 %v2481, %v2645
        %v2647 = vpop.f32.mrb[0].mxu0
        %v2648 = vpop.f32.mrb[0].mxu0
        %v2649 = vadd.f32 %v2481, %v2648
        %v2650 = vpop.f32.mrb[0].mxu0
        %2651 = vmatprep.mubr.bf16.mxu0 0
        %2652 = vmatmul.mubr.bf16.gmra.mrb[0].mxu0 %v2455
        %v2653 = vpop.f32.mrb[0].mxu0
        %v2654 = vadd.f32 %v2481, %v2653
        %v2655 = vpop.f32.mrb[0].mxu0
        %v2656 = vpop.f32.mrb[0].mxu0
        %v2657 = vadd.f32 %v2481, %v2656
        %v2658 = vpop.f32.mrb[0].mxu0
        %2659 = vmatprep.mubr.bf16.mxu0 0
        %2660 = vmatmul.mubr.bf16.gmra.mrb[0].mxu0 %v2456
        %v2661 = vpop.f32.mrb[0].mxu0
        %v2662 = vadd.f32 %v2481, %v2661
        %v2663 = vpop.f32.mrb[0].mxu0
        %v2664 = vpop.f32.mrb[0].mxu0
        %v2665 = vadd.f32 %v2481, %v2664
        %v2666 = vpop.f32.mrb[0].mxu0
        %2667 = vmatprep.mubr.bf16.mxu0 0
        %2668 = vmatmul.mubr.bf16.gmra.mrb[0].mxu0 %v2457
        %v2669 = vpop.f32.mrb[0].mxu0
        %v2670 = vadd.f32 %v2481, %v2669
        %v2671 = vpop.f32.mrb[0].mxu0
        %v2672 = vpop.f32.mrb[0].mxu0
        %v2673 = vadd.f32 %v2481, %v2672
        %v2674 = vpop.f32.mrb[0].mxu0
        %2675 = vmatprep.mubr.bf16.mxu0 0
        %2676 = vmatmul.mubr.bf16.gmra.mrb[0].mxu0 %v2458
        %v2677 = vpop.f32.mrb[0].mxu0
        %v2678 = vadd.f32 %v2481, %v2677
        %v2679 = vpop.f32.mrb[0].mxu0
        %v2680 = vpop.f32.mrb[0].mxu0
        %v2681 = vadd.f32 %v2481, %v2680
        %v2682 = vpop.f32.mrb[0].mxu0
        %2683 = vmatprep.mubr.bf16.mxu0 0
        %2684 = vmatmul.mubr.bf16.gmra.mrb[0].mxu0 %v2459
        %v2685 = vpop.f32.mrb[0].mxu0
        %v2686 = vadd.f32 %v2481, %v2685
        %v2687 = vpop.f32.mrb[0].mxu0
        %v2688 = vpop.f32.mrb[0].mxu0
        %v2689 = vadd.f32 %v2481, %v2688
        %v2690 = vpop.f32.mrb[0].mxu0
        %2691 = vdwg.mxu0
        %2692 = vst [vmem:[%s271] sm:$0xff] %v2566
        %2693 = vst [vmem:[%s271 + $0x8] sm:$0xff] %v2569
        %2694 = vst [vmem:[%s271 + $0x10] sm:$0xff] %v2574
        %2695 = vst [vmem:[%s271 + $0x18] sm:$0xff] %v2577
        %2696 = vst [vmem:[%s271 + $0x20] sm:$0xff] %v2582
        %2697 = vst [vmem:[%s271 + $0x28] sm:$0xff] %v2585
        %2698 = vst [vmem:[%s271 + $0x30] sm:$0xff] %v2590
        %2699 = vst [vmem:[%s271 + $0x38] sm:$0xff] %v2593
        %2700 = vst [vmem:[%s271 + $0x40] sm:$0xff] %v2598
        %2701 = vst [vmem:[%s271 + $0x48] sm:$0xff] %v2601
        %2702 = vst [vmem:[%s271 + $0x50] sm:$0xff] %v2606
        %2703 = vst [vmem:[%s271 + $0x58] sm:$0xff] %v2609
        %2704 = vst [vmem:[%s271 + $0x60] sm:$0xff] %v2614
        %2705 = vst [vmem:[%s271 + $0x68] sm:$0xff] %v2617
        %2706 = vst [vmem:[%s271 + $0x70] sm:$0xff] %v2622
        %2707 = vst [vmem:[%s271 + $0x78] sm:$0xff] %v2625
        %2708 = vst [vmem:[%s271 + $0x80] sm:$0xff] %v2630
        %2709 = vst [vmem:[%s271 + $0x88] sm:$0xff] %v2633
        %2710 = vst [vmem:[%s271 + $0x90] sm:$0xff] %v2638
        %2711 = vst [vmem:[%s271 + $0x98] sm:$0xff] %v2641
        %2712 = vst [vmem:[%s271 + $0xa0] sm:$0xff] %v2646
        %2713 = vst [vmem:[%s271 + $0xa8] sm:$0xff] %v2649
        %2714 = vst [vmem:[%s271 + $0xb0] sm:$0xff] %v2654
        %2715 = vst [vmem:[%s271 + $0xb8] sm:$0xff] %v2657
        %2716 = vst [vmem:[%s271 + $0xc0] sm:$0xff] %v2662
        %2717 = vst [vmem:[%s271 + $0xc8] sm:$0xff] %v2665
        %2718 = vst [vmem:[%s271 + $0xd0] sm:$0xff] %v2670
        %2719 = vst [vmem:[%s271 + $0xd8] sm:$0xff] %v2673
        %2720 = vst [vmem:[%s271 + $0xe0] sm:$0xff] %v2678
        %2721 = vst [vmem:[%s271 + $0xe8] sm:$0xff] %v2681
        %2722 = vst [vmem:[%s271 + $0xf0] sm:$0xff] %v2686
        %2723 = vst [vmem:[%s271 + $0xf8] sm:$0xff] %v2689
        %s2724 = sand.u32 %s181, 1
        %s2725 = scalar_lea.sflag [#allocation4], %s2724
        %s2726 = sand.u32 %s181, 1
        %s2727 = smul.addr %s2726, 256
        %s2728 = scalar_lea.vmem [#allocation3], %s2727
        // Predicated region
        $region49: #{mlp_forward.1} parent=47 // pred_check
          %p2729 = pneg %p191
        $region50: #{mlp_forward.1} parent=47 // pred_check_branch
          %2731 = sbr.rel (%p2729) target = $region52
        $region51: #{mlp_forward.1} parent=47 // pred_region
          %s2733 = ssub.s32 4096, 4096
          %2734 = vsyncadd %s2725, %s2733
          %s2735 = smul.addr %s21, 32
          %s2736 = smul.addr %s2735, 128
          %s2737 = scalar_lea.hbm %s7, %s2736
          %s2738 = sshll.u32 %s2728, 4
          %s2739 = int_to_ptr.vmem [resolvable:$true] %s2738
          %2744 = dma.vmem_to_hbm [thread:$0]  %s2739, 4096, %s2737, %s2725, 128, 128, 8
        $region52: #{mlp_forward.1} parent=47 // pred_fallthru
          _
      $region48: #{mlp_forward.1} parent=5 // pred_fallthru
        _
      %p2745 = scmp.le.s32.totalorder 2, %s16
      // Predicated region
      $region53: #{mlp_forward.1} parent=5 // pred_check
        %p2746 = pneg %p2745
      $region54: #{mlp_forward.1} parent=5 // pred_check_branch
        %2748 = sbr.rel (%p2746) target = $region56
      $region55: #{mlp_forward.1} parent=5 // pred_region
        %s2749 = ssub.s32 %s16, 2
        // Predicated region
        $region57: #{mlp_forward.1} parent=55 // pred_check
          %p2750 = pneg %p197
        $region58: #{mlp_forward.1} parent=55 // pred_check_branch
          %2752 = sbr.rel (%p2750) target = $region60
        $region59: #{mlp_forward.1} parent=55 // pred_region
          %s2753 = sand.u32 %s182, 1
          %s2754 = scalar_lea.sflag [#allocation4], %s2753
          %s2755 = sand.u32 %s182, 1
          %s2756 = smul.addr %s2755, 256
          %s2757 = scalar_lea.vmem [#allocation3], %s2756
          %2758 = dma.done %s2754, 4096
        $region60: #{mlp_forward.1} parent=55 // pred_fallthru
          _
      $region56: #{mlp_forward.1} parent=5 // pred_fallthru
        _
    $region6: #{mlp_forward.1} parent=1 // loop_footer
      %s20 = sadd.s32 1, %s16
    $region7: #{mlp_forward.1} parent=1 // loop_footer_branch
      %15 = sbr.rel target = $region3
    $region8: #{mlp_forward.1} parent=1 // loop_exit
      _
    %2759 = vsyncpa [#allocation4], 1
    %s2760 = scalar_lea.sflag [#allocation4], 1
    %2761 = vsyncpa %s2760, 1

</llo_original>
